<compile_context>
chip_gen: v6e
topology: v6e:2x2x1
jax: 0.10.0
libtpu: 0.0.40
codegen_flags: <defaults>
</compile_context>

<pallas_src>
import math

import jax
import jax.numpy as jnp
from jax import lax
from jax.experimental import pallas as pl
from jax.experimental.pallas import tpu as pltpu

# ----------------------- small synthetic T5 config -------------------------
VOCAB = 64
VOCAB_PAD = 128          # lane-dense padded vocab for extra_linear / logits
D_MODEL = 32
N_HEADS = 4
D_KV = 8
D_FF = 64
INNER = N_HEADS * D_KV
REL_BUCKETS = 32
REL_MAX_DIST = 128
LN_EPS = 1e-6
NEG_INF = -1e9


# --------------------------- fused forward kernel ---------------------------
def _fused_t5_kernel(
    # ids & precomputed additive attention biases
    input_ids_ref, labels_ref,
    enc_bias_ref, dec_bias_ref, cross_bias_ref,
    # shared embedding (padded to VOCAB_PAD rows, bf16)
    emb_ref,
    # encoder params
    e_ln1_ref, e_wqkv_ref, e_wo_ref, e_ln2_ref, e_wi_ref, e_wff_ref, e_lnf_ref,
    # decoder params
    d_ln1_ref, d_wqkv_ref, d_wo_ref, d_ln2_ref,
    d_wq_c_ref, d_wkv_c_ref, d_wo_c_ref, d_ln3_ref, d_wi_ref, d_wff_ref, d_lnf_ref,
    # lm-head (padded to VOCAB_PAD cols)
    extra_w_ref, extra_b_ref,
    # outputs
    logits_ref, loss_ref,
):
    f32, bf16 = jnp.float32, jnp.bfloat16
    emb = emb_ref[...]                                    # (VOCAB_PAD, D) bf16

    def onehot(ids_col):                                  # (M,1) i32 -> (M,VOCAB_PAD) f32
        m = ids_col.shape[0]
        col = lax.broadcasted_iota(jnp.int32, (m, VOCAB_PAD), 1)
        # TODO(synk): PyTorch nn.Embedding would error on -100 ids; here they
        # map to a zero embedding (labels are valid ids in the demo data).
        return (col == ids_col).astype(f32)

    def embed(oh):                                        # (M,VOCAB_PAD) -> (M,D) f32
        return jnp.dot(oh.astype(bf16), emb, preferred_element_type=f32)

    def rms(x, w):                                        # T5 RMS LayerNorm (f32)
        var = jnp.mean(x * x, axis=-1, keepdims=True)
        return x * lax.rsqrt(var + LN_EPS) * w

    def dotb(x, w_ref):                                   # bf16 operands, f32 accum
        return jnp.dot(x.astype(bf16), w_ref[...], preferred_element_type=f32)

    def mha_core(q_all, k_all, v_all, wo, bias):
        # q_all/k_all/v_all: (M, INNER) f32, heads packed along the lane dim.
        # bias: (H, Mq, Mk) or (Mq, Mk) shared by all heads; block-diagonal
        # across batches, key mask / causal mask already folded in (f32).
        kT = k_all.T.astype(bf16)                         # ONE transpose / attention
        q_bf = q_all.astype(bf16)
        v_bf = v_all.astype(bf16)
        ctxs = []
        for h in range(N_HEADS):
            sl = slice(h * D_KV, (h + 1) * D_KV)
            # T5 attention has NO 1/sqrt(d) scaling.
            s = jnp.dot(q_bf[:, sl], kT[sl, :], preferred_element_type=f32)
            s = s + (bias[h] if bias.ndim == 3 else bias)
            p = jnp.exp(s - jnp.max(s, axis=-1, keepdims=True))
            denom = jnp.sum(p, axis=-1, keepdims=True)
            ctx = jnp.dot(p.astype(bf16), v_bf[:, sl], preferred_element_type=f32)
            ctxs.append(ctx * pl.reciprocal(denom, approx=True))  # EUP, post-PV
        ctx_all = jnp.concatenate(ctxs, axis=1)           # (Mq, INNER) packed
        # single fused output projection for all heads
        return jnp.dot(ctx_all.astype(bf16), wo, preferred_element_type=f32)

    # ------------------------------ encoder --------------------------------
    x = embed(onehot(input_ids_ref[...]))                 # (B*Se, D) f32
    h = rms(x, e_ln1_ref[...])
    qkv = dotb(h, e_wqkv_ref)
    x = x + mha_core(qkv[:, :INNER], qkv[:, INNER:2 * INNER], qkv[:, 2 * INNER:],
                     e_wo_ref[...], enc_bias_ref[...])
    h = rms(x, e_ln2_ref[...])
    ff = jnp.maximum(dotb(h, e_wi_ref), 0.0)
    x = x + dotb(ff, e_wff_ref)
    enc_out = rms(x, e_lnf_ref[...])                      # encoder hidden

    # ------------------------------ decoder --------------------------------
    labels_col = labels_ref[...]                          # (B*Sd, 1) int32
    lab_oh = onehot(labels_col)                           # built once, reused by CE
    y = embed(lab_oh)
    h = rms(y, d_ln1_ref[...])
    qkv = dotb(h, d_wqkv_ref)
    y = y + mha_core(qkv[:, :INNER], qkv[:, INNER:2 * INNER], qkv[:, 2 * INNER:],
                     d_wo_ref[...], dec_bias_ref[...])
    h = rms(y, d_ln2_ref[...])
    q = dotb(h, d_wq_c_ref)
    kv = dotb(enc_out, d_wkv_c_ref)
    y = y + mha_core(q, kv[:, :INNER], kv[:, INNER:],
                     d_wo_c_ref[...], cross_bias_ref[...])
    h = rms(y, d_ln3_ref[...])
    ff = jnp.maximum(dotb(h, d_wi_ref), 0.0)
    y = y + dotb(ff, d_wff_ref)
    hid = rms(y, d_lnf_ref[...])                          # last_hidden_state

    # ---------------------- extra_linear + cross-entropy --------------------
    # padded cols have weight 0 / bias -1e9 -> exp underflows to 0 in the lse
    logits = dotb(hid, extra_w_ref) + extra_b_ref[...]    # (B*Sd, VOCAB_PAD) f32
    logits_ref[...] = logits                              # lane-dense (128) store

    mmax = jnp.max(logits, axis=-1, keepdims=True)
    lse = jnp.log(jnp.sum(jnp.exp(logits - mmax), axis=-1, keepdims=True)) + mmax
    tgt = jnp.sum(logits * lab_oh, axis=-1, keepdims=True)   # reuse labels one-hot
    valid = (labels_col != -100).astype(f32)
    per_tok = (lse - tgt) * valid
    loss_ref[...] = (jnp.sum(per_tok, keepdims=True)
                     / jnp.sum(valid, keepdims=True))     # mean over valid tokens


# ------------------------------- JAX glue ----------------------------------
def _relative_position_bucket(relative_position, bidirectional,
                              num_buckets=REL_BUCKETS, max_distance=REL_MAX_DIST):
    rel_buckets = jnp.zeros_like(relative_position)
    if bidirectional:
        num_buckets //= 2
        rel_buckets = rel_buckets + (relative_position > 0).astype(jnp.int32) * num_buckets
        relative_position = jnp.abs(relative_position)
    else:
        relative_position = -jnp.minimum(relative_position, 0)
    max_exact = num_buckets // 2
    is_small = relative_position < max_exact
    rp_f = jnp.maximum(relative_position, 1).astype(jnp.float32)
    rel_if_large = max_exact + (
        jnp.log(rp_f / max_exact) / math.log(max_distance / max_exact)
        * (num_buckets - max_exact)
    ).astype(jnp.int32)
    rel_if_large = jnp.minimum(rel_if_large, num_buckets - 1)
    return rel_buckets + jnp.where(is_small, relative_position, rel_if_large)


def compute_position_bias(rel_emb, qlen, klen, bidirectional):
    ctx = jnp.arange(qlen, dtype=jnp.int32)[:, None]
    mem = jnp.arange(klen, dtype=jnp.int32)[None, :]
    buckets = _relative_position_bucket(mem - ctx, bidirectional)
    bias = jnp.take(rel_emb, buckets, axis=0)      # (q, k, H)
    return jnp.transpose(bias, (2, 0, 1))          # (H, q, k)


def t5_story_forward(params, input_ids, attention_mask=None, labels=None):
    B, Se = input_ids.shape
    if labels is None:
        raise ValueError("labels (used as decoder_input_ids) are required")
    Sd = labels.shape[1]
    if attention_mask is None:
        attention_mask = jnp.ones((B, Se), jnp.float32)

    pe, pd = params['encoder'], params['decoder']
    bf16 = jnp.bfloat16

    # --- precompute tiny additive attention bias tables (no activations) ---
    enc_pos = compute_position_bias(pe['rel_bias'], Se, Se, True)     # (H,Se,Se)
    dec_pos = compute_position_bias(pd['rel_bias'], Sd, Sd, False)    # (H,Sd,Sd)
    key_mask = (1.0 - attention_mask.astype(jnp.float32)).reshape(-1) * NEG_INF
    causal = (jnp.arange(Sd)[None, :] <= jnp.arange(Sd)[:, None]).astype(jnp.float32)
    causal_add = (1.0 - causal) * NEG_INF

    def block_diag_mask(sq, sk):
        bq = jnp.repeat(jnp.arange(B), sq)
        bk = jnp.repeat(jnp.arange(B), sk)
        return jnp.where(bq[:, None] == bk[None, :], 0.0, NEG_INF)

    enc_bias = (jnp.tile(enc_pos, (1, B, B)) + block_diag_mask(Se, Se)[None]
                + key_mask[None, None, :])                   # (H, B*Se, B*Se)
    dec_bias = (jnp.tile(dec_pos + causal_add[None], (1, B, B))
                + block_diag_mask(Sd, Sd)[None])             # (H, B*Sd, B*Sd)
    cross_bias = block_diag_mask(Sd, Se) + key_mask[None, :]  # (B*Sd, B*Se)

    # --- fuse QKV weights; bf16 for all MXU operands; pad vocab to 128 lanes ---
    e_wqkv = jnp.concatenate([pe['self']['q'], pe['self']['k'], pe['self']['v']],
                             axis=1).astype(bf16)
    d_wqkv = jnp.concatenate([pd['self']['q'], pd['self']['k'], pd['self']['v']],
                             axis=1).astype(bf16)
    d_wkv_c = jnp.concatenate([pd['cross']['k'], pd['cross']['v']], axis=1).astype(bf16)

    emb_pad = jnp.pad(params['shared'], ((0, VOCAB_PAD - VOCAB), (0, 0))).astype(bf16)
    extra_w_pad = jnp.pad(params['extra_w'], ((0, 0), (0, VOCAB_PAD - VOCAB))).astype(bf16)
    extra_b_pad = jnp.concatenate(
        [params['extra_b'],
         jnp.full((VOCAB_PAD - VOCAB,), NEG_INF, jnp.float32)]).reshape(1, VOCAB_PAD)

    inputs = (
        input_ids.reshape(B * Se, 1).astype(jnp.int32),
        labels.reshape(B * Sd, 1).astype(jnp.int32),
        enc_bias, dec_bias, cross_bias,
        emb_pad,
        pe['ln1'].reshape(1, D_MODEL), e_wqkv, pe['self']['o'].astype(bf16),
        pe['ln2'].reshape(1, D_MODEL), pe['wi'].astype(bf16), pe['wo'].astype(bf16),
        pe['ln_f'].reshape(1, D_MODEL),
        pd['ln1'].reshape(1, D_MODEL), d_wqkv, pd['self']['o'].astype(bf16),
        pd['ln2'].reshape(1, D_MODEL), pd['cross']['q'].astype(bf16), d_wkv_c,
        pd['cross']['o'].astype(bf16),
        pd['ln3'].reshape(1, D_MODEL), pd['wi'].astype(bf16), pd['wo'].astype(bf16),
        pd['ln_f'].reshape(1, D_MODEL),
        extra_w_pad, extra_b_pad,
    )

    vmem = pl.BlockSpec(memory_space=pltpu.MemorySpace.VMEM)
    logits_pad, loss11 = pl.pallas_call(
        _fused_t5_kernel,
        out_shape=(jax.ShapeDtypeStruct((B * Sd, VOCAB_PAD), jnp.float32),
                   jax.ShapeDtypeStruct((1, 1), jnp.float32)),
        in_specs=[vmem] * len(inputs),
        out_specs=(vmem, vmem),
    )(*inputs)

    custom_output = logits_pad[:, :VOCAB].reshape(B, Sd, VOCAB)
    return custom_output, loss11[0, 0]


# --------------------------- deterministic params ---------------------------
def init_params(key):
    ks = iter(jax.random.split(key, 48))

    def nrm(shape, scale=0.05):
        return jax.random.normal(next(ks), shape, jnp.float32) * scale

    def attn_params():
        return {'q': nrm((D_MODEL, INNER)), 'k': nrm((D_MODEL, INNER)),
                'v': nrm((D_MODEL, INNER)), 'o': nrm((INNER, D_MODEL))}

    ones = lambda: jnp.ones((D_MODEL,), jnp.float32)
    return {
        'shared': nrm((VOCAB, D_MODEL)),
        'encoder': {
            'ln1': ones(), 'self': attn_params(),
            'rel_bias': nrm((REL_BUCKETS, N_HEADS)),
            'ln2': ones(), 'wi': nrm((D_MODEL, D_FF)), 'wo': nrm((D_FF, D_MODEL)),
            'ln_f': ones(),
        },
        'decoder': {
            'ln1': ones(), 'self': attn_params(),
            'rel_bias': nrm((REL_BUCKETS, N_HEADS)),
            'ln2': ones(), 'cross': attn_params(),
            'ln3': ones(), 'wi': nrm((D_MODEL, D_FF)), 'wo': nrm((D_FF, D_MODEL)),
            'ln_f': ones(),
        },
        'extra_w': nrm((D_MODEL, VOCAB)),
        'extra_b': nrm((VOCAB,)),
    }


if __name__ == "__main__":
    key = jax.random.PRNGKey(0)
    pkey, ikey, lkey = jax.random.split(key, 3)
    params = init_params(pkey)

    B, Se, Sd = 2, 8, 8
    input_ids = jax.random.randint(ikey, (B, Se), 0, VOCAB, dtype=jnp.int32)
    attention_mask = jnp.ones((B, Se), jnp.float32).at[1, 6:].set(0.0)  # ragged mask
    labels = jax.random.randint(lkey, (B, Sd), 0, VOCAB, dtype=jnp.int32)

    fwd = jax.jit(t5_story_forward)
    custom_output, loss = fwd(params, input_ids, attention_mask, labels)
    jax.block_until_ready((custom_output, loss))

    assert custom_output.shape == (B, Sd, VOCAB)
    assert custom_output.dtype == jnp.float32
    assert bool(jnp.isfinite(loss))
    print("KERNEL_OK")
</pallas_src>

<mosaic_0001>
module attributes {stable_mosaic.version = 11 : i64} {
  func.func @_fused_t5_kernel(%arg0: memref<16x1xi32, #tpu.memory_space<vmem>>, %arg1: memref<16x1xi32, #tpu.memory_space<vmem>>, %arg2: memref<4x16x16xf32, #tpu.memory_space<vmem>>, %arg3: memref<4x16x16xf32, #tpu.memory_space<vmem>>, %arg4: memref<16x16xf32, #tpu.memory_space<vmem>>, %arg5: memref<128x32xbf16, #tpu.memory_space<vmem>>, %arg6: memref<1x32xf32, #tpu.memory_space<vmem>>, %arg7: memref<32x96xbf16, #tpu.memory_space<vmem>>, %arg8: memref<32x32xbf16, #tpu.memory_space<vmem>>, %arg9: memref<1x32xf32, #tpu.memory_space<vmem>>, %arg10: memref<32x64xbf16, #tpu.memory_space<vmem>>, %arg11: memref<64x32xbf16, #tpu.memory_space<vmem>>, %arg12: memref<1x32xf32, #tpu.memory_space<vmem>>, %arg13: memref<1x32xf32, #tpu.memory_space<vmem>>, %arg14: memref<32x96xbf16, #tpu.memory_space<vmem>>, %arg15: memref<32x32xbf16, #tpu.memory_space<vmem>>, %arg16: memref<1x32xf32, #tpu.memory_space<vmem>>, %arg17: memref<32x32xbf16, #tpu.memory_space<vmem>>, %arg18: memref<32x64xbf16, #tpu.memory_space<vmem>>, %arg19: memref<32x32xbf16, #tpu.memory_space<vmem>>, %arg20: memref<1x32xf32, #tpu.memory_space<vmem>>, %arg21: memref<32x64xbf16, #tpu.memory_space<vmem>>, %arg22: memref<64x32xbf16, #tpu.memory_space<vmem>>, %arg23: memref<1x32xf32, #tpu.memory_space<vmem>>, %arg24: memref<32x128xbf16, #tpu.memory_space<vmem>>, %arg25: memref<1x128xf32, #tpu.memory_space<vmem>>, %arg26: memref<16x128xf32, #tpu.memory_space<vmem>>, %arg27: memref<1x1xf32, #tpu.memory_space<vmem>>) attributes {dimension_semantics = [], scalar_prefetch = 0 : i64, scratch_operands = 0 : i64, tpu.core_type = #tpu.core_type<tc>} {
    %c0 = arith.constant 0 : index
    %c0_0 = arith.constant 0 : index
    %0 = vector.load %arg5[%c0, %c0_0] : memref<128x32xbf16, #tpu.memory_space<vmem>>, vector<128x32xbf16>
    %c0_1 = arith.constant 0 : index
    %c0_2 = arith.constant 0 : index
    %1 = vector.load %arg0[%c0_1, %c0_2] : memref<16x1xi32, #tpu.memory_space<vmem>>, vector<16x1xi32>
    %2 = tpu.iota {dimensions = array<i32: 1>} : vector<16x128xi32>
    %3 = vector.broadcast %1 : vector<16x1xi32> to vector<16x128xi32>
    %4 = arith.cmpi eq, %2, %3 : vector<16x128xi32>
    %5 = arith.extui %4 : vector<16x128xi1> to vector<16x128xi32>
    %6 = arith.sitofp %5 : vector<16x128xi32> to vector<16x128xf32>
    %7 = arith.truncf %6 : vector<16x128xf32> to vector<16x128xbf16>
    %cst = arith.constant dense<0.000000e+00> : vector<16x32xf32>
    %8 = tpu.matmul %7, %0, %cst {dimension_numbers = #tpu.dot_dimension_numbers<[1], [0], [0], [1], [0, 0, 1, 1], [], []>} : vector<16x128xbf16>, vector<128x32xbf16>, vector<16x32xf32> -> vector<16x32xf32>
    %c0_3 = arith.constant 0 : index
    %c0_4 = arith.constant 0 : index
    %9 = vector.load %arg6[%c0_3, %c0_4] : memref<1x32xf32, #tpu.memory_space<vmem>>, vector<1x32xf32>
    %10 = arith.mulf %8, %8 : vector<16x32xf32>
    %cst_5 = arith.constant dense<0.000000e+00> : vector<16xf32>
    %11 = vector.multi_reduction <add>, %10, %cst_5 [1] : vector<16x32xf32> to vector<16xf32>
    %12 = vector.shape_cast %11 : vector<16xf32> to vector<16x1xf32>
    %cst_6 = arith.constant 3.200000e+01 : f32
    %13 = vector.broadcast %cst_6 : f32 to vector<16x1xf32>
    %14 = arith.divf %12, %13 : vector<16x1xf32>
    %cst_7 = arith.constant 9.99999997E-7 : f32
    %15 = vector.broadcast %cst_7 : f32 to vector<16x1xf32>
    %16 = arith.addf %14, %15 : vector<16x1xf32>
    %17 = math.rsqrt %16 : vector<16x1xf32>
    %18 = vector.broadcast %17 : vector<16x1xf32> to vector<16x32xf32>
    %19 = arith.mulf %8, %18 : vector<16x32xf32>
    %20 = vector.broadcast %9 : vector<1x32xf32> to vector<16x32xf32>
    %21 = arith.mulf %19, %20 : vector<16x32xf32>
    %22 = arith.truncf %21 : vector<16x32xf32> to vector<16x32xbf16>
    %c0_8 = arith.constant 0 : index
    %c0_9 = arith.constant 0 : index
    %23 = vector.load %arg7[%c0_8, %c0_9] : memref<32x96xbf16, #tpu.memory_space<vmem>>, vector<32x96xbf16>
    %cst_10 = arith.constant dense<0.000000e+00> : vector<16x96xf32>
    %24 = tpu.matmul %22, %23, %cst_10 {dimension_numbers = #tpu.dot_dimension_numbers<[1], [0], [0], [1], [0, 0, 1, 1], [], []>} : vector<16x32xbf16>, vector<32x96xbf16>, vector<16x96xf32> -> vector<16x96xf32>
    %25 = vector.extract_strided_slice %24 {offsets = [0, 0], sizes = [16, 32], strides = [1, 1]} : vector<16x96xf32> to vector<16x32xf32>
    %26 = vector.extract_strided_slice %24 {offsets = [0, 32], sizes = [16, 32], strides = [1, 1]} : vector<16x96xf32> to vector<16x32xf32>
    %27 = vector.extract_strided_slice %24 {offsets = [0, 64], sizes = [16, 32], strides = [1, 1]} : vector<16x96xf32> to vector<16x32xf32>
    %c0_11 = arith.constant 0 : index
    %c0_12 = arith.constant 0 : index
    %28 = vector.load %arg8[%c0_11, %c0_12] : memref<32x32xbf16, #tpu.memory_space<vmem>>, vector<32x32xbf16>
    %c0_13 = arith.constant 0 : index
    %c0_14 = arith.constant 0 : index
    %c0_15 = arith.constant 0 : index
    %29 = vector.load %arg2[%c0_13, %c0_14, %c0_15] : memref<4x16x16xf32, #tpu.memory_space<vmem>>, vector<4x16x16xf32>
    %30 = tpu.transpose %26, [1, 0] : vector<16x32xf32> -> vector<32x16xf32>
    %31 = arith.truncf %30 : vector<32x16xf32> to vector<32x16xbf16>
    %32 = arith.truncf %25 : vector<16x32xf32> to vector<16x32xbf16>
    %33 = arith.truncf %27 : vector<16x32xf32> to vector<16x32xbf16>
    %34 = vector.extract_strided_slice %32 {offsets = [0, 0], sizes = [16, 8], strides = [1, 1]} : vector<16x32xbf16> to vector<16x8xbf16>
    %35 = vector.extract_strided_slice %31 {offsets = [0, 0], sizes = [8, 16], strides = [1, 1]} : vector<32x16xbf16> to vector<8x16xbf16>
    %cst_16 = arith.constant dense<0.000000e+00> : vector<16x16xf32>
    %36 = tpu.matmul %34, %35, %cst_16 {dimension_numbers = #tpu.dot_dimension_numbers<[1], [0], [0], [1], [0, 0, 1, 1], [], []>} : vector<16x8xbf16>, vector<8x16xbf16>, vector<16x16xf32> -> vector<16x16xf32>
    %37 = vector.extract_strided_slice %29 {offsets = [0, 0, 0], sizes = [1, 16, 16], strides = [1, 1, 1]} : vector<4x16x16xf32> to vector<1x16x16xf32>
    %38 = vector.shape_cast %37 : vector<1x16x16xf32> to vector<16x16xf32>
    %39 = arith.addf %36, %38 : vector<16x16xf32>
    %cst_17 = arith.constant dense<0xFF800000> : vector<16xf32>
    %40 = vector.multi_reduction <maximumf>, %39, %cst_17 [1] : vector<16x16xf32> to vector<16xf32>
    %41 = vector.shape_cast %40 : vector<16xf32> to vector<16x1xf32>
    %42 = vector.broadcast %41 : vector<16x1xf32> to vector<16x16xf32>
    %43 = arith.subf %39, %42 : vector<16x16xf32>
    %44 = math.exp %43 : vector<16x16xf32>
    %cst_18 = arith.constant dense<0.000000e+00> : vector<16xf32>
    %45 = vector.multi_reduction <add>, %44, %cst_18 [1] : vector<16x16xf32> to vector<16xf32>
    %46 = vector.shape_cast %45 : vector<16xf32> to vector<16x1xf32>
    %47 = arith.truncf %44 : vector<16x16xf32> to vector<16x16xbf16>
    %48 = vector.extract_strided_slice %33 {offsets = [0, 0], sizes = [16, 8], strides = [1, 1]} : vector<16x32xbf16> to vector<16x8xbf16>
    %cst_19 = arith.constant dense<0.000000e+00> : vector<16x8xf32>
    %49 = tpu.matmul %47, %48, %cst_19 {dimension_numbers = #tpu.dot_dimension_numbers<[1], [0], [0], [1], [0, 0, 1, 1], [], []>} : vector<16x16xbf16>, vector<16x8xbf16>, vector<16x8xf32> -> vector<16x8xf32>
    %50 = tpu.reciprocal %46 {approx = true} : vector<16x1xf32> -> vector<16x1xf32>
    %51 = vector.broadcast %50 : vector<16x1xf32> to vector<16x8xf32>
    %52 = arith.mulf %49, %51 : vector<16x8xf32>
    %53 = vector.extract_strided_slice %32 {offsets = [0, 8], sizes = [16, 8], strides = [1, 1]} : vector<16x32xbf16> to vector<16x8xbf16>
    %54 = vector.extract_strided_slice %31 {offsets = [8, 0], sizes = [8, 16], strides = [1, 1]} : vector<32x16xbf16> to vector<8x16xbf16>
    %cst_20 = arith.constant dense<0.000000e+00> : vector<16x16xf32>
    %55 = tpu.matmul %53, %54, %cst_20 {dimension_numbers = #tpu.dot_dimension_numbers<[1], [0], [0], [1], [0, 0, 1, 1], [], []>} : vector<16x8xbf16>, vector<8x16xbf16>, vector<16x16xf32> -> vector<16x16xf32>
    %56 = vector.extract_strided_slice %29 {offsets = [1, 0, 0], sizes = [1, 16, 16], strides = [1, 1, 1]} : vector<4x16x16xf32> to vector<1x16x16xf32>
    %57 = vector.shape_cast %56 : vector<1x16x16xf32> to vector<16x16xf32>
    %58 = arith.addf %55, %57 : vector<16x16xf32>
    %cst_21 = arith.constant dense<0xFF800000> : vector<16xf32>
    %59 = vector.multi_reduction <maximumf>, %58, %cst_21 [1] : vector<16x16xf32> to vector<16xf32>
    %60 = vector.shape_cast %59 : vector<16xf32> to vector<16x1xf32>
    %61 = vector.broadcast %60 : vector<16x1xf32> to vector<16x16xf32>
    %62 = arith.subf %58, %61 : vector<16x16xf32>
    %63 = math.exp %62 : vector<16x16xf32>
    %cst_22 = arith.constant dense<0.000000e+00> : vector<16xf32>
    %64 = vector.multi_reduction <add>, %63, %cst_22 [1] : vector<16x16xf32> to vector<16xf32>
    %65 = vector.shape_cast %64 : vector<16xf32> to vector<16x1xf32>
    %66 = arith.truncf %63 : vector<16x16xf32> to vector<16x16xbf16>
    %67 = vector.extract_strided_slice %33 {offsets = [0, 8], sizes = [16, 8], strides = [1, 1]} : vector<16x32xbf16> to vector<16x8xbf16>
    %cst_23 = arith.constant dense<0.000000e+00> : vector<16x8xf32>
    %68 = tpu.matmul %66, %67, %cst_23 {dimension_numbers = #tpu.dot_dimension_numbers<[1], [0], [0], [1], [0, 0, 1, 1], [], []>} : vector<16x16xbf16>, vector<16x8xbf16>, vector<16x8xf32> -> vector<16x8xf32>
    %69 = tpu.reciprocal %65 {approx = true} : vector<16x1xf32> -> vector<16x1xf32>
    %70 = vector.broadcast %69 : vector<16x1xf32> to vector<16x8xf32>
    %71 = arith.mulf %68, %70 : vector<16x8xf32>
    %72 = vector.extract_strided_slice %32 {offsets = [0, 16], sizes = [16, 8], strides = [1, 1]} : vector<16x32xbf16> to vector<16x8xbf16>
    %73 = vector.extract_strided_slice %31 {offsets = [16, 0], sizes = [8, 16], strides = [1, 1]} : vector<32x16xbf16> to vector<8x16xbf16>
    %cst_24 = arith.constant dense<0.000000e+00> : vector<16x16xf32>
    %74 = tpu.matmul %72, %73, %cst_24 {dimension_numbers = #tpu.dot_dimension_numbers<[1], [0], [0], [1], [0, 0, 1, 1], [], []>} : vector<16x8xbf16>, vector<8x16xbf16>, vector<16x16xf32> -> vector<16x16xf32>
    %75 = vector.extract_strided_slice %29 {offsets = [2, 0, 0], sizes = [1, 16, 16], strides = [1, 1, 1]} : vector<4x16x16xf32> to vector<1x16x16xf32>
    %76 = vector.shape_cast %75 : vector<1x16x16xf32> to vector<16x16xf32>
    %77 = arith.addf %74, %76 : vector<16x16xf32>
    %cst_25 = arith.constant dense<0xFF800000> : vector<16xf32>
    %78 = vector.multi_reduction <maximumf>, %77, %cst_25 [1] : vector<16x16xf32> to vector<16xf32>
    %79 = vector.shape_cast %78 : vector<16xf32> to vector<16x1xf32>
    %80 = vector.broadcast %79 : vector<16x1xf32> to vector<16x16xf32>
    %81 = arith.subf %77, %80 : vector<16x16xf32>
    %82 = math.exp %81 : vector<16x16xf32>
    %cst_26 = arith.constant dense<0.000000e+00> : vector<16xf32>
    %83 = vector.multi_reduction <add>, %82, %cst_26 [1] : vector<16x16xf32> to vector<16xf32>
    %84 = vector.shape_cast %83 : vector<16xf32> to vector<16x1xf32>
    %85 = arith.truncf %82 : vector<16x16xf32> to vector<16x16xbf16>
    %86 = vector.extract_strided_slice %33 {offsets = [0, 16], sizes = [16, 8], strides = [1, 1]} : vector<16x32xbf16> to vector<16x8xbf16>
    %cst_27 = arith.constant dense<0.000000e+00> : vector<16x8xf32>
    %87 = tpu.matmul %85, %86, %cst_27 {dimension_numbers = #tpu.dot_dimension_numbers<[1], [0], [0], [1], [0, 0, 1, 1], [], []>} : vector<16x16xbf16>, vector<16x8xbf16>, vector<16x8xf32> -> vector<16x8xf32>
    %88 = tpu.reciprocal %84 {approx = true} : vector<16x1xf32> -> vector<16x1xf32>
    %89 = vector.broadcast %88 : vector<16x1xf32> to vector<16x8xf32>
    %90 = arith.mulf %87, %89 : vector<16x8xf32>
    %91 = vector.extract_strided_slice %32 {offsets = [0, 24], sizes = [16, 8], strides = [1, 1]} : vector<16x32xbf16> to vector<16x8xbf16>
    %92 = vector.extract_strided_slice %31 {offsets = [24, 0], sizes = [8, 16], strides = [1, 1]} : vector<32x16xbf16> to vector<8x16xbf16>
    %cst_28 = arith.constant dense<0.000000e+00> : vector<16x16xf32>
    %93 = tpu.matmul %91, %92, %cst_28 {dimension_numbers = #tpu.dot_dimension_numbers<[1], [0], [0], [1], [0, 0, 1, 1], [], []>} : vector<16x8xbf16>, vector<8x16xbf16>, vector<16x16xf32> -> vector<16x16xf32>
    %94 = vector.extract_strided_slice %29 {offsets = [3, 0, 0], sizes = [1, 16, 16], strides = [1, 1, 1]} : vector<4x16x16xf32> to vector<1x16x16xf32>
    %95 = vector.shape_cast %94 : vector<1x16x16xf32> to vector<16x16xf32>
    %96 = arith.addf %93, %95 : vector<16x16xf32>
    %cst_29 = arith.constant dense<0xFF800000> : vector<16xf32>
    %97 = vector.multi_reduction <maximumf>, %96, %cst_29 [1] : vector<16x16xf32> to vector<16xf32>
    %98 = vector.shape_cast %97 : vector<16xf32> to vector<16x1xf32>
    %99 = vector.broadcast %98 : vector<16x1xf32> to vector<16x16xf32>
    %100 = arith.subf %96, %99 : vector<16x16xf32>
    %101 = math.exp %100 : vector<16x16xf32>
    %cst_30 = arith.constant dense<0.000000e+00> : vector<16xf32>
    %102 = vector.multi_reduction <add>, %101, %cst_30 [1] : vector<16x16xf32> to vector<16xf32>
    %103 = vector.shape_cast %102 : vector<16xf32> to vector<16x1xf32>
    %104 = arith.truncf %101 : vector<16x16xf32> to vector<16x16xbf16>
    %105 = vector.extract_strided_slice %33 {offsets = [0, 24], sizes = [16, 8], strides = [1, 1]} : vector<16x32xbf16> to vector<16x8xbf16>
    %cst_31 = arith.constant dense<0.000000e+00> : vector<16x8xf32>
    %106 = tpu.matmul %104, %105, %cst_31 {dimension_numbers = #tpu.dot_dimension_numbers<[1], [0], [0], [1], [0, 0, 1, 1], [], []>} : vector<16x16xbf16>, vector<16x8xbf16>, vector<16x8xf32> -> vector<16x8xf32>
    %107 = tpu.reciprocal %103 {approx = true} : vector<16x1xf32> -> vector<16x1xf32>
    %108 = vector.broadcast %107 : vector<16x1xf32> to vector<16x8xf32>
    %109 = arith.mulf %106, %108 : vector<16x8xf32>
    %110 = tpu.concatenate %52, %71, %90, %109 in 1 : vector<16x8xf32>, vector<16x8xf32>, vector<16x8xf32>, vector<16x8xf32> -> vector<16x32xf32>
    %111 = arith.truncf %110 : vector<16x32xf32> to vector<16x32xbf16>
    %cst_32 = arith.constant dense<0.000000e+00> : vector<16x32xf32>
    %112 = tpu.matmul %111, %28, %cst_32 {dimension_numbers = #tpu.dot_dimension_numbers<[1], [0], [0], [1], [0, 0, 1, 1], [], []>} : vector<16x32xbf16>, vector<32x32xbf16>, vector<16x32xf32> -> vector<16x32xf32>
    %113 = arith.addf %8, %112 : vector<16x32xf32>
    %c0_33 = arith.constant 0 : index
    %c0_34 = arith.constant 0 : index
    %114 = vector.load %arg9[%c0_33, %c0_34] : memref<1x32xf32, #tpu.memory_space<vmem>>, vector<1x32xf32>
    %115 = arith.mulf %113, %113 : vector<16x32xf32>
    %cst_35 = arith.constant dense<0.000000e+00> : vector<16xf32>
    %116 = vector.multi_reduction <add>, %115, %cst_35 [1] : vector<16x32xf32> to vector<16xf32>
    %117 = vector.shape_cast %116 : vector<16xf32> to vector<16x1xf32>
    %cst_36 = arith.constant 3.200000e+01 : f32
    %118 = vector.broadcast %cst_36 : f32 to vector<16x1xf32>
    %119 = arith.divf %117, %118 : vector<16x1xf32>
    %cst_37 = arith.constant 9.99999997E-7 : f32
    %120 = vector.broadcast %cst_37 : f32 to vector<16x1xf32>
    %121 = arith.addf %119, %120 : vector<16x1xf32>
    %122 = math.rsqrt %121 : vector<16x1xf32>
    %123 = vector.broadcast %122 : vector<16x1xf32> to vector<16x32xf32>
    %124 = arith.mulf %113, %123 : vector<16x32xf32>
    %125 = vector.broadcast %114 : vector<1x32xf32> to vector<16x32xf32>
    %126 = arith.mulf %124, %125 : vector<16x32xf32>
    %127 = arith.truncf %126 : vector<16x32xf32> to vector<16x32xbf16>
    %c0_38 = arith.constant 0 : index
    %c0_39 = arith.constant 0 : index
    %128 = vector.load %arg10[%c0_38, %c0_39] : memref<32x64xbf16, #tpu.memory_space<vmem>>, vector<32x64xbf16>
    %cst_40 = arith.constant dense<0.000000e+00> : vector<16x64xf32>
    %129 = tpu.matmul %127, %128, %cst_40 {dimension_numbers = #tpu.dot_dimension_numbers<[1], [0], [0], [1], [0, 0, 1, 1], [], []>} : vector<16x32xbf16>, vector<32x64xbf16>, vector<16x64xf32> -> vector<16x64xf32>
    %cst_41 = arith.constant 0.000000e+00 : f32
    %130 = vector.broadcast %cst_41 : f32 to vector<16x64xf32>
    %131 = arith.maximumf %129, %130 : vector<16x64xf32>
    %132 = arith.truncf %131 : vector<16x64xf32> to vector<16x64xbf16>
    %c0_42 = arith.constant 0 : index
    %c0_43 = arith.constant 0 : index
    %133 = vector.load %arg11[%c0_42, %c0_43] : memref<64x32xbf16, #tpu.memory_space<vmem>>, vector<64x32xbf16>
    %cst_44 = arith.constant dense<0.000000e+00> : vector<16x32xf32>
    %134 = tpu.matmul %132, %133, %cst_44 {dimension_numbers = #tpu.dot_dimension_numbers<[1], [0], [0], [1], [0, 0, 1, 1], [], []>} : vector<16x64xbf16>, vector<64x32xbf16>, vector<16x32xf32> -> vector<16x32xf32>
    %135 = arith.addf %113, %134 : vector<16x32xf32>
    %c0_45 = arith.constant 0 : index
    %c0_46 = arith.constant 0 : index
    %136 = vector.load %arg12[%c0_45, %c0_46] : memref<1x32xf32, #tpu.memory_space<vmem>>, vector<1x32xf32>
    %137 = arith.mulf %135, %135 : vector<16x32xf32>
    %cst_47 = arith.constant dense<0.000000e+00> : vector<16xf32>
    %138 = vector.multi_reduction <add>, %137, %cst_47 [1] : vector<16x32xf32> to vector<16xf32>
    %139 = vector.shape_cast %138 : vector<16xf32> to vector<16x1xf32>
    %cst_48 = arith.constant 3.200000e+01 : f32
    %140 = vector.broadcast %cst_48 : f32 to vector<16x1xf32>
    %141 = arith.divf %139, %140 : vector<16x1xf32>
    %cst_49 = arith.constant 9.99999997E-7 : f32
    %142 = vector.broadcast %cst_49 : f32 to vector<16x1xf32>
    %143 = arith.addf %141, %142 : vector<16x1xf32>
    %144 = math.rsqrt %143 : vector<16x1xf32>
    %145 = vector.broadcast %144 : vector<16x1xf32> to vector<16x32xf32>
    %146 = arith.mulf %135, %145 : vector<16x32xf32>
    %147 = vector.broadcast %136 : vector<1x32xf32> to vector<16x32xf32>
    %148 = arith.mulf %146, %147 : vector<16x32xf32>
    %c0_50 = arith.constant 0 : index
    %c0_51 = arith.constant 0 : index
    %149 = vector.load %arg1[%c0_50, %c0_51] : memref<16x1xi32, #tpu.memory_space<vmem>>, vector<16x1xi32>
    %150 = tpu.iota {dimensions = array<i32: 1>} : vector<16x128xi32>
    %151 = vector.broadcast %149 : vector<16x1xi32> to vector<16x128xi32>
    %152 = arith.cmpi eq, %150, %151 : vector<16x128xi32>
    %153 = arith.extui %152 : vector<16x128xi1> to vector<16x128xi32>
    %154 = arith.sitofp %153 : vector<16x128xi32> to vector<16x128xf32>
    %155 = arith.truncf %154 : vector<16x128xf32> to vector<16x128xbf16>
    %cst_52 = arith.constant dense<0.000000e+00> : vector<16x32xf32>
    %156 = tpu.matmul %155, %0, %cst_52 {dimension_numbers = #tpu.dot_dimension_numbers<[1], [0], [0], [1], [0, 0, 1, 1], [], []>} : vector<16x128xbf16>, vector<128x32xbf16>, vector<16x32xf32> -> vector<16x32xf32>
    %c0_53 = arith.constant 0 : index
    %c0_54 = arith.constant 0 : index
    %157 = vector.load %arg13[%c0_53, %c0_54] : memref<1x32xf32, #tpu.memory_space<vmem>>, vector<1x32xf32>
    %158 = arith.mulf %156, %156 : vector<16x32xf32>
    %cst_55 = arith.constant dense<0.000000e+00> : vector<16xf32>
    %159 = vector.multi_reduction <add>, %158, %cst_55 [1] : vector<16x32xf32> to vector<16xf32>
    %160 = vector.shape_cast %159 : vector<16xf32> to vector<16x1xf32>
    %cst_56 = arith.constant 3.200000e+01 : f32
    %161 = vector.broadcast %cst_56 : f32 to vector<16x1xf32>
    %162 = arith.divf %160, %161 : vector<16x1xf32>
    %cst_57 = arith.constant 9.99999997E-7 : f32
    %163 = vector.broadcast %cst_57 : f32 to vector<16x1xf32>
    %164 = arith.addf %162, %163 : vector<16x1xf32>
    %165 = math.rsqrt %164 : vector<16x1xf32>
    %166 = vector.broadcast %165 : vector<16x1xf32> to vector<16x32xf32>
    %167 = arith.mulf %156, %166 : vector<16x32xf32>
    %168 = vector.broadcast %157 : vector<1x32xf32> to vector<16x32xf32>
    %169 = arith.mulf %167, %168 : vector<16x32xf32>
    %170 = arith.truncf %169 : vector<16x32xf32> to vector<16x32xbf16>
    %c0_58 = arith.constant 0 : index
    %c0_59 = arith.constant 0 : index
    %171 = vector.load %arg14[%c0_58, %c0_59] : memref<32x96xbf16, #tpu.memory_space<vmem>>, vector<32x96xbf16>
    %cst_60 = arith.constant dense<0.000000e+00> : vector<16x96xf32>
    %172 = tpu.matmul %170, %171, %cst_60 {dimension_numbers = #tpu.dot_dimension_numbers<[1], [0], [0], [1], [0, 0, 1, 1], [], []>} : vector<16x32xbf16>, vector<32x96xbf16>, vector<16x96xf32> -> vector<16x96xf32>
    %173 = vector.extract_strided_slice %172 {offsets = [0, 0], sizes = [16, 32], strides = [1, 1]} : vector<16x96xf32> to vector<16x32xf32>
    %174 = vector.extract_strided_slice %172 {offsets = [0, 32], sizes = [16, 32], strides = [1, 1]} : vector<16x96xf32> to vector<16x32xf32>
    %175 = vector.extract_strided_slice %172 {offsets = [0, 64], sizes = [16, 32], strides = [1, 1]} : vector<16x96xf32> to vector<16x32xf32>
    %c0_61 = arith.constant 0 : index
    %c0_62 = arith.constant 0 : index
    %176 = vector.load %arg15[%c0_61, %c0_62] : memref<32x32xbf16, #tpu.memory_space<vmem>>, vector<32x32xbf16>
    %c0_63 = arith.constant 0 : index
    %c0_64 = arith.constant 0 : index
    %c0_65 = arith.constant 0 : index
    %177 = vector.load %arg3[%c0_63, %c0_64, %c0_65] : memref<4x16x16xf32, #tpu.memory_space<vmem>>, vector<4x16x16xf32>
    %178 = tpu.transpose %174, [1, 0] : vector<16x32xf32> -> vector<32x16xf32>
    %179 = arith.truncf %178 : vector<32x16xf32> to vector<32x16xbf16>
    %180 = arith.truncf %173 : vector<16x32xf32> to vector<16x32xbf16>
    %181 = arith.truncf %175 : vector<16x32xf32> to vector<16x32xbf16>
    %182 = vector.extract_strided_slice %180 {offsets = [0, 0], sizes = [16, 8], strides = [1, 1]} : vector<16x32xbf16> to vector<16x8xbf16>
    %183 = vector.extract_strided_slice %179 {offsets = [0, 0], sizes = [8, 16], strides = [1, 1]} : vector<32x16xbf16> to vector<8x16xbf16>
    %cst_66 = arith.constant dense<0.000000e+00> : vector<16x16xf32>
    %184 = tpu.matmul %182, %183, %cst_66 {dimension_numbers = #tpu.dot_dimension_numbers<[1], [0], [0], [1], [0, 0, 1, 1], [], []>} : vector<16x8xbf16>, vector<8x16xbf16>, vector<16x16xf32> -> vector<16x16xf32>
    %185 = vector.extract_strided_slice %177 {offsets = [0, 0, 0], sizes = [1, 16, 16], strides = [1, 1, 1]} : vector<4x16x16xf32> to vector<1x16x16xf32>
    %186 = vector.shape_cast %185 : vector<1x16x16xf32> to vector<16x16xf32>
    %187 = arith.addf %184, %186 : vector<16x16xf32>
    %cst_67 = arith.constant dense<0xFF800000> : vector<16xf32>
    %188 = vector.multi_reduction <maximumf>, %187, %cst_67 [1] : vector<16x16xf32> to vector<16xf32>
    %189 = vector.shape_cast %188 : vector<16xf32> to vector<16x1xf32>
    %190 = vector.broadcast %189 : vector<16x1xf32> to vector<16x16xf32>
    %191 = arith.subf %187, %190 : vector<16x16xf32>
    %192 = math.exp %191 : vector<16x16xf32>
    %cst_68 = arith.constant dense<0.000000e+00> : vector<16xf32>
    %193 = vector.multi_reduction <add>, %192, %cst_68 [1] : vector<16x16xf32> to vector<16xf32>
    %194 = vector.shape_cast %193 : vector<16xf32> to vector<16x1xf32>
    %195 = arith.truncf %192 : vector<16x16xf32> to vector<16x16xbf16>
    %196 = vector.extract_strided_slice %181 {offsets = [0, 0], sizes = [16, 8], strides = [1, 1]} : vector<16x32xbf16> to vector<16x8xbf16>
    %cst_69 = arith.constant dense<0.000000e+00> : vector<16x8xf32>
    %197 = tpu.matmul %195, %196, %cst_69 {dimension_numbers = #tpu.dot_dimension_numbers<[1], [0], [0], [1], [0, 0, 1, 1], [], []>} : vector<16x16xbf16>, vector<16x8xbf16>, vector<16x8xf32> -> vector<16x8xf32>
    %198 = tpu.reciprocal %194 {approx = true} : vector<16x1xf32> -> vector<16x1xf32>
    %199 = vector.broadcast %198 : vector<16x1xf32> to vector<16x8xf32>
    %200 = arith.mulf %197, %199 : vector<16x8xf32>
    %201 = vector.extract_strided_slice %180 {offsets = [0, 8], sizes = [16, 8], strides = [1, 1]} : vector<16x32xbf16> to vector<16x8xbf16>
    %202 = vector.extract_strided_slice %179 {offsets = [8, 0], sizes = [8, 16], strides = [1, 1]} : vector<32x16xbf16> to vector<8x16xbf16>
    %cst_70 = arith.constant dense<0.000000e+00> : vector<16x16xf32>
    %203 = tpu.matmul %201, %202, %cst_70 {dimension_numbers = #tpu.dot_dimension_numbers<[1], [0], [0], [1], [0, 0, 1, 1], [], []>} : vector<16x8xbf16>, vector<8x16xbf16>, vector<16x16xf32> -> vector<16x16xf32>
    %204 = vector.extract_strided_slice %177 {offsets = [1, 0, 0], sizes = [1, 16, 16], strides = [1, 1, 1]} : vector<4x16x16xf32> to vector<1x16x16xf32>
    %205 = vector.shape_cast %204 : vector<1x16x16xf32> to vector<16x16xf32>
    %206 = arith.addf %203, %205 : vector<16x16xf32>
    %cst_71 = arith.constant dense<0xFF800000> : vector<16xf32>
    %207 = vector.multi_reduction <maximumf>, %206, %cst_71 [1] : vector<16x16xf32> to vector<16xf32>
    %208 = vector.shape_cast %207 : vector<16xf32> to vector<16x1xf32>
    %209 = vector.broadcast %208 : vector<16x1xf32> to vector<16x16xf32>
    %210 = arith.subf %206, %209 : vector<16x16xf32>
    %211 = math.exp %210 : vector<16x16xf32>
    %cst_72 = arith.constant dense<0.000000e+00> : vector<16xf32>
    %212 = vector.multi_reduction <add>, %211, %cst_72 [1] : vector<16x16xf32> to vector<16xf32>
    %213 = vector.shape_cast %212 : vector<16xf32> to vector<16x1xf32>
    %214 = arith.truncf %211 : vector<16x16xf32> to vector<16x16xbf16>
    %215 = vector.extract_strided_slice %181 {offsets = [0, 8], sizes = [16, 8], strides = [1, 1]} : vector<16x32xbf16> to vector<16x8xbf16>
    %cst_73 = arith.constant dense<0.000000e+00> : vector<16x8xf32>
    %216 = tpu.matmul %214, %215, %cst_73 {dimension_numbers = #tpu.dot_dimension_numbers<[1], [0], [0], [1], [0, 0, 1, 1], [], []>} : vector<16x16xbf16>, vector<16x8xbf16>, vector<16x8xf32> -> vector<16x8xf32>
    %217 = tpu.reciprocal %213 {approx = true} : vector<16x1xf32> -> vector<16x1xf32>
    %218 = vector.broadcast %217 : vector<16x1xf32> to vector<16x8xf32>
    %219 = arith.mulf %216, %218 : vector<16x8xf32>
    %220 = vector.extract_strided_slice %180 {offsets = [0, 16], sizes = [16, 8], strides = [1, 1]} : vector<16x32xbf16> to vector<16x8xbf16>
    %221 = vector.extract_strided_slice %179 {offsets = [16, 0], sizes = [8, 16], strides = [1, 1]} : vector<32x16xbf16> to vector<8x16xbf16>
    %cst_74 = arith.constant dense<0.000000e+00> : vector<16x16xf32>
    %222 = tpu.matmul %220, %221, %cst_74 {dimension_numbers = #tpu.dot_dimension_numbers<[1], [0], [0], [1], [0, 0, 1, 1], [], []>} : vector<16x8xbf16>, vector<8x16xbf16>, vector<16x16xf32> -> vector<16x16xf32>
    %223 = vector.extract_strided_slice %177 {offsets = [2, 0, 0], sizes = [1, 16, 16], strides = [1, 1, 1]} : vector<4x16x16xf32> to vector<1x16x16xf32>
    %224 = vector.shape_cast %223 : vector<1x16x16xf32> to vector<16x16xf32>
    %225 = arith.addf %222, %224 : vector<16x16xf32>
    %cst_75 = arith.constant dense<0xFF800000> : vector<16xf32>
    %226 = vector.multi_reduction <maximumf>, %225, %cst_75 [1] : vector<16x16xf32> to vector<16xf32>
    %227 = vector.shape_cast %226 : vector<16xf32> to vector<16x1xf32>
    %228 = vector.broadcast %227 : vector<16x1xf32> to vector<16x16xf32>
    %229 = arith.subf %225, %228 : vector<16x16xf32>
    %230 = math.exp %229 : vector<16x16xf32>
    %cst_76 = arith.constant dense<0.000000e+00> : vector<16xf32>
    %231 = vector.multi_reduction <add>, %230, %cst_76 [1] : vector<16x16xf32> to vector<16xf32>
    %232 = vector.shape_cast %231 : vector<16xf32> to vector<16x1xf32>
    %233 = arith.truncf %230 : vector<16x16xf32> to vector<16x16xbf16>
    %234 = vector.extract_strided_slice %181 {offsets = [0, 16], sizes = [16, 8], strides = [1, 1]} : vector<16x32xbf16> to vector<16x8xbf16>
    %cst_77 = arith.constant dense<0.000000e+00> : vector<16x8xf32>
    %235 = tpu.matmul %233, %234, %cst_77 {dimension_numbers = #tpu.dot_dimension_numbers<[1], [0], [0], [1], [0, 0, 1, 1], [], []>} : vector<16x16xbf16>, vector<16x8xbf16>, vector<16x8xf32> -> vector<16x8xf32>
    %236 = tpu.reciprocal %232 {approx = true} : vector<16x1xf32> -> vector<16x1xf32>
    %237 = vector.broadcast %236 : vector<16x1xf32> to vector<16x8xf32>
    %238 = arith.mulf %235, %237 : vector<16x8xf32>
    %239 = vector.extract_strided_slice %180 {offsets = [0, 24], sizes = [16, 8], strides = [1, 1]} : vector<16x32xbf16> to vector<16x8xbf16>
    %240 = vector.extract_strided_slice %179 {offsets = [24, 0], sizes = [8, 16], strides = [1, 1]} : vector<32x16xbf16> to vector<8x16xbf16>
    %cst_78 = arith.constant dense<0.000000e+00> : vector<16x16xf32>
    %241 = tpu.matmul %239, %240, %cst_78 {dimension_numbers = #tpu.dot_dimension_numbers<[1], [0], [0], [1], [0, 0, 1, 1], [], []>} : vector<16x8xbf16>, vector<8x16xbf16>, vector<16x16xf32> -> vector<16x16xf32>
    %242 = vector.extract_strided_slice %177 {offsets = [3, 0, 0], sizes = [1, 16, 16], strides = [1, 1, 1]} : vector<4x16x16xf32> to vector<1x16x16xf32>
    %243 = vector.shape_cast %242 : vector<1x16x16xf32> to vector<16x16xf32>
    %244 = arith.addf %241, %243 : vector<16x16xf32>
    %cst_79 = arith.constant dense<0xFF800000> : vector<16xf32>
    %245 = vector.multi_reduction <maximumf>, %244, %cst_79 [1] : vector<16x16xf32> to vector<16xf32>
    %246 = vector.shape_cast %245 : vector<16xf32> to vector<16x1xf32>
    %247 = vector.broadcast %246 : vector<16x1xf32> to vector<16x16xf32>
    %248 = arith.subf %244, %247 : vector<16x16xf32>
    %249 = math.exp %248 : vector<16x16xf32>
    %cst_80 = arith.constant dense<0.000000e+00> : vector<16xf32>
    %250 = vector.multi_reduction <add>, %249, %cst_80 [1] : vector<16x16xf32> to vector<16xf32>
    %251 = vector.shape_cast %250 : vector<16xf32> to vector<16x1xf32>
    %252 = arith.truncf %249 : vector<16x16xf32> to vector<16x16xbf16>
    %253 = vector.extract_strided_slice %181 {offsets = [0, 24], sizes = [16, 8], strides = [1, 1]} : vector<16x32xbf16> to vector<16x8xbf16>
    %cst_81 = arith.constant dense<0.000000e+00> : vector<16x8xf32>
    %254 = tpu.matmul %252, %253, %cst_81 {dimension_numbers = #tpu.dot_dimension_numbers<[1], [0], [0], [1], [0, 0, 1, 1], [], []>} : vector<16x16xbf16>, vector<16x8xbf16>, vector<16x8xf32> -> vector<16x8xf32>
    %255 = tpu.reciprocal %251 {approx = true} : vector<16x1xf32> -> vector<16x1xf32>
    %256 = vector.broadcast %255 : vector<16x1xf32> to vector<16x8xf32>
    %257 = arith.mulf %254, %256 : vector<16x8xf32>
    %258 = tpu.concatenate %200, %219, %238, %257 in 1 : vector<16x8xf32>, vector<16x8xf32>, vector<16x8xf32>, vector<16x8xf32> -> vector<16x32xf32>
    %259 = arith.truncf %258 : vector<16x32xf32> to vector<16x32xbf16>
    %cst_82 = arith.constant dense<0.000000e+00> : vector<16x32xf32>
    %260 = tpu.matmul %259, %176, %cst_82 {dimension_numbers = #tpu.dot_dimension_numbers<[1], [0], [0], [1], [0, 0, 1, 1], [], []>} : vector<16x32xbf16>, vector<32x32xbf16>, vector<16x32xf32> -> vector<16x32xf32>
    %261 = arith.addf %156, %260 : vector<16x32xf32>
    %c0_83 = arith.constant 0 : index
    %c0_84 = arith.constant 0 : index
    %262 = vector.load %arg16[%c0_83, %c0_84] : memref<1x32xf32, #tpu.memory_space<vmem>>, vector<1x32xf32>
    %263 = arith.mulf %261, %261 : vector<16x32xf32>
    %cst_85 = arith.constant dense<0.000000e+00> : vector<16xf32>
    %264 = vector.multi_reduction <add>, %263, %cst_85 [1] : vector<16x32xf32> to vector<16xf32>
    %265 = vector.shape_cast %264 : vector<16xf32> to vector<16x1xf32>
    %cst_86 = arith.constant 3.200000e+01 : f32
    %266 = vector.broadcast %cst_86 : f32 to vector<16x1xf32>
    %267 = arith.divf %265, %266 : vector<16x1xf32>
    %cst_87 = arith.constant 9.99999997E-7 : f32
    %268 = vector.broadcast %cst_87 : f32 to vector<16x1xf32>
    %269 = arith.addf %267, %268 : vector<16x1xf32>
    %270 = math.rsqrt %269 : vector<16x1xf32>
    %271 = vector.broadcast %270 : vector<16x1xf32> to vector<16x32xf32>
    %272 = arith.mulf %261, %271 : vector<16x32xf32>
    %273 = vector.broadcast %262 : vector<1x32xf32> to vector<16x32xf32>
    %274 = arith.mulf %272, %273 : vector<16x32xf32>
    %275 = arith.truncf %274 : vector<16x32xf32> to vector<16x32xbf16>
    %c0_88 = arith.constant 0 : index
    %c0_89 = arith.constant 0 : index
    %276 = vector.load %arg17[%c0_88, %c0_89] : memref<32x32xbf16, #tpu.memory_space<vmem>>, vector<32x32xbf16>
    %cst_90 = arith.constant dense<0.000000e+00> : vector<16x32xf32>
    %277 = tpu.matmul %275, %276, %cst_90 {dimension_numbers = #tpu.dot_dimension_numbers<[1], [0], [0], [1], [0, 0, 1, 1], [], []>} : vector<16x32xbf16>, vector<32x32xbf16>, vector<16x32xf32> -> vector<16x32xf32>
    %278 = arith.truncf %148 : vector<16x32xf32> to vector<16x32xbf16>
    %c0_91 = arith.constant 0 : index
    %c0_92 = arith.constant 0 : index
    %279 = vector.load %arg18[%c0_91, %c0_92] : memref<32x64xbf16, #tpu.memory_space<vmem>>, vector<32x64xbf16>
    %cst_93 = arith.constant dense<0.000000e+00> : vector<16x64xf32>
    %280 = tpu.matmul %278, %279, %cst_93 {dimension_numbers = #tpu.dot_dimension_numbers<[1], [0], [0], [1], [0, 0, 1, 1], [], []>} : vector<16x32xbf16>, vector<32x64xbf16>, vector<16x64xf32> -> vector<16x64xf32>
    %281 = vector.extract_strided_slice %280 {offsets = [0, 0], sizes = [16, 32], strides = [1, 1]} : vector<16x64xf32> to vector<16x32xf32>
    %282 = vector.extract_strided_slice %280 {offsets = [0, 32], sizes = [16, 32], strides = [1, 1]} : vector<16x64xf32> to vector<16x32xf32>
    %c0_94 = arith.constant 0 : index
    %c0_95 = arith.constant 0 : index
    %283 = vector.load %arg19[%c0_94, %c0_95] : memref<32x32xbf16, #tpu.memory_space<vmem>>, vector<32x32xbf16>
    %c0_96 = arith.constant 0 : index
    %c0_97 = arith.constant 0 : index
    %284 = vector.load %arg4[%c0_96, %c0_97] : memref<16x16xf32, #tpu.memory_space<vmem>>, vector<16x16xf32>
    %285 = tpu.transpose %281, [1, 0] : vector<16x32xf32> -> vector<32x16xf32>
    %286 = arith.truncf %285 : vector<32x16xf32> to vector<32x16xbf16>
    %287 = arith.truncf %277 : vector<16x32xf32> to vector<16x32xbf16>
    %288 = arith.truncf %282 : vector<16x32xf32> to vector<16x32xbf16>
    %289 = vector.extract_strided_slice %287 {offsets = [0, 0], sizes = [16, 8], strides = [1, 1]} : vector<16x32xbf16> to vector<16x8xbf16>
    %290 = vector.extract_strided_slice %286 {offsets = [0, 0], sizes = [8, 16], strides = [1, 1]} : vector<32x16xbf16> to vector<8x16xbf16>
    %cst_98 = arith.constant dense<0.000000e+00> : vector<16x16xf32>
    %291 = tpu.matmul %289, %290, %cst_98 {dimension_numbers = #tpu.dot_dimension_numbers<[1], [0], [0], [1], [0, 0, 1, 1], [], []>} : vector<16x8xbf16>, vector<8x16xbf16>, vector<16x16xf32> -> vector<16x16xf32>
    %292 = arith.addf %291, %284 : vector<16x16xf32>
    %cst_99 = arith.constant dense<0xFF800000> : vector<16xf32>
    %293 = vector.multi_reduction <maximumf>, %292, %cst_99 [1] : vector<16x16xf32> to vector<16xf32>
    %294 = vector.shape_cast %293 : vector<16xf32> to vector<16x1xf32>
    %295 = vector.broadcast %294 : vector<16x1xf32> to vector<16x16xf32>
    %296 = arith.subf %292, %295 : vector<16x16xf32>
    %297 = math.exp %296 : vector<16x16xf32>
    %cst_100 = arith.constant dense<0.000000e+00> : vector<16xf32>
    %298 = vector.multi_reduction <add>, %297, %cst_100 [1] : vector<16x16xf32> to vector<16xf32>
    %299 = vector.shape_cast %298 : vector<16xf32> to vector<16x1xf32>
    %300 = arith.truncf %297 : vector<16x16xf32> to vector<16x16xbf16>
    %301 = vector.extract_strided_slice %288 {offsets = [0, 0], sizes = [16, 8], strides = [1, 1]} : vector<16x32xbf16> to vector<16x8xbf16>
    %cst_101 = arith.constant dense<0.000000e+00> : vector<16x8xf32>
    %302 = tpu.matmul %300, %301, %cst_101 {dimension_numbers = #tpu.dot_dimension_numbers<[1], [0], [0], [1], [0, 0, 1, 1], [], []>} : vector<16x16xbf16>, vector<16x8xbf16>, vector<16x8xf32> -> vector<16x8xf32>
    %303 = tpu.reciprocal %299 {approx = true} : vector<16x1xf32> -> vector<16x1xf32>
    %304 = vector.broadcast %303 : vector<16x1xf32> to vector<16x8xf32>
    %305 = arith.mulf %302, %304 : vector<16x8xf32>
    %306 = vector.extract_strided_slice %287 {offsets = [0, 8], sizes = [16, 8], strides = [1, 1]} : vector<16x32xbf16> to vector<16x8xbf16>
    %307 = vector.extract_strided_slice %286 {offsets = [8, 0], sizes = [8, 16], strides = [1, 1]} : vector<32x16xbf16> to vector<8x16xbf16>
    %cst_102 = arith.constant dense<0.000000e+00> : vector<16x16xf32>
    %308 = tpu.matmul %306, %307, %cst_102 {dimension_numbers = #tpu.dot_dimension_numbers<[1], [0], [0], [1], [0, 0, 1, 1], [], []>} : vector<16x8xbf16>, vector<8x16xbf16>, vector<16x16xf32> -> vector<16x16xf32>
    %309 = arith.addf %308, %284 : vector<16x16xf32>
    %cst_103 = arith.constant dense<0xFF800000> : vector<16xf32>
    %310 = vector.multi_reduction <maximumf>, %309, %cst_103 [1] : vector<16x16xf32> to vector<16xf32>
    %311 = vector.shape_cast %310 : vector<16xf32> to vector<16x1xf32>
    %312 = vector.broadcast %311 : vector<16x1xf32> to vector<16x16xf32>
    %313 = arith.subf %309, %312 : vector<16x16xf32>
    %314 = math.exp %313 : vector<16x16xf32>
    %cst_104 = arith.constant dense<0.000000e+00> : vector<16xf32>
    %315 = vector.multi_reduction <add>, %314, %cst_104 [1] : vector<16x16xf32> to vector<16xf32>
    %316 = vector.shape_cast %315 : vector<16xf32> to vector<16x1xf32>
    %317 = arith.truncf %314 : vector<16x16xf32> to vector<16x16xbf16>
    %318 = vector.extract_strided_slice %288 {offsets = [0, 8], sizes = [16, 8], strides = [1, 1]} : vector<16x32xbf16> to vector<16x8xbf16>
    %cst_105 = arith.constant dense<0.000000e+00> : vector<16x8xf32>
    %319 = tpu.matmul %317, %318, %cst_105 {dimension_numbers = #tpu.dot_dimension_numbers<[1], [0], [0], [1], [0, 0, 1, 1], [], []>} : vector<16x16xbf16>, vector<16x8xbf16>, vector<16x8xf32> -> vector<16x8xf32>
    %320 = tpu.reciprocal %316 {approx = true} : vector<16x1xf32> -> vector<16x1xf32>
    %321 = vector.broadcast %320 : vector<16x1xf32> to vector<16x8xf32>
    %322 = arith.mulf %319, %321 : vector<16x8xf32>
    %323 = vector.extract_strided_slice %287 {offsets = [0, 16], sizes = [16, 8], strides = [1, 1]} : vector<16x32xbf16> to vector<16x8xbf16>
    %324 = vector.extract_strided_slice %286 {offsets = [16, 0], sizes = [8, 16], strides = [1, 1]} : vector<32x16xbf16> to vector<8x16xbf16>
    %cst_106 = arith.constant dense<0.000000e+00> : vector<16x16xf32>
    %325 = tpu.matmul %323, %324, %cst_106 {dimension_numbers = #tpu.dot_dimension_numbers<[1], [0], [0], [1], [0, 0, 1, 1], [], []>} : vector<16x8xbf16>, vector<8x16xbf16>, vector<16x16xf32> -> vector<16x16xf32>
    %326 = arith.addf %325, %284 : vector<16x16xf32>
    %cst_107 = arith.constant dense<0xFF800000> : vector<16xf32>
    %327 = vector.multi_reduction <maximumf>, %326, %cst_107 [1] : vector<16x16xf32> to vector<16xf32>
    %328 = vector.shape_cast %327 : vector<16xf32> to vector<16x1xf32>
    %329 = vector.broadcast %328 : vector<16x1xf32> to vector<16x16xf32>
    %330 = arith.subf %326, %329 : vector<16x16xf32>
    %331 = math.exp %330 : vector<16x16xf32>
    %cst_108 = arith.constant dense<0.000000e+00> : vector<16xf32>
    %332 = vector.multi_reduction <add>, %331, %cst_108 [1] : vector<16x16xf32> to vector<16xf32>
    %333 = vector.shape_cast %332 : vector<16xf32> to vector<16x1xf32>
    %334 = arith.truncf %331 : vector<16x16xf32> to vector<16x16xbf16>
    %335 = vector.extract_strided_slice %288 {offsets = [0, 16], sizes = [16, 8], strides = [1, 1]} : vector<16x32xbf16> to vector<16x8xbf16>
    %cst_109 = arith.constant dense<0.000000e+00> : vector<16x8xf32>
    %336 = tpu.matmul %334, %335, %cst_109 {dimension_numbers = #tpu.dot_dimension_numbers<[1], [0], [0], [1], [0, 0, 1, 1], [], []>} : vector<16x16xbf16>, vector<16x8xbf16>, vector<16x8xf32> -> vector<16x8xf32>
    %337 = tpu.reciprocal %333 {approx = true} : vector<16x1xf32> -> vector<16x1xf32>
    %338 = vector.broadcast %337 : vector<16x1xf32> to vector<16x8xf32>
    %339 = arith.mulf %336, %338 : vector<16x8xf32>
    %340 = vector.extract_strided_slice %287 {offsets = [0, 24], sizes = [16, 8], strides = [1, 1]} : vector<16x32xbf16> to vector<16x8xbf16>
    %341 = vector.extract_strided_slice %286 {offsets = [24, 0], sizes = [8, 16], strides = [1, 1]} : vector<32x16xbf16> to vector<8x16xbf16>
    %cst_110 = arith.constant dense<0.000000e+00> : vector<16x16xf32>
    %342 = tpu.matmul %340, %341, %cst_110 {dimension_numbers = #tpu.dot_dimension_numbers<[1], [0], [0], [1], [0, 0, 1, 1], [], []>} : vector<16x8xbf16>, vector<8x16xbf16>, vector<16x16xf32> -> vector<16x16xf32>
    %343 = arith.addf %342, %284 : vector<16x16xf32>
    %cst_111 = arith.constant dense<0xFF800000> : vector<16xf32>
    %344 = vector.multi_reduction <maximumf>, %343, %cst_111 [1] : vector<16x16xf32> to vector<16xf32>
    %345 = vector.shape_cast %344 : vector<16xf32> to vector<16x1xf32>
    %346 = vector.broadcast %345 : vector<16x1xf32> to vector<16x16xf32>
    %347 = arith.subf %343, %346 : vector<16x16xf32>
    %348 = math.exp %347 : vector<16x16xf32>
    %cst_112 = arith.constant dense<0.000000e+00> : vector<16xf32>
    %349 = vector.multi_reduction <add>, %348, %cst_112 [1] : vector<16x16xf32> to vector<16xf32>
    %350 = vector.shape_cast %349 : vector<16xf32> to vector<16x1xf32>
    %351 = arith.truncf %348 : vector<16x16xf32> to vector<16x16xbf16>
    %352 = vector.extract_strided_slice %288 {offsets = [0, 24], sizes = [16, 8], strides = [1, 1]} : vector<16x32xbf16> to vector<16x8xbf16>
    %cst_113 = arith.constant dense<0.000000e+00> : vector<16x8xf32>
    %353 = tpu.matmul %351, %352, %cst_113 {dimension_numbers = #tpu.dot_dimension_numbers<[1], [0], [0], [1], [0, 0, 1, 1], [], []>} : vector<16x16xbf16>, vector<16x8xbf16>, vector<16x8xf32> -> vector<16x8xf32>
    %354 = tpu.reciprocal %350 {approx = true} : vector<16x1xf32> -> vector<16x1xf32>
    %355 = vector.broadcast %354 : vector<16x1xf32> to vector<16x8xf32>
    %356 = arith.mulf %353, %355 : vector<16x8xf32>
    %357 = tpu.concatenate %305, %322, %339, %356 in 1 : vector<16x8xf32>, vector<16x8xf32>, vector<16x8xf32>, vector<16x8xf32> -> vector<16x32xf32>
    %358 = arith.truncf %357 : vector<16x32xf32> to vector<16x32xbf16>
    %cst_114 = arith.constant dense<0.000000e+00> : vector<16x32xf32>
    %359 = tpu.matmul %358, %283, %cst_114 {dimension_numbers = #tpu.dot_dimension_numbers<[1], [0], [0], [1], [0, 0, 1, 1], [], []>} : vector<16x32xbf16>, vector<32x32xbf16>, vector<16x32xf32> -> vector<16x32xf32>
    %360 = arith.addf %261, %359 : vector<16x32xf32>
    %c0_115 = arith.constant 0 : index
    %c0_116 = arith.constant 0 : index
    %361 = vector.load %arg20[%c0_115, %c0_116] : memref<1x32xf32, #tpu.memory_space<vmem>>, vector<1x32xf32>
    %362 = arith.mulf %360, %360 : vector<16x32xf32>
    %cst_117 = arith.constant dense<0.000000e+00> : vector<16xf32>
    %363 = vector.multi_reduction <add>, %362, %cst_117 [1] : vector<16x32xf32> to vector<16xf32>
    %364 = vector.shape_cast %363 : vector<16xf32> to vector<16x1xf32>
    %cst_118 = arith.constant 3.200000e+01 : f32
    %365 = vector.broadcast %cst_118 : f32 to vector<16x1xf32>
    %366 = arith.divf %364, %365 : vector<16x1xf32>
    %cst_119 = arith.constant 9.99999997E-7 : f32
    %367 = vector.broadcast %cst_119 : f32 to vector<16x1xf32>
    %368 = arith.addf %366, %367 : vector<16x1xf32>
    %369 = math.rsqrt %368 : vector<16x1xf32>
    %370 = vector.broadcast %369 : vector<16x1xf32> to vector<16x32xf32>
    %371 = arith.mulf %360, %370 : vector<16x32xf32>
    %372 = vector.broadcast %361 : vector<1x32xf32> to vector<16x32xf32>
    %373 = arith.mulf %371, %372 : vector<16x32xf32>
    %374 = arith.truncf %373 : vector<16x32xf32> to vector<16x32xbf16>
    %c0_120 = arith.constant 0 : index
    %c0_121 = arith.constant 0 : index
    %375 = vector.load %arg21[%c0_120, %c0_121] : memref<32x64xbf16, #tpu.memory_space<vmem>>, vector<32x64xbf16>
    %cst_122 = arith.constant dense<0.000000e+00> : vector<16x64xf32>
    %376 = tpu.matmul %374, %375, %cst_122 {dimension_numbers = #tpu.dot_dimension_numbers<[1], [0], [0], [1], [0, 0, 1, 1], [], []>} : vector<16x32xbf16>, vector<32x64xbf16>, vector<16x64xf32> -> vector<16x64xf32>
    %cst_123 = arith.constant 0.000000e+00 : f32
    %377 = vector.broadcast %cst_123 : f32 to vector<16x64xf32>
    %378 = arith.maximumf %376, %377 : vector<16x64xf32>
    %379 = arith.truncf %378 : vector<16x64xf32> to vector<16x64xbf16>
    %c0_124 = arith.constant 0 : index
    %c0_125 = arith.constant 0 : index
    %380 = vector.load %arg22[%c0_124, %c0_125] : memref<64x32xbf16, #tpu.memory_space<vmem>>, vector<64x32xbf16>
    %cst_126 = arith.constant dense<0.000000e+00> : vector<16x32xf32>
    %381 = tpu.matmul %379, %380, %cst_126 {dimension_numbers = #tpu.dot_dimension_numbers<[1], [0], [0], [1], [0, 0, 1, 1], [], []>} : vector<16x64xbf16>, vector<64x32xbf16>, vector<16x32xf32> -> vector<16x32xf32>
    %382 = arith.addf %360, %381 : vector<16x32xf32>
    %c0_127 = arith.constant 0 : index
    %c0_128 = arith.constant 0 : index
    %383 = vector.load %arg23[%c0_127, %c0_128] : memref<1x32xf32, #tpu.memory_space<vmem>>, vector<1x32xf32>
    %384 = arith.mulf %382, %382 : vector<16x32xf32>
    %cst_129 = arith.constant dense<0.000000e+00> : vector<16xf32>
    %385 = vector.multi_reduction <add>, %384, %cst_129 [1] : vector<16x32xf32> to vector<16xf32>
    %386 = vector.shape_cast %385 : vector<16xf32> to vector<16x1xf32>
    %cst_130 = arith.constant 3.200000e+01 : f32
    %387 = vector.broadcast %cst_130 : f32 to vector<16x1xf32>
    %388 = arith.divf %386, %387 : vector<16x1xf32>
    %cst_131 = arith.constant 9.99999997E-7 : f32
    %389 = vector.broadcast %cst_131 : f32 to vector<16x1xf32>
    %390 = arith.addf %388, %389 : vector<16x1xf32>
    %391 = math.rsqrt %390 : vector<16x1xf32>
    %392 = vector.broadcast %391 : vector<16x1xf32> to vector<16x32xf32>
    %393 = arith.mulf %382, %392 : vector<16x32xf32>
    %394 = vector.broadcast %383 : vector<1x32xf32> to vector<16x32xf32>
    %395 = arith.mulf %393, %394 : vector<16x32xf32>
    %396 = arith.truncf %395 : vector<16x32xf32> to vector<16x32xbf16>
    %c0_132 = arith.constant 0 : index
    %c0_133 = arith.constant 0 : index
    %397 = vector.load %arg24[%c0_132, %c0_133] : memref<32x128xbf16, #tpu.memory_space<vmem>>, vector<32x128xbf16>
    %cst_134 = arith.constant dense<0.000000e+00> : vector<16x128xf32>
    %398 = tpu.matmul %396, %397, %cst_134 {dimension_numbers = #tpu.dot_dimension_numbers<[1], [0], [0], [1], [0, 0, 1, 1], [], []>} : vector<16x32xbf16>, vector<32x128xbf16>, vector<16x128xf32> -> vector<16x128xf32>
    %c0_135 = arith.constant 0 : index
    %c0_136 = arith.constant 0 : index
    %399 = vector.load %arg25[%c0_135, %c0_136] : memref<1x128xf32, #tpu.memory_space<vmem>>, vector<1x128xf32>
    %400 = vector.broadcast %399 : vector<1x128xf32> to vector<16x128xf32>
    %401 = arith.addf %398, %400 : vector<16x128xf32>
    %c0_137 = arith.constant 0 : index
    %c0_138 = arith.constant 0 : index
    %402 = vector.load %arg26[%c0_137, %c0_138] : memref<16x128xf32, #tpu.memory_space<vmem>>, vector<16x128xf32>
    tpu.vector_store %arg26[%c0_137, %c0_138], %401 {strides = array<i32>} : memref<16x128xf32, #tpu.memory_space<vmem>>, vector<16x128xf32>,
    %cst_139 = arith.constant dense<0xFF800000> : vector<16xf32>
    %403 = vector.multi_reduction <maximumf>, %401, %cst_139 [1] : vector<16x128xf32> to vector<16xf32>
    %404 = vector.shape_cast %403 : vector<16xf32> to vector<16x1xf32>
    %405 = vector.broadcast %404 : vector<16x1xf32> to vector<16x128xf32>
    %406 = arith.subf %401, %405 : vector<16x128xf32>
    %407 = math.exp %406 : vector<16x128xf32>
    %cst_140 = arith.constant dense<0.000000e+00> : vector<16xf32>
    %408 = vector.multi_reduction <add>, %407, %cst_140 [1] : vector<16x128xf32> to vector<16xf32>
    %409 = vector.shape_cast %408 : vector<16xf32> to vector<16x1xf32>
    %410 = math.log %409 : vector<16x1xf32>
    %411 = arith.addf %410, %404 : vector<16x1xf32>
    %412 = arith.mulf %401, %154 : vector<16x128xf32>
    %cst_141 = arith.constant dense<0.000000e+00> : vector<16xf32>
    %413 = vector.multi_reduction <add>, %412, %cst_141 [1] : vector<16x128xf32> to vector<16xf32>
    %414 = vector.shape_cast %413 : vector<16xf32> to vector<16x1xf32>
    %c-100_i32 = arith.constant -100 : i32
    %415 = vector.broadcast %c-100_i32 : i32 to vector<16x1xi32>
    %416 = arith.cmpi ne, %149, %415 : vector<16x1xi32>
    %417 = arith.extui %416 : vector<16x1xi1> to vector<16x1xi32>
    %418 = arith.sitofp %417 : vector<16x1xi32> to vector<16x1xf32>
    %419 = arith.subf %411, %414 : vector<16x1xf32>
    %420 = arith.mulf %419, %418 : vector<16x1xf32>
    %421 = vector.shape_cast %420 : vector<16x1xf32> to vector<1x16x1xf32>
    %cst_142 = arith.constant dense<0.000000e+00> : vector<1xf32>
    %422 = vector.multi_reduction <add>, %421, %cst_142 [1, 2] : vector<1x16x1xf32> to vector<1xf32>
    %423 = vector.shape_cast %422 : vector<1xf32> to vector<1x1x1xf32>
    %424 = vector.extract %423[0, 0, 0] : f32 from vector<1x1x1xf32>
    %425 = vector.broadcast %424 : f32 to vector<1x1xf32>
    %426 = vector.shape_cast %418 : vector<16x1xf32> to vector<1x16x1xf32>
    %cst_143 = arith.constant dense<0.000000e+00> : vector<1xf32>
    %427 = vector.multi_reduction <add>, %426, %cst_143 [1, 2] : vector<1x16x1xf32> to vector<1xf32>
    %428 = vector.shape_cast %427 : vector<1xf32> to vector<1x1x1xf32>
    %429 = vector.extract %428[0, 0, 0] : f32 from vector<1x1x1xf32>
    %430 = vector.broadcast %429 : f32 to vector<1x1xf32>
    %431 = arith.divf %425, %430 : vector<1x1xf32>
    %c0_144 = arith.constant 0 : index
    %c0_145 = arith.constant 0 : index
    %432 = vector.load %arg27[%c0_144, %c0_145] : memref<1x1xf32, #tpu.memory_space<vmem>>, vector<1x1xf32>
    tpu.vector_store %arg27[%c0_144, %c0_145], %431 {strides = array<i32>} : memref<1x1xf32, #tpu.memory_space<vmem>>, vector<1x1xf32>,
    return
  }
}

</mosaic_0001>

<llo_original>
// kernel: tile.19
$region0: #{tile.19}
  %s0 = inlined_call_operand.vmem [shape: f32[4,2,8,2,8], index: 0, kind: input, shape index: {}]
  %s1 = inlined_call_operand.vmem [shape: f32[4,16,16], index: 1, kind: output, shape index: {}]
  $region1: #{tile.19} parent=0
    #allocation0 [shape = 'u8[262144]{0}', space=vmem, size = 0x40000, scoped, tag = 'scoped mem for input reshape']
    %s3 = sshll.u32 1, 2
    %s4 = ssub.s32 %s3, 1
    %s5 = smul.addr 2, 63
    %s6 = scalar_lea.vmem %s0, %s5
    %v7 = vld [vmem:[%s6] sm:%s4]
    %s8 = scalar_lea.vmem [#allocation0], 504
    %9 = vst [vmem:[%s8] sm:%s4] %v7
    %s10 = smul.addr 2, 62
    %s11 = scalar_lea.vmem %s0, %s10
    %v12 = vld [vmem:[%s11] sm:%s4]
    %s13 = scalar_lea.vmem [#allocation0], 496
    %14 = vst [vmem:[%s13] sm:%s4] %v12
    %s15 = smul.addr 2, 61
    %s16 = scalar_lea.vmem %s0, %s15
    %v17 = vld [vmem:[%s16] sm:%s4]
    %s18 = scalar_lea.vmem [#allocation0], 488
    %19 = vst [vmem:[%s18] sm:%s4] %v17
    %s20 = smul.addr 2, 60
    %s21 = scalar_lea.vmem %s0, %s20
    %v22 = vld [vmem:[%s21] sm:%s4]
    %s23 = scalar_lea.vmem [#allocation0], 480
    %24 = vst [vmem:[%s23] sm:%s4] %v22
    %s25 = smul.addr 2, 59
    %s26 = scalar_lea.vmem %s0, %s25
    %v27 = vld [vmem:[%s26] sm:%s4]
    %s28 = scalar_lea.vmem [#allocation0], 472
    %29 = vst [vmem:[%s28] sm:%s4] %v27
    %s30 = smul.addr 2, 58
    %s31 = scalar_lea.vmem %s0, %s30
    %v32 = vld [vmem:[%s31] sm:%s4]
    %s33 = scalar_lea.vmem [#allocation0], 464
    %34 = vst [vmem:[%s33] sm:%s4] %v32
    %s35 = smul.addr 2, 57
    %s36 = scalar_lea.vmem %s0, %s35
    %v37 = vld [vmem:[%s36] sm:%s4]
    %s38 = scalar_lea.vmem [#allocation0], 456
    %39 = vst [vmem:[%s38] sm:%s4] %v37
    %s40 = smul.addr 2, 56
    %s41 = scalar_lea.vmem %s0, %s40
    %v42 = vld [vmem:[%s41] sm:%s4]
    %s43 = scalar_lea.vmem [#allocation0], 448
    %44 = vst [vmem:[%s43] sm:%s4] %v42
    %s45 = smul.addr 2, 55
    %s46 = scalar_lea.vmem %s0, %s45
    %v47 = vld [vmem:[%s46] sm:%s4]
    %s48 = scalar_lea.vmem [#allocation0], 440
    %49 = vst [vmem:[%s48] sm:%s4] %v47
    %s50 = smul.addr 2, 54
    %s51 = scalar_lea.vmem %s0, %s50
    %v52 = vld [vmem:[%s51] sm:%s4]
    %s53 = scalar_lea.vmem [#allocation0], 432
    %54 = vst [vmem:[%s53] sm:%s4] %v52
    %s55 = smul.addr 2, 53
    %s56 = scalar_lea.vmem %s0, %s55
    %v57 = vld [vmem:[%s56] sm:%s4]
    %s58 = scalar_lea.vmem [#allocation0], 424
    %59 = vst [vmem:[%s58] sm:%s4] %v57
    %s60 = smul.addr 2, 52
    %s61 = scalar_lea.vmem %s0, %s60
    %v62 = vld [vmem:[%s61] sm:%s4]
    %s63 = scalar_lea.vmem [#allocation0], 416
    %64 = vst [vmem:[%s63] sm:%s4] %v62
    %s65 = smul.addr 2, 51
    %s66 = scalar_lea.vmem %s0, %s65
    %v67 = vld [vmem:[%s66] sm:%s4]
    %s68 = scalar_lea.vmem [#allocation0], 408
    %69 = vst [vmem:[%s68] sm:%s4] %v67
    %s70 = smul.addr 2, 50
    %s71 = scalar_lea.vmem %s0, %s70
    %v72 = vld [vmem:[%s71] sm:%s4]
    %s73 = scalar_lea.vmem [#allocation0], 400
    %74 = vst [vmem:[%s73] sm:%s4] %v72
    %s75 = smul.addr 2, 49
    %s76 = scalar_lea.vmem %s0, %s75
    %v77 = vld [vmem:[%s76] sm:%s4]
    %s78 = scalar_lea.vmem [#allocation0], 392
    %79 = vst [vmem:[%s78] sm:%s4] %v77
    %s80 = smul.addr 2, 48
    %s81 = scalar_lea.vmem %s0, %s80
    %v82 = vld [vmem:[%s81] sm:%s4]
    %s83 = scalar_lea.vmem [#allocation0], 384
    %84 = vst [vmem:[%s83] sm:%s4] %v82
    %s85 = smul.addr 2, 47
    %s86 = scalar_lea.vmem %s0, %s85
    %v87 = vld [vmem:[%s86] sm:%s4]
    %s88 = scalar_lea.vmem [#allocation0], 376
    %89 = vst [vmem:[%s88] sm:%s4] %v87
    %s90 = smul.addr 2, 46
    %s91 = scalar_lea.vmem %s0, %s90
    %v92 = vld [vmem:[%s91] sm:%s4]
    %s93 = scalar_lea.vmem [#allocation0], 368
    %94 = vst [vmem:[%s93] sm:%s4] %v92
    %s95 = smul.addr 2, 45
    %s96 = scalar_lea.vmem %s0, %s95
    %v97 = vld [vmem:[%s96] sm:%s4]
    %s98 = scalar_lea.vmem [#allocation0], 360
    %99 = vst [vmem:[%s98] sm:%s4] %v97
    %s100 = smul.addr 2, 44
    %s101 = scalar_lea.vmem %s0, %s100
    %v102 = vld [vmem:[%s101] sm:%s4]
    %s103 = scalar_lea.vmem [#allocation0], 352
    %104 = vst [vmem:[%s103] sm:%s4] %v102
    %s105 = smul.addr 2, 43
    %s106 = scalar_lea.vmem %s0, %s105
    %v107 = vld [vmem:[%s106] sm:%s4]
    %s108 = scalar_lea.vmem [#allocation0], 344
    %109 = vst [vmem:[%s108] sm:%s4] %v107
    %s110 = smul.addr 2, 42
    %s111 = scalar_lea.vmem %s0, %s110
    %v112 = vld [vmem:[%s111] sm:%s4]
    %s113 = scalar_lea.vmem [#allocation0], 336
    %114 = vst [vmem:[%s113] sm:%s4] %v112
    %s115 = smul.addr 2, 41
    %s116 = scalar_lea.vmem %s0, %s115
    %v117 = vld [vmem:[%s116] sm:%s4]
    %s118 = scalar_lea.vmem [#allocation0], 328
    %119 = vst [vmem:[%s118] sm:%s4] %v117
    %s120 = smul.addr 2, 40
    %s121 = scalar_lea.vmem %s0, %s120
    %v122 = vld [vmem:[%s121] sm:%s4]
    %s123 = scalar_lea.vmem [#allocation0], 320
    %124 = vst [vmem:[%s123] sm:%s4] %v122
    %s125 = smul.addr 2, 39
    %s126 = scalar_lea.vmem %s0, %s125
    %v127 = vld [vmem:[%s126] sm:%s4]
    %s128 = scalar_lea.vmem [#allocation0], 312
    %129 = vst [vmem:[%s128] sm:%s4] %v127
    %s130 = smul.addr 2, 38
    %s131 = scalar_lea.vmem %s0, %s130
    %v132 = vld [vmem:[%s131] sm:%s4]
    %s133 = scalar_lea.vmem [#allocation0], 304
    %134 = vst [vmem:[%s133] sm:%s4] %v132
    %s135 = smul.addr 2, 37
    %s136 = scalar_lea.vmem %s0, %s135
    %v137 = vld [vmem:[%s136] sm:%s4]
    %s138 = scalar_lea.vmem [#allocation0], 296
    %139 = vst [vmem:[%s138] sm:%s4] %v137
    %s140 = smul.addr 2, 36
    %s141 = scalar_lea.vmem %s0, %s140
    %v142 = vld [vmem:[%s141] sm:%s4]
    %s143 = scalar_lea.vmem [#allocation0], 288
    %144 = vst [vmem:[%s143] sm:%s4] %v142
    %s145 = smul.addr 2, 35
    %s146 = scalar_lea.vmem %s0, %s145
    %v147 = vld [vmem:[%s146] sm:%s4]
    %s148 = scalar_lea.vmem [#allocation0], 280
    %149 = vst [vmem:[%s148] sm:%s4] %v147
    %s150 = smul.addr 2, 34
    %s151 = scalar_lea.vmem %s0, %s150
    %v152 = vld [vmem:[%s151] sm:%s4]
    %s153 = scalar_lea.vmem [#allocation0], 272
    %154 = vst [vmem:[%s153] sm:%s4] %v152
    %s155 = smul.addr 2, 33
    %s156 = scalar_lea.vmem %s0, %s155
    %v157 = vld [vmem:[%s156] sm:%s4]
    %s158 = scalar_lea.vmem [#allocation0], 264
    %159 = vst [vmem:[%s158] sm:%s4] %v157
    %s160 = smul.addr 2, 32
    %s161 = scalar_lea.vmem %s0, %s160
    %v162 = vld [vmem:[%s161] sm:%s4]
    %s163 = scalar_lea.vmem [#allocation0], 256
    %164 = vst [vmem:[%s163] sm:%s4] %v162
    %s165 = smul.addr 2, 31
    %s166 = scalar_lea.vmem %s0, %s165
    %v167 = vld [vmem:[%s166] sm:%s4]
    %s168 = scalar_lea.vmem [#allocation0], 248
    %169 = vst [vmem:[%s168] sm:%s4] %v167
    %s170 = smul.addr 2, 30
    %s171 = scalar_lea.vmem %s0, %s170
    %v172 = vld [vmem:[%s171] sm:%s4]
    %s173 = scalar_lea.vmem [#allocation0], 240
    %174 = vst [vmem:[%s173] sm:%s4] %v172
    %s175 = smul.addr 2, 29
    %s176 = scalar_lea.vmem %s0, %s175
    %v177 = vld [vmem:[%s176] sm:%s4]
    %s178 = scalar_lea.vmem [#allocation0], 232
    %179 = vst [vmem:[%s178] sm:%s4] %v177
    %s180 = smul.addr 2, 28
    %s181 = scalar_lea.vmem %s0, %s180
    %v182 = vld [vmem:[%s181] sm:%s4]
    %s183 = scalar_lea.vmem [#allocation0], 224
    %184 = vst [vmem:[%s183] sm:%s4] %v182
    %s185 = smul.addr 2, 27
    %s186 = scalar_lea.vmem %s0, %s185
    %v187 = vld [vmem:[%s186] sm:%s4]
    %s188 = scalar_lea.vmem [#allocation0], 216
    %189 = vst [vmem:[%s188] sm:%s4] %v187
    %s190 = smul.addr 2, 26
    %s191 = scalar_lea.vmem %s0, %s190
    %v192 = vld [vmem:[%s191] sm:%s4]
    %s193 = scalar_lea.vmem [#allocation0], 208
    %194 = vst [vmem:[%s193] sm:%s4] %v192
    %s195 = smul.addr 2, 25
    %s196 = scalar_lea.vmem %s0, %s195
    %v197 = vld [vmem:[%s196] sm:%s4]
    %s198 = scalar_lea.vmem [#allocation0], 200
    %199 = vst [vmem:[%s198] sm:%s4] %v197
    %s200 = smul.addr 2, 24
    %s201 = scalar_lea.vmem %s0, %s200
    %v202 = vld [vmem:[%s201] sm:%s4]
    %s203 = scalar_lea.vmem [#allocation0], 192
    %204 = vst [vmem:[%s203] sm:%s4] %v202
    %s205 = smul.addr 2, 23
    %s206 = scalar_lea.vmem %s0, %s205
    %v207 = vld [vmem:[%s206] sm:%s4]
    %s208 = scalar_lea.vmem [#allocation0], 184
    %209 = vst [vmem:[%s208] sm:%s4] %v207
    %s210 = smul.addr 2, 22
    %s211 = scalar_lea.vmem %s0, %s210
    %v212 = vld [vmem:[%s211] sm:%s4]
    %s213 = scalar_lea.vmem [#allocation0], 176
    %214 = vst [vmem:[%s213] sm:%s4] %v212
    %s215 = smul.addr 2, 21
    %s216 = scalar_lea.vmem %s0, %s215
    %v217 = vld [vmem:[%s216] sm:%s4]
    %s218 = scalar_lea.vmem [#allocation0], 168
    %219 = vst [vmem:[%s218] sm:%s4] %v217
    %s220 = smul.addr 2, 20
    %s221 = scalar_lea.vmem %s0, %s220
    %v222 = vld [vmem:[%s221] sm:%s4]
    %s223 = scalar_lea.vmem [#allocation0], 160
    %224 = vst [vmem:[%s223] sm:%s4] %v222
    %s225 = smul.addr 2, 19
    %s226 = scalar_lea.vmem %s0, %s225
    %v227 = vld [vmem:[%s226] sm:%s4]
    %s228 = scalar_lea.vmem [#allocation0], 152
    %229 = vst [vmem:[%s228] sm:%s4] %v227
    %s230 = smul.addr 2, 18
    %s231 = scalar_lea.vmem %s0, %s230
    %v232 = vld [vmem:[%s231] sm:%s4]
    %s233 = scalar_lea.vmem [#allocation0], 144
    %234 = vst [vmem:[%s233] sm:%s4] %v232
    %s235 = smul.addr 2, 17
    %s236 = scalar_lea.vmem %s0, %s235
    %v237 = vld [vmem:[%s236] sm:%s4]
    %s238 = scalar_lea.vmem [#allocation0], 136
    %239 = vst [vmem:[%s238] sm:%s4] %v237
    %s240 = smul.addr 2, 16
    %s241 = scalar_lea.vmem %s0, %s240
    %v242 = vld [vmem:[%s241] sm:%s4]
    %s243 = scalar_lea.vmem [#allocation0], 128
    %244 = vst [vmem:[%s243] sm:%s4] %v242
    %s245 = smul.addr 2, 15
    %s246 = scalar_lea.vmem %s0, %s245
    %v247 = vld [vmem:[%s246] sm:%s4]
    %s248 = scalar_lea.vmem [#allocation0], 120
    %249 = vst [vmem:[%s248] sm:%s4] %v247
    %s250 = smul.addr 2, 14
    %s251 = scalar_lea.vmem %s0, %s250
    %v252 = vld [vmem:[%s251] sm:%s4]
    %s253 = scalar_lea.vmem [#allocation0], 112
    %254 = vst [vmem:[%s253] sm:%s4] %v252
    %s255 = smul.addr 2, 13
    %s256 = scalar_lea.vmem %s0, %s255
    %v257 = vld [vmem:[%s256] sm:%s4]
    %s258 = scalar_lea.vmem [#allocation0], 104
    %259 = vst [vmem:[%s258] sm:%s4] %v257
    %s260 = smul.addr 2, 12
    %s261 = scalar_lea.vmem %s0, %s260
    %v262 = vld [vmem:[%s261] sm:%s4]
    %s263 = scalar_lea.vmem [#allocation0], 96
    %264 = vst [vmem:[%s263] sm:%s4] %v262
    %s265 = smul.addr 2, 11
    %s266 = scalar_lea.vmem %s0, %s265
    %v267 = vld [vmem:[%s266] sm:%s4]
    %s268 = scalar_lea.vmem [#allocation0], 88
    %269 = vst [vmem:[%s268] sm:%s4] %v267
    %s270 = smul.addr 2, 10
    %s271 = scalar_lea.vmem %s0, %s270
    %v272 = vld [vmem:[%s271] sm:%s4]
    %s273 = scalar_lea.vmem [#allocation0], 80
    %274 = vst [vmem:[%s273] sm:%s4] %v272
    %s275 = smul.addr 2, 9
    %s276 = scalar_lea.vmem %s0, %s275
    %v277 = vld [vmem:[%s276] sm:%s4]
    %s278 = scalar_lea.vmem [#allocation0], 72
    %279 = vst [vmem:[%s278] sm:%s4] %v277
    %s280 = smul.addr 2, 8
    %s281 = scalar_lea.vmem %s0, %s280
    %v282 = vld [vmem:[%s281] sm:%s4]
    %s283 = scalar_lea.vmem [#allocation0], 64
    %284 = vst [vmem:[%s283] sm:%s4] %v282
    %s285 = smul.addr 2, 7
    %s286 = scalar_lea.vmem %s0, %s285
    %v287 = vld [vmem:[%s286] sm:%s4]
    %s288 = scalar_lea.vmem [#allocation0], 56
    %289 = vst [vmem:[%s288] sm:%s4] %v287
    %s290 = smul.addr 2, 6
    %s291 = scalar_lea.vmem %s0, %s290
    %v292 = vld [vmem:[%s291] sm:%s4]
    %s293 = scalar_lea.vmem [#allocation0], 48
    %294 = vst [vmem:[%s293] sm:%s4] %v292
    %s295 = smul.addr 2, 5
    %s296 = scalar_lea.vmem %s0, %s295
    %v297 = vld [vmem:[%s296] sm:%s4]
    %s298 = scalar_lea.vmem [#allocation0], 40
    %299 = vst [vmem:[%s298] sm:%s4] %v297
    %s300 = smul.addr 2, 4
    %s301 = scalar_lea.vmem %s0, %s300
    %v302 = vld [vmem:[%s301] sm:%s4]
    %s303 = scalar_lea.vmem [#allocation0], 32
    %304 = vst [vmem:[%s303] sm:%s4] %v302
    %s305 = smul.addr 2, 3
    %s306 = scalar_lea.vmem %s0, %s305
    %v307 = vld [vmem:[%s306] sm:%s4]
    %s308 = scalar_lea.vmem [#allocation0], 24
    %309 = vst [vmem:[%s308] sm:%s4] %v307
    %s310 = smul.addr 2, 2
    %s311 = scalar_lea.vmem %s0, %s310
    %v312 = vld [vmem:[%s311] sm:%s4]
    %s313 = scalar_lea.vmem [#allocation0], 16
    %314 = vst [vmem:[%s313] sm:%s4] %v312
    %s315 = scalar_lea.vmem %s0, 2
    %v316 = vld [vmem:[%s315] sm:%s4]
    %s317 = scalar_lea.vmem [#allocation0], 8
    %318 = vst [vmem:[%s317] sm:%s4] %v316
    %v319 = vld [vmem:[%s0] sm:%s4]
    %320 = vst [vmem:[#allocation0] sm:%s4] %v319
    %v321 = vld [vmem:[#allocation0] ss:$8 sm:$0xf]
    %v322 = vld [vmem:[#allocation0] ss:$8 sm:$0xf0]
    %vm323 = vcmask 1047556
    %v324 = vsel %vm323, %v322, %v321
    %vm325 = vcmask 64512
    %326 = vst.msk [vmem:[%s1] sm:$0xff] %vm325, %v324
    %s327 = scalar_lea.vmem [#allocation0], 64
    %v328 = vld [vmem:[%s327] ss:$8 sm:$0xf]
    %s329 = scalar_lea.vmem [#allocation0], 64
    %v330 = vld [vmem:[%s329] ss:$8 sm:$0xf0]
    %vm331 = vcmask 1047556
    %v332 = vsel %vm331, %v330, %v328
    %vm333 = vcmask 64512
    %s334 = scalar_lea.vmem %s1, 8
    %335 = vst.msk [vmem:[%s334] sm:$0xff] %vm333, %v332
    %s336 = scalar_lea.vmem [#allocation0], 128
    %v337 = vld [vmem:[%s336] ss:$8 sm:$0xf]
    %s338 = scalar_lea.vmem [#allocation0], 128
    %v339 = vld [vmem:[%s338] ss:$8 sm:$0xf0]
    %vm340 = vcmask 1047556
    %v341 = vsel %vm340, %v339, %v337
    %vm342 = vcmask 64512
    %s343 = scalar_lea.vmem %s1, 16
    %344 = vst.msk [vmem:[%s343] sm:$0xff] %vm342, %v341
    %s345 = scalar_lea.vmem [#allocation0], 192
    %v346 = vld [vmem:[%s345] ss:$8 sm:$0xf]
    %s347 = scalar_lea.vmem [#allocation0], 192
    %v348 = vld [vmem:[%s347] ss:$8 sm:$0xf0]
    %vm349 = vcmask 1047556
    %v350 = vsel %vm349, %v348, %v346
    %vm351 = vcmask 64512
    %s352 = scalar_lea.vmem %s1, 24
    %353 = vst.msk [vmem:[%s352] sm:$0xff] %vm351, %v350
    %s354 = scalar_lea.vmem [#allocation0], 256
    %v355 = vld [vmem:[%s354] ss:$8 sm:$0xf]
    %s356 = scalar_lea.vmem [#allocation0], 256
    %v357 = vld [vmem:[%s356] ss:$8 sm:$0xf0]
    %vm358 = vcmask 1047556
    %v359 = vsel %vm358, %v357, %v355
    %vm360 = vcmask 64512
    %s361 = scalar_lea.vmem %s1, 32
    %362 = vst.msk [vmem:[%s361] sm:$0xff] %vm360, %v359
    %s363 = scalar_lea.vmem [#allocation0], 320
    %v364 = vld [vmem:[%s363] ss:$8 sm:$0xf]
    %s365 = scalar_lea.vmem [#allocation0], 320
    %v366 = vld [vmem:[%s365] ss:$8 sm:$0xf0]
    %vm367 = vcmask 1047556
    %v368 = vsel %vm367, %v366, %v364
    %vm369 = vcmask 64512
    %s370 = scalar_lea.vmem %s1, 40
    %371 = vst.msk [vmem:[%s370] sm:$0xff] %vm369, %v368
    %s372 = scalar_lea.vmem [#allocation0], 384
    %v373 = vld [vmem:[%s372] ss:$8 sm:$0xf]
    %s374 = scalar_lea.vmem [#allocation0], 384
    %v375 = vld [vmem:[%s374] ss:$8 sm:$0xf0]
    %vm376 = vcmask 1047556
    %v377 = vsel %vm376, %v375, %v373
    %vm378 = vcmask 64512
    %s379 = scalar_lea.vmem %s1, 48
    %380 = vst.msk [vmem:[%s379] sm:$0xff] %vm378, %v377
    %s381 = scalar_lea.vmem [#allocation0], 448
    %v382 = vld [vmem:[%s381] ss:$8 sm:$0xf]
    %s383 = scalar_lea.vmem [#allocation0], 448
    %v384 = vld [vmem:[%s383] ss:$8 sm:$0xf0]
    %vm385 = vcmask 1047556
    %v386 = vsel %vm385, %v384, %v382
    %vm387 = vcmask 64512
    %s388 = scalar_lea.vmem %s1, 56
    %389 = vst.msk [vmem:[%s388] sm:$0xff] %vm387, %v386
    %s390 = scalar_lea.vmem [#allocation0], 1
    %v391 = vld [vmem:[%s390] ss:$8 sm:$0xf]
    %s392 = scalar_lea.vmem [#allocation0], 1
    %v393 = vld [vmem:[%s392] ss:$8 sm:$0xf0]
    %vm394 = vcmask 1047556
    %v395 = vsel %vm394, %v393, %v391
    %396 = vrot.lane.b32.xlu0 %v395, 8
    %v397 = vpop.permute.xlu0 %396
    %vm398 = vcmask 130112
    %399 = vst.msk [vmem:[%s1] sm:$0xff] %vm398, %v397
    %s400 = scalar_lea.vmem [#allocation0], 257
    %v401 = vld [vmem:[%s400] ss:$8 sm:$0xf]
    %s402 = scalar_lea.vmem [#allocation0], 257
    %v403 = vld [vmem:[%s402] ss:$8 sm:$0xf0]
    %vm404 = vcmask 1047556
    %v405 = vsel %vm404, %v403, %v401
    %406 = vrot.lane.b32.xlu0 %v405, 8
    %v407 = vpop.permute.xlu0 %406
    %vm408 = vcmask 130112
    %s409 = scalar_lea.vmem %s1, 32
    %410 = vst.msk [vmem:[%s409] sm:$0xff] %vm408, %v407
    %s411 = scalar_lea.vmem [#allocation0], 65
    %v412 = vld [vmem:[%s411] ss:$8 sm:$0xf]
    %s413 = scalar_lea.vmem [#allocation0], 65
    %v414 = vld [vmem:[%s413] ss:$8 sm:$0xf0]
    %vm415 = vcmask 1047556
    %v416 = vsel %vm415, %v414, %v412
    %417 = vrot.lane.b32.xlu0 %v416, 8
    %v418 = vpop.permute.xlu0 %417
    %vm419 = vcmask 130112
    %s420 = scalar_lea.vmem %s1, 8
    %421 = vst.msk [vmem:[%s420] sm:$0xff] %vm419, %v418
    %s422 = scalar_lea.vmem [#allocation0], 321
    %v423 = vld [vmem:[%s422] ss:$8 sm:$0xf]
    %s424 = scalar_lea.vmem [#allocation0], 321
    %v425 = vld [vmem:[%s424] ss:$8 sm:$0xf0]
    %vm426 = vcmask 1047556
    %v427 = vsel %vm426, %v425, %v423
    %428 = vrot.lane.b32.xlu0 %v427, 8
    %v429 = vpop.permute.xlu0 %428
    %vm430 = vcmask 130112
    %s431 = scalar_lea.vmem %s1, 40
    %432 = vst.msk [vmem:[%s431] sm:$0xff] %vm430, %v429
    %s433 = scalar_lea.vmem [#allocation0], 129
    %v434 = vld [vmem:[%s433] ss:$8 sm:$0xf]
    %s435 = scalar_lea.vmem [#allocation0], 129
    %v436 = vld [vmem:[%s435] ss:$8 sm:$0xf0]
    %vm437 = vcmask 1047556
    %v438 = vsel %vm437, %v436, %v434
    %439 = vrot.lane.b32.xlu0 %v438, 8
    %v440 = vpop.permute.xlu0 %439
    %vm441 = vcmask 130112
    %s442 = scalar_lea.vmem %s1, 16
    %443 = vst.msk [vmem:[%s442] sm:$0xff] %vm441, %v440
    %s444 = scalar_lea.vmem [#allocation0], 385
    %v445 = vld [vmem:[%s444] ss:$8 sm:$0xf]
    %s446 = scalar_lea.vmem [#allocation0], 385
    %v447 = vld [vmem:[%s446] ss:$8 sm:$0xf0]
    %vm448 = vcmask 1047556
    %v449 = vsel %vm448, %v447, %v445
    %450 = vrot.lane.b32.xlu0 %v449, 8
    %v451 = vpop.permute.xlu0 %450
    %vm452 = vcmask 130112
    %s453 = scalar_lea.vmem %s1, 48
    %454 = vst.msk [vmem:[%s453] sm:$0xff] %vm452, %v451
    %s455 = scalar_lea.vmem [#allocation0], 193
    %v456 = vld [vmem:[%s455] ss:$8 sm:$0xf]
    %s457 = scalar_lea.vmem [#allocation0], 193
    %v458 = vld [vmem:[%s457] ss:$8 sm:$0xf0]
    %vm459 = vcmask 1047556
    %v460 = vsel %vm459, %v458, %v456
    %461 = vrot.lane.b32.xlu0 %v460, 8
    %v462 = vpop.permute.xlu0 %461
    %vm463 = vcmask 130112
    %s464 = scalar_lea.vmem %s1, 24
    %465 = vst.msk [vmem:[%s464] sm:$0xff] %vm463, %v462
    %s466 = scalar_lea.vmem [#allocation0], 449
    %v467 = vld [vmem:[%s466] ss:$8 sm:$0xf]
    %s468 = scalar_lea.vmem [#allocation0], 449
    %v469 = vld [vmem:[%s468] ss:$8 sm:$0xf0]
    %vm470 = vcmask 1047556
    %v471 = vsel %vm470, %v469, %v467
    %472 = vrot.lane.b32.xlu0 %v471, 8
    %v473 = vpop.permute.xlu0 %472
    %vm474 = vcmask 130112
    %s475 = scalar_lea.vmem %s1, 56
    %476 = vst.msk [vmem:[%s475] sm:$0xff] %vm474, %v473

// kernel: t5_story_forward.1
$region0: #{t5_story_forward.1}
  #allocation0 [shape = 'u32[]', space=smem, size = 0x4, offset = 0x4, fixed_abs, tag = 'smem constant byte address 0x4 - core index']
  #allocation1 [shape = 'u32[144,128]{1,0:T(1,128)}', space=vmem, size = 0x12000, scoped, tag = 'internal scratch']
  %s0 = inlined_call_operand.vmem [shape: s32[16,1], index: 0, kind: input, shape index: {}]
  %s1 = inlined_call_operand.vmem [shape: s32[16,1], index: 1, kind: input, shape index: {}]
  %s2 = inlined_call_operand.vmem [shape: f32[4,16,16], index: 2, kind: input, shape index: {}]
  %s3 = inlined_call_operand.vmem [shape: f32[4,16,16], index: 3, kind: input, shape index: {}]
  %s4 = inlined_call_operand.vmem [shape: f32[16,16], index: 4, kind: input, shape index: {}]
  %s5 = inlined_call_operand.vmem [shape: bf16[128,32], index: 5, kind: input, shape index: {}]
  %s6 = inlined_call_operand.vmem [shape: f32[1,32], index: 6, kind: input, shape index: {}]
  %s7 = inlined_call_operand.vmem [shape: bf16[32,96], index: 7, kind: input, shape index: {}]
  %s8 = inlined_call_operand.vmem [shape: bf16[32,32], index: 8, kind: input, shape index: {}]
  %s9 = inlined_call_operand.vmem [shape: f32[1,32], index: 9, kind: input, shape index: {}]
  %s10 = inlined_call_operand.vmem [shape: bf16[32,64], index: 10, kind: input, shape index: {}]
  %s11 = inlined_call_operand.vmem [shape: bf16[64,32], index: 11, kind: input, shape index: {}]
  %s12 = inlined_call_operand.vmem [shape: f32[1,32], index: 12, kind: input, shape index: {}]
  %s13 = inlined_call_operand.vmem [shape: f32[1,32], index: 13, kind: input, shape index: {}]
  %s14 = inlined_call_operand.vmem [shape: bf16[32,96], index: 14, kind: input, shape index: {}]
  %s15 = inlined_call_operand.vmem [shape: bf16[32,32], index: 15, kind: input, shape index: {}]
  %s16 = inlined_call_operand.vmem [shape: f32[1,32], index: 16, kind: input, shape index: {}]
  %s17 = inlined_call_operand.vmem [shape: bf16[32,32], index: 17, kind: input, shape index: {}]
  %s18 = inlined_call_operand.vmem [shape: bf16[32,64], index: 18, kind: input, shape index: {}]
  %s19 = inlined_call_operand.vmem [shape: bf16[32,32], index: 19, kind: input, shape index: {}]
  %s20 = inlined_call_operand.vmem [shape: f32[1,32], index: 20, kind: input, shape index: {}]
  %s21 = inlined_call_operand.vmem [shape: bf16[32,64], index: 21, kind: input, shape index: {}]
  %s22 = inlined_call_operand.vmem [shape: bf16[64,32], index: 22, kind: input, shape index: {}]
  %s23 = inlined_call_operand.vmem [shape: f32[1,32], index: 23, kind: input, shape index: {}]
  %s24 = inlined_call_operand.vmem [shape: bf16[32,128], index: 24, kind: input, shape index: {}]
  %s25 = inlined_call_operand.vmem [shape: f32[1,128], index: 25, kind: input, shape index: {}]
  %s26 = inlined_call_operand.vmem [shape: f32[16,128], index: 26, kind: output, shape index: {0}]
  %s27 = inlined_call_operand.hbm [shape: f32[1,1], index: 27, kind: output, shape index: {1}]
  %28 = xla_tuple %s26, %s27
  %s29 = sld [smem:[#allocation0]]
  $region122: #{t5_story_forward.1} parent=0
    _
  %s31 = ssub.s32 1, %s29
  %s32 = scalar_select 0, %s31, %s29
  $region1: #{t5_story_forward.1} parent=0
    #allocation2 [shape = 'u8[512]{0}', space=vmem, size = 0x400, scoped, tag = 'output window, operand 1, single buffered']
    #allocation3 [shape = 's32[1]{0}', space=sflag, size = 0x4, scoped, tag = 'scoped memory for t5_story_forward.1']
    %33 = vsyncpa [#allocation3], 0
    // Predicated region
    $region2: #{t5_story_forward.1} parent=1 // pred_check
      _
    $region3: #{t5_story_forward.1} parent=1 // pred_check_branch
      %35 = sbr.rel (0) target = $region5
    $region4: #{t5_story_forward.1} parent=1 // pred_region
      _
    $region5: #{t5_story_forward.1} parent=1 // pred_fallthru
      _
    // Predicated region
    $region6: #{t5_story_forward.1} parent=1 // pred_check
      _
    $region7: #{t5_story_forward.1} parent=1 // pred_check_branch
      %37 = sbr.rel (0) target = $region9
    $region8: #{t5_story_forward.1} parent=1 // pred_region
      _
    $region9: #{t5_story_forward.1} parent=1 // pred_fallthru
      _
    // Predicated region
    $region10: #{t5_story_forward.1} parent=1 // pred_check
      _
    $region11: #{t5_story_forward.1} parent=1 // pred_check_branch
      %39 = sbr.rel (0) target = $region13
    $region12: #{t5_story_forward.1} parent=1 // pred_region
      _
    $region13: #{t5_story_forward.1} parent=1 // pred_fallthru
      _
    // Predicated region
    $region14: #{t5_story_forward.1} parent=1 // pred_check
      _
    $region15: #{t5_story_forward.1} parent=1 // pred_check_branch
      %41 = sbr.rel (0) target = $region17
    $region16: #{t5_story_forward.1} parent=1 // pred_region
      _
    $region17: #{t5_story_forward.1} parent=1 // pred_fallthru
      _
    // Predicated region
    $region18: #{t5_story_forward.1} parent=1 // pred_check
      _
    $region19: #{t5_story_forward.1} parent=1 // pred_check_branch
      %43 = sbr.rel (0) target = $region21
    $region20: #{t5_story_forward.1} parent=1 // pred_region
      _
    $region21: #{t5_story_forward.1} parent=1 // pred_fallthru
      _
    // Predicated region
    $region22: #{t5_story_forward.1} parent=1 // pred_check
      _
    $region23: #{t5_story_forward.1} parent=1 // pred_check_branch
      %45 = sbr.rel (0) target = $region25
    $region24: #{t5_story_forward.1} parent=1 // pred_region
      _
    $region25: #{t5_story_forward.1} parent=1 // pred_fallthru
      _
    // Predicated region
    $region26: #{t5_story_forward.1} parent=1 // pred_check
      _
    $region27: #{t5_story_forward.1} parent=1 // pred_check_branch
      %47 = sbr.rel (0) target = $region29
    $region28: #{t5_story_forward.1} parent=1 // pred_region
      _
    $region29: #{t5_story_forward.1} parent=1 // pred_fallthru
      _
    // Predicated region
    $region30: #{t5_story_forward.1} parent=1 // pred_check
      _
    $region31: #{t5_story_forward.1} parent=1 // pred_check_branch
      %49 = sbr.rel (0) target = $region33
    $region32: #{t5_story_forward.1} parent=1 // pred_region
      _
    $region33: #{t5_story_forward.1} parent=1 // pred_fallthru
      _
    // Predicated region
    $region34: #{t5_story_forward.1} parent=1 // pred_check
      _
    $region35: #{t5_story_forward.1} parent=1 // pred_check_branch
      %51 = sbr.rel (0) target = $region37
    $region36: #{t5_story_forward.1} parent=1 // pred_region
      _
    $region37: #{t5_story_forward.1} parent=1 // pred_fallthru
      _
    // Predicated region
    $region38: #{t5_story_forward.1} parent=1 // pred_check
      _
    $region39: #{t5_story_forward.1} parent=1 // pred_check_branch
      %53 = sbr.rel (0) target = $region41
    $region40: #{t5_story_forward.1} parent=1 // pred_region
      _
    $region41: #{t5_story_forward.1} parent=1 // pred_fallthru
      _
    // Predicated region
    $region42: #{t5_story_forward.1} parent=1 // pred_check
      _
    $region43: #{t5_story_forward.1} parent=1 // pred_check_branch
      %55 = sbr.rel (0) target = $region45
    $region44: #{t5_story_forward.1} parent=1 // pred_region
      _
    $region45: #{t5_story_forward.1} parent=1 // pred_fallthru
      _
    // Predicated region
    $region46: #{t5_story_forward.1} parent=1 // pred_check
      _
    $region47: #{t5_story_forward.1} parent=1 // pred_check_branch
      %57 = sbr.rel (0) target = $region49
    $region48: #{t5_story_forward.1} parent=1 // pred_region
      _
    $region49: #{t5_story_forward.1} parent=1 // pred_fallthru
      _
    // Predicated region
    $region50: #{t5_story_forward.1} parent=1 // pred_check
      _
    $region51: #{t5_story_forward.1} parent=1 // pred_check_branch
      %59 = sbr.rel (0) target = $region53
    $region52: #{t5_story_forward.1} parent=1 // pred_region
      _
    $region53: #{t5_story_forward.1} parent=1 // pred_fallthru
      _
    // Predicated region
    $region54: #{t5_story_forward.1} parent=1 // pred_check
      _
    $region55: #{t5_story_forward.1} parent=1 // pred_check_branch
      %61 = sbr.rel (0) target = $region57
    $region56: #{t5_story_forward.1} parent=1 // pred_region
      _
    $region57: #{t5_story_forward.1} parent=1 // pred_fallthru
      _
    // Predicated region
    $region58: #{t5_story_forward.1} parent=1 // pred_check
      _
    $region59: #{t5_story_forward.1} parent=1 // pred_check_branch
      %63 = sbr.rel (0) target = $region61
    $region60: #{t5_story_forward.1} parent=1 // pred_region
      _
    $region61: #{t5_story_forward.1} parent=1 // pred_fallthru
      _
    // Predicated region
    $region62: #{t5_story_forward.1} parent=1 // pred_check
      _
    $region63: #{t5_story_forward.1} parent=1 // pred_check_branch
      %65 = sbr.rel (0) target = $region65
    $region64: #{t5_story_forward.1} parent=1 // pred_region
      _
    $region65: #{t5_story_forward.1} parent=1 // pred_fallthru
      _
    // Predicated region
    $region66: #{t5_story_forward.1} parent=1 // pred_check
      _
    $region67: #{t5_story_forward.1} parent=1 // pred_check_branch
      %67 = sbr.rel (0) target = $region69
    $region68: #{t5_story_forward.1} parent=1 // pred_region
      _
    $region69: #{t5_story_forward.1} parent=1 // pred_fallthru
      _
    // Predicated region
    $region70: #{t5_story_forward.1} parent=1 // pred_check
      _
    $region71: #{t5_story_forward.1} parent=1 // pred_check_branch
      %69 = sbr.rel (0) target = $region73
    $region72: #{t5_story_forward.1} parent=1 // pred_region
      _
    $region73: #{t5_story_forward.1} parent=1 // pred_fallthru
      _
    // Predicated region
    $region74: #{t5_story_forward.1} parent=1 // pred_check
      _
    $region75: #{t5_story_forward.1} parent=1 // pred_check_branch
      %71 = sbr.rel (0) target = $region77
    $region76: #{t5_story_forward.1} parent=1 // pred_region
      _
    $region77: #{t5_story_forward.1} parent=1 // pred_fallthru
      _
    // Predicated region
    $region78: #{t5_story_forward.1} parent=1 // pred_check
      _
    $region79: #{t5_story_forward.1} parent=1 // pred_check_branch
      %73 = sbr.rel (0) target = $region81
    $region80: #{t5_story_forward.1} parent=1 // pred_region
      _
    $region81: #{t5_story_forward.1} parent=1 // pred_fallthru
      _
    // Predicated region
    $region82: #{t5_story_forward.1} parent=1 // pred_check
      _
    $region83: #{t5_story_forward.1} parent=1 // pred_check_branch
      %75 = sbr.rel (0) target = $region85
    $region84: #{t5_story_forward.1} parent=1 // pred_region
      _
    $region85: #{t5_story_forward.1} parent=1 // pred_fallthru
      _
    // Predicated region
    $region86: #{t5_story_forward.1} parent=1 // pred_check
      _
    $region87: #{t5_story_forward.1} parent=1 // pred_check_branch
      %77 = sbr.rel (0) target = $region89
    $region88: #{t5_story_forward.1} parent=1 // pred_region
      _
    $region89: #{t5_story_forward.1} parent=1 // pred_fallthru
      _
    // Predicated region
    $region90: #{t5_story_forward.1} parent=1 // pred_check
      _
    $region91: #{t5_story_forward.1} parent=1 // pred_check_branch
      %79 = sbr.rel (0) target = $region93
    $region92: #{t5_story_forward.1} parent=1 // pred_region
      _
    $region93: #{t5_story_forward.1} parent=1 // pred_fallthru
      _
    // Predicated region
    $region94: #{t5_story_forward.1} parent=1 // pred_check
      _
    $region95: #{t5_story_forward.1} parent=1 // pred_check_branch
      %81 = sbr.rel (0) target = $region97
    $region96: #{t5_story_forward.1} parent=1 // pred_region
      _
    $region97: #{t5_story_forward.1} parent=1 // pred_fallthru
      _
    // Predicated region
    $region98: #{t5_story_forward.1} parent=1 // pred_check
      _
    $region99: #{t5_story_forward.1} parent=1 // pred_check_branch
      %83 = sbr.rel (0) target = $region101
    $region100: #{t5_story_forward.1} parent=1 // pred_region
      _
    $region101: #{t5_story_forward.1} parent=1 // pred_fallthru
      _
    // Predicated region
    $region102: #{t5_story_forward.1} parent=1 // pred_check
      _
    $region103: #{t5_story_forward.1} parent=1 // pred_check_branch
      %85 = sbr.rel (0) target = $region105
    $region104: #{t5_story_forward.1} parent=1 // pred_region
      _
    $region105: #{t5_story_forward.1} parent=1 // pred_fallthru
      _
    %v87 = vld [vmem:[%s5] sm:$0xf]
    %v88 = vld [vmem:[%s5 + $0x4] sm:$0xf]
    %v89 = vld [vmem:[%s5 + $0x8] sm:$0xf]
    %v90 = vld [vmem:[%s5 + $0xc] sm:$0xf]
    %v91 = vld [vmem:[%s5 + $0x10] sm:$0xf]
    %v92 = vld [vmem:[%s5 + $0x14] sm:$0xf]
    %v93 = vld [vmem:[%s5 + $0x18] sm:$0xf]
    %v94 = vld [vmem:[%s5 + $0x1c] sm:$0xf]
    %v95 = vld [vmem:[%s5 + $0x20] sm:$0xf]
    %v96 = vld [vmem:[%s5 + $0x24] sm:$0xf]
    %v97 = vld [vmem:[%s5 + $0x28] sm:$0xf]
    %v98 = vld [vmem:[%s5 + $0x2c] sm:$0xf]
    %v99 = vld [vmem:[%s5 + $0x30] sm:$0xf]
    %v100 = vld [vmem:[%s5 + $0x34] sm:$0xf]
    %v101 = vld [vmem:[%s5 + $0x38] sm:$0xf]
    %v102 = vld [vmem:[%s5 + $0x3c] sm:$0xf]
    %v103 = vld [vmem:[%s0] sm:$0xff]
    %v104 = vld [vmem:[%s0 + $0x8] sm:$0xff]
    %v105 = vlaneseq
    %v106 = vand.u32 %v105, 127
    %107 = vset.pattern.permute.xlu0 0
    %108 = vperm.xlu0 %107, %v103
    %v109 = vpop.permute.xlu0 %108
    %110 = vset.pattern.permute.xlu0 0
    %111 = vperm.xlu0 %110, %v104
    %v112 = vpop.permute.xlu0 %111
    %vm113 = vcmp.eq.s32.totalorder %v106, %v109
    %vm114 = vcmp.eq.s32.totalorder %v106, %v112
    %v115 = vsel %vm113, 1, 0
    %v116 = vsel %vm114, 1, 0
    %v117 = vcvt.s32.f32 %v115
    %v118 = vcvt.s32.f32 %v116
    %v119 = vpack.c.bf16 %v118, %v117
    %v136 = vunpack.c.l.b16 %v87
    %v137 = vunpack.c.l.b16 %v88
    %v138 = vunpack.c.l.b16 %v89
    %v139 = vunpack.c.l.b16 %v90
    %v140 = vunpack.c.l.b16 %v91
    %v141 = vunpack.c.l.b16 %v92
    %v142 = vunpack.c.l.b16 %v93
    %v143 = vunpack.c.l.b16 %v94
    %v144 = vunpack.c.l.b16 %v95
    %v145 = vunpack.c.l.b16 %v96
    %v146 = vunpack.c.l.b16 %v97
    %v147 = vunpack.c.l.b16 %v98
    %v148 = vunpack.c.l.b16 %v99
    %v149 = vunpack.c.l.b16 %v100
    %v150 = vunpack.c.l.b16 %v101
    %v151 = vunpack.c.l.b16 %v102
    %v152 = vpack.c.b16 %v137, %v136
    %v153 = vpack.c.b16 %v139, %v138
    %v154 = vpack.c.b16 %v141, %v140
    %v155 = vpack.c.b16 %v143, %v142
    %v156 = vpack.c.b16 %v145, %v144
    %v157 = vpack.c.b16 %v147, %v146
    %v158 = vpack.c.b16 %v149, %v148
    %v159 = vpack.c.b16 %v151, %v150
    %168 = vmatprep.subr.bf16.mxu0 0
    %169 = vmatpush1.bf16.msra.mxu0 %v159
    %170 = vmatprep.subr.bf16.mxu0 0
    %171 = vmatpush1.bf16.msra.mxu0 %v158
    %172 = vmatprep.subr.bf16.mxu0 0
    %173 = vmatpush1.bf16.msra.mxu0 %v157
    %174 = vmatprep.subr.bf16.mxu0 0
    %175 = vmatpush1.bf16.msra.mxu0 %v156
    %176 = vmatprep.subr.bf16.mxu0 0
    %177 = vmatpush1.bf16.msra.mxu0 %v155
    %178 = vmatprep.subr.bf16.mxu0 0
    %179 = vmatpush1.bf16.msra.mxu0 %v154
    %180 = vmatprep.subr.bf16.mxu0 0
    %181 = vmatpush1.bf16.msra.mxu0 %v153
    %182 = vmatprep.subr.bf16.mxu0 0
    %183 = vmatpush1.bf16.msra.mxu0 %v152
    %184 = vmatprep.subr.bf16.mxu0 0
    %185 = vmatpush2.bf16.msra.mxu0 0
    %186 = vmatprep.subr.bf16.mxu0 0
    %187 = vmatpush2.bf16.msra.mxu0 0
    %188 = vmatprep.subr.bf16.mxu0 0
    %189 = vmatpush2.bf16.msra.mxu0 0
    %190 = vmatprep.subr.bf16.mxu0 0
    %191 = vmatpush2.bf16.msra.mxu0 0
    %192 = vmatprep.subr.bf16.mxu0 0
    %193 = vmatpush2.bf16.msra.mxu0 0
    %194 = vmatprep.subr.bf16.mxu0 0
    %195 = vmatpush2.bf16.msra.mxu0 0
    %196 = vmatprep.subr.bf16.mxu0 0
    %197 = vmatpush2.bf16.msra.mxu0 0
    %198 = vmatprep.subr.bf16.mxu0 0
    %199 = vmatpush2.bf16.msra.mxu0 0
    %200 = vmatprep.mubr.bf16.mxu0 0
    %201 = vmatmul.mubr.bf16.gmra.mxu0 %v119
    %v202 = vpop.f32.mrf.mxu0
    %v203 = vadd.f32 0.0, %v202
    %v204 = vpop.f32.mrf.mxu0
    %v205 = vpop.f32.mrf.mxu0
    %v206 = vadd.f32 0.0, %v205
    %v207 = vpop.f32.mrf.mxu0
    %208 = vdwg.mxu0
    %v209 = vld [vmem:[%s6] sm:$0x1]
    %v210 = vmul.f32 %v203, %v203
    %v211 = vmul.f32 %v206, %v206
    %vm212 = vcmask 261120
    %v213 = vsel %vm212, %v210, 0.0
    %214 = vadd.xlane.f32.xlu0 %v213
    %v215 = vpop.xlane.xlu0 %214
    %v216 = vsel %vm212, %v211, 0.0
    %217 = vadd.xlane.f32.xlu0 %v216
    %v218 = vpop.xlane.xlu0 %217
    %v219 = vrcp.pop 32.0
    %v220 = vmul.f32 %v215, %v219
    %v221 = vmul.f32 %v218, %v219
    %v222 = vadd.f32 %v220, 1e-06
    %v223 = vadd.f32 %v221, 1e-06
    %v224 = vrsqrt.pop %v222
    %v225 = vrsqrt.pop %v223
    %v226 = vmul.f32 %v203, %v224
    %v227 = vmul.f32 %v206, %v225
    %v229 = vlaneseq
    %v230 = vshrl.u32 %v229, 7
    %v231 = vsub.s32 0, %v230
    %v232 = vrot.slane %v209, %v231
    %v234 = vmul.f32 %v226, %v232
    %v235 = vmul.f32 %v227, %v232
    %v236 = vpack.c.bf16 %v235, %v234
    %v237 = vld [vmem:[%s7] sm:$0xf]
    %v238 = vld [vmem:[%s7 + $0x4] sm:$0xf]
    %v239 = vld [vmem:[%s7 + $0x8] sm:$0xf]
    %v240 = vld [vmem:[%s7 + $0xc] sm:$0xf]
    %v245 = vunpack.c.l.b16 %v237
    %v246 = vunpack.c.l.b16 %v238
    %v247 = vunpack.c.l.b16 %v239
    %v248 = vunpack.c.l.b16 %v240
    %v249 = vpack.c.b16 %v246, %v245
    %v250 = vpack.c.b16 %v248, %v247
    %v254 = vsel %vm212, %v236, 0
    %256 = vmatprep.subr.bf16.mxu0 0
    %257 = vmatpush1.bf16.msra.mxu0 0
    %258 = vmatprep.subr.bf16.mxu0 0
    %259 = vmatpush1.bf16.msra.mxu0 0
    %260 = vmatprep.subr.bf16.mxu0 0
    %261 = vmatpush1.bf16.msra.mxu0 0
    %262 = vmatprep.subr.bf16.mxu0 0
    %263 = vmatpush1.bf16.msra.mxu0 0
    %264 = vmatprep.subr.bf16.mxu0 0
    %265 = vmatpush1.bf16.msra.mxu0 0
    %266 = vmatprep.subr.bf16.mxu0 0
    %267 = vmatpush1.bf16.msra.mxu0 0
    %268 = vmatprep.subr.bf16.mxu0 0
    %269 = vmatpush1.bf16.msra.mxu0 %v250
    %270 = vmatprep.subr.bf16.mxu0 0
    %271 = vmatpush1.bf16.msra.mxu0 %v249
    %272 = vmatprep.subr.bf16.mxu0 0
    %273 = vmatpush2.bf16.msra.mxu0 0
    %274 = vmatprep.subr.bf16.mxu0 0
    %275 = vmatpush2.bf16.msra.mxu0 0
    %276 = vmatprep.subr.bf16.mxu0 0
    %277 = vmatpush2.bf16.msra.mxu0 0
    %278 = vmatprep.subr.bf16.mxu0 0
    %279 = vmatpush2.bf16.msra.mxu0 0
    %280 = vmatprep.subr.bf16.mxu0 0
    %281 = vmatpush2.bf16.msra.mxu0 0
    %282 = vmatprep.subr.bf16.mxu0 0
    %283 = vmatpush2.bf16.msra.mxu0 0
    %284 = vmatprep.subr.bf16.mxu0 0
    %285 = vmatpush2.bf16.msra.mxu0 0
    %286 = vmatprep.subr.bf16.mxu0 0
    %287 = vmatpush2.bf16.msra.mxu0 0
    %288 = vmatprep.mubr.bf16.mxu0 0
    %289 = vmatmul.mubr.bf16.gmra.mxu0 %v254
    %v290 = vpop.f32.mrf.mxu0
    %v291 = vadd.f32 0.0, %v290
    %v292 = vpop.f32.mrf.mxu0
    %v293 = vpop.f32.mrf.mxu0
    %v294 = vadd.f32 0.0, %v293
    %v295 = vpop.f32.mrf.mxu0
    %296 = vdwg.mxu0
    %v297 = vld [vmem:[%s8] sm:$0xf]
    %v298 = vld [vmem:[%s8 + $0x4] sm:$0xf]
    %v299 = vld [vmem:[%s8 + $0x8] sm:$0xf]
    %v300 = vld [vmem:[%s8 + $0xc] sm:$0xf]
    %v301 = vld [vmem:[%s2] sm:$0xff]
    %v302 = vld [vmem:[%s2 + $0x8] sm:$0xff]
    %v303 = vld [vmem:[%s2 + $0x10] sm:$0xff]
    %v304 = vld [vmem:[%s2 + $0x18] sm:$0xff]
    %v305 = vld [vmem:[%s2 + $0x20] sm:$0xff]
    %v306 = vld [vmem:[%s2 + $0x28] sm:$0xff]
    %v307 = vld [vmem:[%s2 + $0x30] sm:$0xff]
    %v308 = vld [vmem:[%s2 + $0x38] sm:$0xff]
    %311 = vrot.lane.b32.xlu0 %v291, 96
    %v312 = vpop.permute.xlu0 %311
    %313 = vrot.lane.b32.xlu0 %v294, 96
    %v314 = vpop.permute.xlu0 %313
    %317 = vxpose.xlu0.b32.start [1/16] %v312, 128
    %318 = vxpose.xlu0.b32.cont [2/16] %v314, 128
    %319 = vxpose.xlu0.b32.cont [3/16] 0.0, 128
    %320 = vxpose.xlu0.b32.cont [4/16] 0.0, 128
    %321 = vxpose.xlu0.b32.cont [5/16] 0.0, 128
    %322 = vxpose.xlu0.b32.cont [6/16] 0.0, 128
    %323 = vxpose.xlu0.b32.cont [7/16] 0.0, 128
    %324 = vxpose.xlu0.b32.cont [8/16] 0.0, 128
    %325 = vxpose.xlu0.b32.cont [9/16] 0.0, 128
    %326 = vxpose.xlu0.b32.cont [10/16] 0.0, 128
    %327 = vxpose.xlu0.b32.cont [11/16] 0.0, 128
    %328 = vxpose.xlu0.b32.cont [12/16] 0.0, 128
    %329 = vxpose.xlu0.b32.cont [13/16] 0.0, 128
    %330 = vxpose.xlu0.b32.cont [14/16] 0.0, 128
    %331 = vxpose.xlu0.b32.cont [15/16] 0.0, 128
    %332 = vxpose.xlu0.b32.end [16/16] 0.0, 128
    %v333 = vpop.trf.xlu0
    %v334 = vpop.trf.xlu0
    %v335 = vpop.trf.xlu0
    %v336 = vpop.trf.xlu0
    %v337 = vpop.trf.xlu0
    %v338 = vpop.trf.xlu0
    %v339 = vpop.trf.xlu0
    %v340 = vpop.trf.xlu0
    %v341 = vpop.trf.xlu0
    %v342 = vpop.trf.xlu0
    %v343 = vpop.trf.xlu0
    %v344 = vpop.trf.xlu0
    %v345 = vpop.trf.xlu0
    %v346 = vpop.trf.xlu0
    %v347 = vpop.trf.xlu0
    %v348 = vpop.trf.xlu0
    %v349 = vpack.c.bf16 %v334, %v333
    %v350 = vpack.c.bf16 %v336, %v335
    %v351 = vpack.c.bf16 %v294, %v291
    %vm352 = vcmask 64512
    %v354 = vsel %vm352, %v351, 0
    %vm356 = vcmask 1043456
    %v358 = vsel %vm356, %v349, 0
    %360 = vmatprep.subr.bf16.mxu0 0
    %361 = vmatpush1.bf16.msra.mxu0 0
    %362 = vmatprep.subr.bf16.mxu0 0
    %363 = vmatpush1.bf16.msra.mxu0 0
    %364 = vmatprep.subr.bf16.mxu0 0
    %365 = vmatpush1.bf16.msra.mxu0 0
    %366 = vmatprep.subr.bf16.mxu0 0
    %367 = vmatpush1.bf16.msra.mxu0 0
    %368 = vmatprep.subr.bf16.mxu0 0
    %369 = vmatpush1.bf16.msra.mxu0 0
    %370 = vmatprep.subr.bf16.mxu0 0
    %371 = vmatpush1.bf16.msra.mxu0 0
    %372 = vmatprep.subr.bf16.mxu0 0
    %373 = vmatpush1.bf16.msra.mxu0 0
    %374 = vmatprep.subr.bf16.mxu0 0
    %375 = vmatpush1.bf16.msra.mxu0 %v358
    %376 = vmatprep.subr.bf16.mxu0 0
    %377 = vmatpush2.bf16.msra.mxu0 0
    %378 = vmatprep.subr.bf16.mxu0 0
    %379 = vmatpush2.bf16.msra.mxu0 0
    %380 = vmatprep.subr.bf16.mxu0 0
    %381 = vmatpush2.bf16.msra.mxu0 0
    %382 = vmatprep.subr.bf16.mxu0 0
    %383 = vmatpush2.bf16.msra.mxu0 0
    %384 = vmatprep.subr.bf16.mxu0 0
    %385 = vmatpush2.bf16.msra.mxu0 0
    %386 = vmatprep.subr.bf16.mxu0 0
    %387 = vmatpush2.bf16.msra.mxu0 0
    %388 = vmatprep.subr.bf16.mxu0 0
    %389 = vmatpush2.bf16.msra.mxu0 0
    %390 = vmatprep.subr.bf16.mxu0 0
    %391 = vmatpush2.bf16.msra.mxu0 0
    %392 = vmatprep.mubr.bf16.mxu0 0
    %393 = vmatmul.mubr.bf16.gmra.mxu0 %v354
    %v394 = vpop.f32.mrf.mxu0
    %v395 = vadd.f32 %v301, %v394
    %v396 = vpop.f32.mrf.mxu0
    %v397 = vpop.f32.mrf.mxu0
    %v398 = vadd.f32 %v302, %v397
    %v399 = vpop.f32.mrf.mxu0
    %400 = vdwg.mxu0
    %vm401 = vcmask 130048
    %v402 = vsel %vm401, %v395, -inf
    %403 = vmax.xlane.f32.xlu0 %v402
    %v404 = vpop.xlane.xlu0 %403
    %v405 = vsel %vm401, %v398, -inf
    %406 = vmax.xlane.f32.xlu0 %v405
    %v407 = vpop.xlane.xlu0 %406
    %v408 = vsub.f32 %v395, %v404
    %v409 = vsub.f32 %v398, %v407
    %v410 = vmul.f32 %v408, 1.442695
    %v411 = vpow.pop %v410
    %v412 = vmul.f32 %v409, 1.442695
    %v413 = vpow.pop %v412
    %v414 = vsel %vm401, %v411, 0.0
    %415 = vadd.xlane.f32.xlu0 %v414
    %v416 = vpop.xlane.xlu0 %415
    %v417 = vsel %vm401, %v413, 0.0
    %418 = vadd.xlane.f32.xlu0 %v417
    %v419 = vpop.xlane.xlu0 %418
    %v420 = vpack.c.bf16 %v413, %v411
    %422 = vrot.lane.b32.xlu0 %v351, 64
    %v423 = vpop.permute.xlu0 %422
    %v426 = vsel %vm401, %v420, 0
    %428 = vmatprep.subr.bf16.mxu0 0
    %429 = vmatpush1.bf16.msra.mxu0 0
    %430 = vmatprep.subr.bf16.mxu0 0
    %431 = vmatpush1.bf16.msra.mxu0 0
    %432 = vmatprep.subr.bf16.mxu0 0
    %433 = vmatpush1.bf16.msra.mxu0 0
    %434 = vmatprep.subr.bf16.mxu0 0
    %435 = vmatpush1.bf16.msra.mxu0 0
    %436 = vmatprep.subr.bf16.mxu0 0
    %437 = vmatpush1.bf16.msra.mxu0 0
    %438 = vmatprep.subr.bf16.mxu0 0
    %439 = vmatpush1.bf16.msra.mxu0 0
    %440 = vmatprep.subr.bf16.mxu0 0
    %441 = vmatpush1.bf16.msra.mxu0 0
    %442 = vmatprep.subr.bf16.mxu0 0
    %443 = vmatpush1.bf16.msra.mxu0 %v423
    %444 = vmatprep.subr.bf16.mxu0 0
    %445 = vmatpush2.bf16.msra.mxu0 0
    %446 = vmatprep.subr.bf16.mxu0 0
    %447 = vmatpush2.bf16.msra.mxu0 0
    %448 = vmatprep.subr.bf16.mxu0 0
    %449 = vmatpush2.bf16.msra.mxu0 0
    %450 = vmatprep.subr.bf16.mxu0 0
    %451 = vmatpush2.bf16.msra.mxu0 0
    %452 = vmatprep.subr.bf16.mxu0 0
    %453 = vmatpush2.bf16.msra.mxu0 0
    %454 = vmatprep.subr.bf16.mxu0 0
    %455 = vmatpush2.bf16.msra.mxu0 0
    %456 = vmatprep.subr.bf16.mxu0 0
    %457 = vmatpush2.bf16.msra.mxu0 0
    %458 = vmatprep.subr.bf16.mxu0 0
    %459 = vmatpush2.bf16.msra.mxu0 0
    %460 = vmatprep.mubr.bf16.mxu0 0
    %461 = vmatmul.mubr.bf16.gmra.mxu0 %v426
    %v462 = vpop.f32.mrf.mxu0
    %v463 = vadd.f32 0.0, %v462
    %v464 = vpop.f32.mrf.mxu0
    %v465 = vpop.f32.mrf.mxu0
    %v466 = vadd.f32 0.0, %v465
    %v467 = vpop.f32.mrf.mxu0
    %468 = vdwg.mxu0
    %v469 = vrcp.pop %v416
    %v470 = vrcp.pop %v419
    %v471 = vmul.f32 %v463, %v469
    %v472 = vmul.f32 %v466, %v470
    %473 = vrot.lane.b32.xlu0 %v351, 120
    %v474 = vpop.permute.xlu0 %473
    %v476 = vrot.slane %v349, 4
    %v478 = vsel %vm352, %v474, 0
    %v481 = vsel %vm356, %v476, 0
    %483 = vmatprep.subr.bf16.mxu0 0
    %484 = vmatpush1.bf16.msra.mxu0 0
    %485 = vmatprep.subr.bf16.mxu0 0
    %486 = vmatpush1.bf16.msra.mxu0 0
    %487 = vmatprep.subr.bf16.mxu0 0
    %488 = vmatpush1.bf16.msra.mxu0 0
    %489 = vmatprep.subr.bf16.mxu0 0
    %490 = vmatpush1.bf16.msra.mxu0 0
    %491 = vmatprep.subr.bf16.mxu0 0
    %492 = vmatpush1.bf16.msra.mxu0 0
    %493 = vmatprep.subr.bf16.mxu0 0
    %494 = vmatpush1.bf16.msra.mxu0 0
    %495 = vmatprep.subr.bf16.mxu0 0
    %496 = vmatpush1.bf16.msra.mxu0 0
    %497 = vmatprep.subr.bf16.mxu0 0
    %498 = vmatpush1.bf16.msra.mxu0 %v481
    %499 = vmatprep.subr.bf16.mxu0 0
    %500 = vmatpush2.bf16.msra.mxu0 0
    %501 = vmatprep.subr.bf16.mxu0 0
    %502 = vmatpush2.bf16.msra.mxu0 0
    %503 = vmatprep.subr.bf16.mxu0 0
    %504 = vmatpush2.bf16.msra.mxu0 0
    %505 = vmatprep.subr.bf16.mxu0 0
    %506 = vmatpush2.bf16.msra.mxu0 0
    %507 = vmatprep.subr.bf16.mxu0 0
    %508 = vmatpush2.bf16.msra.mxu0 0
    %509 = vmatprep.subr.bf16.mxu0 0
    %510 = vmatpush2.bf16.msra.mxu0 0
    %511 = vmatprep.subr.bf16.mxu0 0
    %512 = vmatpush2.bf16.msra.mxu0 0
    %513 = vmatprep.subr.bf16.mxu0 0
    %514 = vmatpush2.bf16.msra.mxu0 0
    %515 = vmatprep.mubr.bf16.mxu0 0
    %516 = vmatmul.mubr.bf16.gmra.mxu0 %v478
    %v517 = vpop.f32.mrf.mxu0
    %v518 = vadd.f32 %v303, %v517
    %v519 = vpop.f32.mrf.mxu0
    %v520 = vpop.f32.mrf.mxu0
    %v521 = vadd.f32 %v304, %v520
    %v522 = vpop.f32.mrf.mxu0
    %523 = vdwg.mxu0
    %v524 = vsel %vm401, %v518, -inf
    %525 = vmax.xlane.f32.xlu0 %v524
    %v526 = vpop.xlane.xlu0 %525
    %v527 = vsel %vm401, %v521, -inf
    %528 = vmax.xlane.f32.xlu0 %v527
    %v529 = vpop.xlane.xlu0 %528
    %v530 = vsub.f32 %v518, %v526
    %v531 = vsub.f32 %v521, %v529
    %v532 = vmul.f32 %v530, 1.442695
    %v533 = vpow.pop %v532
    %v534 = vmul.f32 %v531, 1.442695
    %v535 = vpow.pop %v534
    %v536 = vsel %vm401, %v533, 0.0
    %537 = vadd.xlane.f32.xlu0 %v536
    %v538 = vpop.xlane.xlu0 %537
    %v539 = vsel %vm401, %v535, 0.0
    %540 = vadd.xlane.f32.xlu0 %v539
    %v541 = vpop.xlane.xlu0 %540
    %v542 = vpack.c.bf16 %v535, %v533
    %543 = vrot.lane.b32.xlu0 %v351, 56
    %v544 = vpop.permute.xlu0 %543
    %v547 = vsel %vm401, %v542, 0
    %549 = vmatprep.subr.bf16.mxu0 0
    %550 = vmatpush1.bf16.msra.mxu0 0
    %551 = vmatprep.subr.bf16.mxu0 0
    %552 = vmatpush1.bf16.msra.mxu0 0
    %553 = vmatprep.subr.bf16.mxu0 0
    %554 = vmatpush1.bf16.msra.mxu0 0
    %555 = vmatprep.subr.bf16.mxu0 0
    %556 = vmatpush1.bf16.msra.mxu0 0
    %557 = vmatprep.subr.bf16.mxu0 0
    %558 = vmatpush1.bf16.msra.mxu0 0
    %559 = vmatprep.subr.bf16.mxu0 0
    %560 = vmatpush1.bf16.msra.mxu0 0
    %561 = vmatprep.subr.bf16.mxu0 0
    %562 = vmatpush1.bf16.msra.mxu0 0
    %563 = vmatprep.subr.bf16.mxu0 0
    %564 = vmatpush1.bf16.msra.mxu0 %v544
    %565 = vmatprep.subr.bf16.mxu0 0
    %566 = vmatpush2.bf16.msra.mxu0 0
    %567 = vmatprep.subr.bf16.mxu0 0
    %568 = vmatpush2.bf16.msra.mxu0 0
    %569 = vmatprep.subr.bf16.mxu0 0
    %570 = vmatpush2.bf16.msra.mxu0 0
    %571 = vmatprep.subr.bf16.mxu0 0
    %572 = vmatpush2.bf16.msra.mxu0 0
    %573 = vmatprep.subr.bf16.mxu0 0
    %574 = vmatpush2.bf16.msra.mxu0 0
    %575 = vmatprep.subr.bf16.mxu0 0
    %576 = vmatpush2.bf16.msra.mxu0 0
    %577 = vmatprep.subr.bf16.mxu0 0
    %578 = vmatpush2.bf16.msra.mxu0 0
    %579 = vmatprep.subr.bf16.mxu0 0
    %580 = vmatpush2.bf16.msra.mxu0 0
    %581 = vmatprep.mubr.bf16.mxu0 0
    %582 = vmatmul.mubr.bf16.gmra.mxu0 %v547
    %v583 = vpop.f32.mrf.mxu0
    %v584 = vadd.f32 0.0, %v583
    %v585 = vpop.f32.mrf.mxu0
    %v586 = vpop.f32.mrf.mxu0
    %v587 = vadd.f32 0.0, %v586
    %v588 = vpop.f32.mrf.mxu0
    %589 = vdwg.mxu0
    %v590 = vrcp.pop %v538
    %v591 = vrcp.pop %v541
    %v592 = vmul.f32 %v584, %v590
    %v593 = vmul.f32 %v587, %v591
    %594 = vrot.lane.b32.xlu0 %v351, 112
    %v595 = vpop.permute.xlu0 %594
    %v597 = vsel %vm352, %v595, 0
    %v600 = vsel %vm356, %v350, 0
    %602 = vmatprep.subr.bf16.mxu0 0
    %603 = vmatpush1.bf16.msra.mxu0 0
    %604 = vmatprep.subr.bf16.mxu0 0
    %605 = vmatpush1.bf16.msra.mxu0 0
    %606 = vmatprep.subr.bf16.mxu0 0
    %607 = vmatpush1.bf16.msra.mxu0 0
    %608 = vmatprep.subr.bf16.mxu0 0
    %609 = vmatpush1.bf16.msra.mxu0 0
    %610 = vmatprep.subr.bf16.mxu0 0
    %611 = vmatpush1.bf16.msra.mxu0 0
    %612 = vmatprep.subr.bf16.mxu0 0
    %613 = vmatpush1.bf16.msra.mxu0 0
    %614 = vmatprep.subr.bf16.mxu0 0
    %615 = vmatpush1.bf16.msra.mxu0 0
    %616 = vmatprep.subr.bf16.mxu0 0
    %617 = vmatpush1.bf16.msra.mxu0 %v600
    %618 = vmatprep.subr.bf16.mxu0 0
    %619 = vmatpush2.bf16.msra.mxu0 0
    %620 = vmatprep.subr.bf16.mxu0 0
    %621 = vmatpush2.bf16.msra.mxu0 0
    %622 = vmatprep.subr.bf16.mxu0 0
    %623 = vmatpush2.bf16.msra.mxu0 0
    %624 = vmatprep.subr.bf16.mxu0 0
    %625 = vmatpush2.bf16.msra.mxu0 0
    %626 = vmatprep.subr.bf16.mxu0 0
    %627 = vmatpush2.bf16.msra.mxu0 0
    %628 = vmatprep.subr.bf16.mxu0 0
    %629 = vmatpush2.bf16.msra.mxu0 0
    %630 = vmatprep.subr.bf16.mxu0 0
    %631 = vmatpush2.bf16.msra.mxu0 0
    %632 = vmatprep.subr.bf16.mxu0 0
    %633 = vmatpush2.bf16.msra.mxu0 0
    %634 = vmatprep.mubr.bf16.mxu0 0
    %635 = vmatmul.mubr.bf16.gmra.mxu0 %v597
    %v636 = vpop.f32.mrf.mxu0
    %v637 = vadd.f32 %v305, %v636
    %v638 = vpop.f32.mrf.mxu0
    %v639 = vpop.f32.mrf.mxu0
    %v640 = vadd.f32 %v306, %v639
    %v641 = vpop.f32.mrf.mxu0
    %642 = vdwg.mxu0
    %v643 = vsel %vm401, %v637, -inf
    %644 = vmax.xlane.f32.xlu0 %v643
    %v645 = vpop.xlane.xlu0 %644
    %v646 = vsel %vm401, %v640, -inf
    %647 = vmax.xlane.f32.xlu0 %v646
    %v648 = vpop.xlane.xlu0 %647
    %v649 = vsub.f32 %v637, %v645
    %v650 = vsub.f32 %v640, %v648
    %v651 = vmul.f32 %v649, 1.442695
    %v652 = vpow.pop %v651
    %v653 = vmul.f32 %v650, 1.442695
    %v654 = vpow.pop %v653
    %v655 = vsel %vm401, %v652, 0.0
    %656 = vadd.xlane.f32.xlu0 %v655
    %v657 = vpop.xlane.xlu0 %656
    %v658 = vsel %vm401, %v654, 0.0
    %659 = vadd.xlane.f32.xlu0 %v658
    %v660 = vpop.xlane.xlu0 %659
    %v661 = vpack.c.bf16 %v654, %v652
    %662 = vrot.lane.b32.xlu0 %v351, 48
    %v663 = vpop.permute.xlu0 %662
    %v666 = vsel %vm401, %v661, 0
    %668 = vmatprep.subr.bf16.mxu0 0
    %669 = vmatpush1.bf16.msra.mxu0 0
    %670 = vmatprep.subr.bf16.mxu0 0
    %671 = vmatpush1.bf16.msra.mxu0 0
    %672 = vmatprep.subr.bf16.mxu0 0
    %673 = vmatpush1.bf16.msra.mxu0 0
    %674 = vmatprep.subr.bf16.mxu0 0
    %675 = vmatpush1.bf16.msra.mxu0 0
    %676 = vmatprep.subr.bf16.mxu0 0
    %677 = vmatpush1.bf16.msra.mxu0 0
    %678 = vmatprep.subr.bf16.mxu0 0
    %679 = vmatpush1.bf16.msra.mxu0 0
    %680 = vmatprep.subr.bf16.mxu0 0
    %681 = vmatpush1.bf16.msra.mxu0 0
    %682 = vmatprep.subr.bf16.mxu0 0
    %683 = vmatpush1.bf16.msra.mxu0 %v663
    %684 = vmatprep.subr.bf16.mxu0 0
    %685 = vmatpush2.bf16.msra.mxu0 0
    %686 = vmatprep.subr.bf16.mxu0 0
    %687 = vmatpush2.bf16.msra.mxu0 0
    %688 = vmatprep.subr.bf16.mxu0 0
    %689 = vmatpush2.bf16.msra.mxu0 0
    %690 = vmatprep.subr.bf16.mxu0 0
    %691 = vmatpush2.bf16.msra.mxu0 0
    %692 = vmatprep.subr.bf16.mxu0 0
    %693 = vmatpush2.bf16.msra.mxu0 0
    %694 = vmatprep.subr.bf16.mxu0 0
    %695 = vmatpush2.bf16.msra.mxu0 0
    %696 = vmatprep.subr.bf16.mxu0 0
    %697 = vmatpush2.bf16.msra.mxu0 0
    %698 = vmatprep.subr.bf16.mxu0 0
    %699 = vmatpush2.bf16.msra.mxu0 0
    %700 = vmatprep.mubr.bf16.mxu0 0
    %701 = vmatmul.mubr.bf16.gmra.mxu0 %v666
    %v702 = vpop.f32.mrf.mxu0
    %v703 = vadd.f32 0.0, %v702
    %v704 = vpop.f32.mrf.mxu0
    %v705 = vpop.f32.mrf.mxu0
    %v706 = vadd.f32 0.0, %v705
    %v707 = vpop.f32.mrf.mxu0
    %708 = vdwg.mxu0
    %v709 = vrcp.pop %v657
    %v710 = vrcp.pop %v660
    %v711 = vmul.f32 %v703, %v709
    %v712 = vmul.f32 %v706, %v710
    %713 = vrot.lane.b32.xlu0 %v351, 104
    %v714 = vpop.permute.xlu0 %713
    %v716 = vrot.slane %v350, 4
    %v718 = vsel %vm352, %v714, 0
    %v721 = vsel %vm356, %v716, 0
    %723 = vmatprep.subr.bf16.mxu0 0
    %724 = vmatpush1.bf16.msra.mxu0 0
    %725 = vmatprep.subr.bf16.mxu0 0
    %726 = vmatpush1.bf16.msra.mxu0 0
    %727 = vmatprep.subr.bf16.mxu0 0
    %728 = vmatpush1.bf16.msra.mxu0 0
    %729 = vmatprep.subr.bf16.mxu0 0
    %730 = vmatpush1.bf16.msra.mxu0 0
    %731 = vmatprep.subr.bf16.mxu0 0
    %732 = vmatpush1.bf16.msra.mxu0 0
    %733 = vmatprep.subr.bf16.mxu0 0
    %734 = vmatpush1.bf16.msra.mxu0 0
    %735 = vmatprep.subr.bf16.mxu0 0
    %736 = vmatpush1.bf16.msra.mxu0 0
    %737 = vmatprep.subr.bf16.mxu0 0
    %738 = vmatpush1.bf16.msra.mxu0 %v721
    %739 = vmatprep.subr.bf16.mxu0 0
    %740 = vmatpush2.bf16.msra.mxu0 0
    %741 = vmatprep.subr.bf16.mxu0 0
    %742 = vmatpush2.bf16.msra.mxu0 0
    %743 = vmatprep.subr.bf16.mxu0 0
    %744 = vmatpush2.bf16.msra.mxu0 0
    %745 = vmatprep.subr.bf16.mxu0 0
    %746 = vmatpush2.bf16.msra.mxu0 0
    %747 = vmatprep.subr.bf16.mxu0 0
    %748 = vmatpush2.bf16.msra.mxu0 0
    %749 = vmatprep.subr.bf16.mxu0 0
    %750 = vmatpush2.bf16.msra.mxu0 0
    %751 = vmatprep.subr.bf16.mxu0 0
    %752 = vmatpush2.bf16.msra.mxu0 0
    %753 = vmatprep.subr.bf16.mxu0 0
    %754 = vmatpush2.bf16.msra.mxu0 0
    %755 = vmatprep.mubr.bf16.mxu0 0
    %756 = vmatmul.mubr.bf16.gmra.mxu0 %v718
    %v757 = vpop.f32.mrf.mxu0
    %v758 = vadd.f32 %v307, %v757
    %v759 = vpop.f32.mrf.mxu0
    %v760 = vpop.f32.mrf.mxu0
    %v761 = vadd.f32 %v308, %v760
    %v762 = vpop.f32.mrf.mxu0
    %763 = vdwg.mxu0
    %v764 = vsel %vm401, %v758, -inf
    %765 = vmax.xlane.f32.xlu0 %v764
    %v766 = vpop.xlane.xlu0 %765
    %v767 = vsel %vm401, %v761, -inf
    %768 = vmax.xlane.f32.xlu0 %v767
    %v769 = vpop.xlane.xlu0 %768
    %v770 = vsub.f32 %v758, %v766
    %v771 = vsub.f32 %v761, %v769
    %v772 = vmul.f32 %v770, 1.442695
    %v773 = vpow.pop %v772
    %v774 = vmul.f32 %v771, 1.442695
    %v775 = vpow.pop %v774
    %v776 = vsel %vm401, %v773, 0.0
    %777 = vadd.xlane.f32.xlu0 %v776
    %v778 = vpop.xlane.xlu0 %777
    %v779 = vsel %vm401, %v775, 0.0
    %780 = vadd.xlane.f32.xlu0 %v779
    %v781 = vpop.xlane.xlu0 %780
    %v782 = vpack.c.bf16 %v775, %v773
    %783 = vrot.lane.b32.xlu0 %v351, 40
    %v784 = vpop.permute.xlu0 %783
    %v787 = vsel %vm401, %v782, 0
    %789 = vmatprep.subr.bf16.mxu0 0
    %790 = vmatpush1.bf16.msra.mxu0 0
    %791 = vmatprep.subr.bf16.mxu0 0
    %792 = vmatpush1.bf16.msra.mxu0 0
    %793 = vmatprep.subr.bf16.mxu0 0
    %794 = vmatpush1.bf16.msra.mxu0 0
    %795 = vmatprep.subr.bf16.mxu0 0
    %796 = vmatpush1.bf16.msra.mxu0 0
    %797 = vmatprep.subr.bf16.mxu0 0
    %798 = vmatpush1.bf16.msra.mxu0 0
    %799 = vmatprep.subr.bf16.mxu0 0
    %800 = vmatpush1.bf16.msra.mxu0 0
    %801 = vmatprep.subr.bf16.mxu0 0
    %802 = vmatpush1.bf16.msra.mxu0 0
    %803 = vmatprep.subr.bf16.mxu0 0
    %804 = vmatpush1.bf16.msra.mxu0 %v784
    %805 = vmatprep.subr.bf16.mxu0 0
    %806 = vmatpush2.bf16.msra.mxu0 0
    %807 = vmatprep.subr.bf16.mxu0 0
    %808 = vmatpush2.bf16.msra.mxu0 0
    %809 = vmatprep.subr.bf16.mxu0 0
    %810 = vmatpush2.bf16.msra.mxu0 0
    %811 = vmatprep.subr.bf16.mxu0 0
    %812 = vmatpush2.bf16.msra.mxu0 0
    %813 = vmatprep.subr.bf16.mxu0 0
    %814 = vmatpush2.bf16.msra.mxu0 0
    %815 = vmatprep.subr.bf16.mxu0 0
    %816 = vmatpush2.bf16.msra.mxu0 0
    %817 = vmatprep.subr.bf16.mxu0 0
    %818 = vmatpush2.bf16.msra.mxu0 0
    %819 = vmatprep.subr.bf16.mxu0 0
    %820 = vmatpush2.bf16.msra.mxu0 0
    %821 = vmatprep.mubr.bf16.mxu0 0
    %822 = vmatmul.mubr.bf16.gmra.mxu0 %v787
    %v823 = vpop.f32.mrf.mxu0
    %v824 = vadd.f32 0.0, %v823
    %v825 = vpop.f32.mrf.mxu0
    %v826 = vpop.f32.mrf.mxu0
    %v827 = vadd.f32 0.0, %v826
    %v828 = vpop.f32.mrf.mxu0
    %829 = vdwg.mxu0
    %v830 = vrcp.pop %v778
    %v831 = vrcp.pop %v781
    %v832 = vmul.f32 %v824, %v830
    %v833 = vmul.f32 %v827, %v831
    %836 = vrot.lane.b32.xlu0 %v592, 8
    %v837 = vpop.permute.xlu0 %836
    %838 = vrot.lane.b32.xlu0 %v593, 8
    %v839 = vpop.permute.xlu0 %838
    %844 = vrot.lane.b32.xlu0 %v711, 16
    %v845 = vpop.permute.xlu0 %844
    %846 = vrot.lane.b32.xlu0 %v712, 16
    %v847 = vpop.permute.xlu0 %846
    %852 = vrot.lane.b32.xlu0 %v832, 24
    %v853 = vpop.permute.xlu0 %852
    %854 = vrot.lane.b32.xlu0 %v833, 24
    %v855 = vpop.permute.xlu0 %854
    %v858 = vsel %vm352, %v471, %v837
    %v859 = vsel %vm352, %v472, %v839
    %v860 = vsel %vm401, %v858, %v845
    %v861 = vsel %vm401, %v859, %v847
    %vm862 = vcmask 195584
    %v863 = vsel %vm862, %v860, %v853
    %v864 = vsel %vm862, %v861, %v855
    %v865 = vpack.c.bf16 %v864, %v863
    %v870 = vunpack.c.l.b16 %v297
    %v871 = vunpack.c.l.b16 %v298
    %v872 = vunpack.c.l.b16 %v299
    %v873 = vunpack.c.l.b16 %v300
    %v874 = vpack.c.b16 %v871, %v870
    %v875 = vpack.c.b16 %v873, %v872
    %v879 = vsel %vm212, %v865, 0
    %881 = vmatprep.subr.bf16.mxu0 0
    %882 = vmatpush1.bf16.msra.mxu0 0
    %883 = vmatprep.subr.bf16.mxu0 0
    %884 = vmatpush1.bf16.msra.mxu0 0
    %885 = vmatprep.subr.bf16.mxu0 0
    %886 = vmatpush1.bf16.msra.mxu0 0
    %887 = vmatprep.subr.bf16.mxu0 0
    %888 = vmatpush1.bf16.msra.mxu0 0
    %889 = vmatprep.subr.bf16.mxu0 0
    %890 = vmatpush1.bf16.msra.mxu0 0
    %891 = vmatprep.subr.bf16.mxu0 0
    %892 = vmatpush1.bf16.msra.mxu0 0
    %893 = vmatprep.subr.bf16.mxu0 0
    %894 = vmatpush1.bf16.msra.mxu0 %v875
    %895 = vmatprep.subr.bf16.mxu0 0
    %896 = vmatpush1.bf16.msra.mxu0 %v874
    %897 = vmatprep.subr.bf16.mxu0 0
    %898 = vmatpush2.bf16.msra.mxu0 0
    %899 = vmatprep.subr.bf16.mxu0 0
    %900 = vmatpush2.bf16.msra.mxu0 0
    %901 = vmatprep.subr.bf16.mxu0 0
    %902 = vmatpush2.bf16.msra.mxu0 0
    %903 = vmatprep.subr.bf16.mxu0 0
    %904 = vmatpush2.bf16.msra.mxu0 0
    %905 = vmatprep.subr.bf16.mxu0 0
    %906 = vmatpush2.bf16.msra.mxu0 0
    %907 = vmatprep.subr.bf16.mxu0 0
    %908 = vmatpush2.bf16.msra.mxu0 0
    %909 = vmatprep.subr.bf16.mxu0 0
    %910 = vmatpush2.bf16.msra.mxu0 0
    %911 = vmatprep.subr.bf16.mxu0 0
    %912 = vmatpush2.bf16.msra.mxu0 0
    %913 = vmatprep.mubr.bf16.mxu0 0
    %914 = vmatmul.mubr.bf16.gmra.mxu0 %v879
    %v915 = vpop.f32.mrf.mxu0
    %v916 = vadd.f32 0.0, %v915
    %v917 = vpop.f32.mrf.mxu0
    %v918 = vpop.f32.mrf.mxu0
    %v919 = vadd.f32 0.0, %v918
    %v920 = vpop.f32.mrf.mxu0
    %921 = vdwg.mxu0
    %v922 = vadd.f32 %v203, %v916
    %v923 = vadd.f32 %v206, %v919
    %v924 = vld [vmem:[%s9] sm:$0x1]
    %v925 = vmul.f32 %v922, %v922
    %v926 = vmul.f32 %v923, %v923
    %v927 = vsel %vm212, %v925, 0.0
    %928 = vadd.xlane.f32.xlu0 %v927
    %v929 = vpop.xlane.xlu0 %928
    %v930 = vsel %vm212, %v926, 0.0
    %931 = vadd.xlane.f32.xlu0 %v930
    %v932 = vpop.xlane.xlu0 %931
    %v933 = vmul.f32 %v929, %v219
    %v934 = vmul.f32 %v932, %v219
    %v935 = vadd.f32 %v933, 1e-06
    %v936 = vadd.f32 %v934, 1e-06
    %v937 = vrsqrt.pop %v935
    %v938 = vrsqrt.pop %v936
    %v939 = vmul.f32 %v922, %v937
    %v940 = vmul.f32 %v923, %v938
    %v942 = vlaneseq
    %v943 = vshrl.u32 %v942, 7
    %v944 = vsub.s32 0, %v943
    %v945 = vrot.slane %v924, %v944
    %v947 = vmul.f32 %v939, %v945
    %v948 = vmul.f32 %v940, %v945
    %v949 = vpack.c.bf16 %v948, %v947
    %v950 = vld [vmem:[%s10] sm:$0xf]
    %v951 = vld [vmem:[%s10 + $0x4] sm:$0xf]
    %v952 = vld [vmem:[%s10 + $0x8] sm:$0xf]
    %v953 = vld [vmem:[%s10 + $0xc] sm:$0xf]
    %v958 = vunpack.c.l.b16 %v950
    %v959 = vunpack.c.l.b16 %v951
    %v960 = vunpack.c.l.b16 %v952
    %v961 = vunpack.c.l.b16 %v953
    %v962 = vpack.c.b16 %v959, %v958
    %v963 = vpack.c.b16 %v961, %v960
    %v967 = vsel %vm212, %v949, 0
    %969 = vmatprep.subr.bf16.mxu0 0
    %970 = vmatpush1.bf16.msra.mxu0 0
    %971 = vmatprep.subr.bf16.mxu0 0
    %972 = vmatpush1.bf16.msra.mxu0 0
    %973 = vmatprep.subr.bf16.mxu0 0
    %974 = vmatpush1.bf16.msra.mxu0 0
    %975 = vmatprep.subr.bf16.mxu0 0
    %976 = vmatpush1.bf16.msra.mxu0 0
    %977 = vmatprep.subr.bf16.mxu0 0
    %978 = vmatpush1.bf16.msra.mxu0 0
    %979 = vmatprep.subr.bf16.mxu0 0
    %980 = vmatpush1.bf16.msra.mxu0 0
    %981 = vmatprep.subr.bf16.mxu0 0
    %982 = vmatpush1.bf16.msra.mxu0 %v963
    %983 = vmatprep.subr.bf16.mxu0 0
    %984 = vmatpush1.bf16.msra.mxu0 %v962
    %985 = vmatprep.subr.bf16.mxu0 0
    %986 = vmatpush2.bf16.msra.mxu0 0
    %987 = vmatprep.subr.bf16.mxu0 0
    %988 = vmatpush2.bf16.msra.mxu0 0
    %989 = vmatprep.subr.bf16.mxu0 0
    %990 = vmatpush2.bf16.msra.mxu0 0
    %991 = vmatprep.subr.bf16.mxu0 0
    %992 = vmatpush2.bf16.msra.mxu0 0
    %993 = vmatprep.subr.bf16.mxu0 0
    %994 = vmatpush2.bf16.msra.mxu0 0
    %995 = vmatprep.subr.bf16.mxu0 0
    %996 = vmatpush2.bf16.msra.mxu0 0
    %997 = vmatprep.subr.bf16.mxu0 0
    %998 = vmatpush2.bf16.msra.mxu0 0
    %999 = vmatprep.subr.bf16.mxu0 0
    %1000 = vmatpush2.bf16.msra.mxu0 0
    %1001 = vmatprep.mubr.bf16.mxu0 0
    %1002 = vmatmul.mubr.bf16.gmra.mxu0 %v967
    %v1003 = vpop.f32.mrf.mxu0
    %v1004 = vadd.f32 0.0, %v1003
    %v1005 = vpop.f32.mrf.mxu0
    %v1006 = vpop.f32.mrf.mxu0
    %v1007 = vadd.f32 0.0, %v1006
    %v1008 = vpop.f32.mrf.mxu0
    %1009 = vdwg.mxu0
    %v1010 = vmax.f32 %v1004, 0.0
    %v1011 = vmax.f32 %v1007, 0.0
    %v1012 = vpack.c.bf16 %v1011, %v1010
    %v1013 = vld [vmem:[%s11] sm:$0xf]
    %v1014 = vld [vmem:[%s11 + $0x4] sm:$0xf]
    %v1015 = vld [vmem:[%s11 + $0x8] sm:$0xf]
    %v1016 = vld [vmem:[%s11 + $0xc] sm:$0xf]
    %v1017 = vld [vmem:[%s11 + $0x10] sm:$0xf]
    %v1018 = vld [vmem:[%s11 + $0x14] sm:$0xf]
    %v1019 = vld [vmem:[%s11 + $0x18] sm:$0xf]
    %v1020 = vld [vmem:[%s11 + $0x1c] sm:$0xf]
    %v1029 = vunpack.c.l.b16 %v1013
    %v1030 = vunpack.c.l.b16 %v1014
    %v1031 = vunpack.c.l.b16 %v1015
    %v1032 = vunpack.c.l.b16 %v1016
    %v1033 = vunpack.c.l.b16 %v1017
    %v1034 = vunpack.c.l.b16 %v1018
    %v1035 = vunpack.c.l.b16 %v1019
    %v1036 = vunpack.c.l.b16 %v1020
    %v1037 = vpack.c.b16 %v1030, %v1029
    %v1038 = vpack.c.b16 %v1032, %v1031
    %v1039 = vpack.c.b16 %v1034, %v1033
    %v1040 = vpack.c.b16 %v1036, %v1035
    %vm1045 = vcmask 523264
    %v1047 = vsel %vm1045, %v1012, 0
    %1049 = vmatprep.subr.bf16.mxu0 0
    %1050 = vmatpush1.bf16.msra.mxu0 0
    %1051 = vmatprep.subr.bf16.mxu0 0
    %1052 = vmatpush1.bf16.msra.mxu0 0
    %1053 = vmatprep.subr.bf16.mxu0 0
    %1054 = vmatpush1.bf16.msra.mxu0 0
    %1055 = vmatprep.subr.bf16.mxu0 0
    %1056 = vmatpush1.bf16.msra.mxu0 0
    %1057 = vmatprep.subr.bf16.mxu0 0
    %1058 = vmatpush1.bf16.msra.mxu0 %v1040
    %1059 = vmatprep.subr.bf16.mxu0 0
    %1060 = vmatpush1.bf16.msra.mxu0 %v1039
    %1061 = vmatprep.subr.bf16.mxu0 0
    %1062 = vmatpush1.bf16.msra.mxu0 %v1038
    %1063 = vmatprep.subr.bf16.mxu0 0
    %1064 = vmatpush1.bf16.msra.mxu0 %v1037
    %1065 = vmatprep.subr.bf16.mxu0 0
    %1066 = vmatpush2.bf16.msra.mxu0 0
    %1067 = vmatprep.subr.bf16.mxu0 0
    %1068 = vmatpush2.bf16.msra.mxu0 0
    %1069 = vmatprep.subr.bf16.mxu0 0
    %1070 = vmatpush2.bf16.msra.mxu0 0
    %1071 = vmatprep.subr.bf16.mxu0 0
    %1072 = vmatpush2.bf16.msra.mxu0 0
    %1073 = vmatprep.subr.bf16.mxu0 0
    %1074 = vmatpush2.bf16.msra.mxu0 0
    %1075 = vmatprep.subr.bf16.mxu0 0
    %1076 = vmatpush2.bf16.msra.mxu0 0
    %1077 = vmatprep.subr.bf16.mxu0 0
    %1078 = vmatpush2.bf16.msra.mxu0 0
    %1079 = vmatprep.subr.bf16.mxu0 0
    %1080 = vmatpush2.bf16.msra.mxu0 0
    %1081 = vmatprep.mubr.bf16.mxu0 0
    %1082 = vmatmul.mubr.bf16.gmra.mxu0 %v1047
    %v1083 = vpop.f32.mrf.mxu0
    %v1084 = vadd.f32 0.0, %v1083
    %v1085 = vpop.f32.mrf.mxu0
    %v1086 = vpop.f32.mrf.mxu0
    %v1087 = vadd.f32 0.0, %v1086
    %v1088 = vpop.f32.mrf.mxu0
    %1089 = vdwg.mxu0
    %v1090 = vadd.f32 %v922, %v1084
    %v1091 = vadd.f32 %v923, %v1087
    %v1092 = vld [vmem:[%s12] sm:$0x1]
    %v1093 = vmul.f32 %v1090, %v1090
    %v1094 = vmul.f32 %v1091, %v1091
    %v1095 = vsel %vm212, %v1093, 0.0
    %1096 = vadd.xlane.f32.xlu0 %v1095
    %v1097 = vpop.xlane.xlu0 %1096
    %v1098 = vsel %vm212, %v1094, 0.0
    %1099 = vadd.xlane.f32.xlu0 %v1098
    %v1100 = vpop.xlane.xlu0 %1099
    %v1101 = vmul.f32 %v1097, %v219
    %v1102 = vmul.f32 %v1100, %v219
    %v1103 = vadd.f32 %v1101, 1e-06
    %v1104 = vadd.f32 %v1102, 1e-06
    %v1105 = vrsqrt.pop %v1103
    %v1106 = vrsqrt.pop %v1104
    %v1107 = vmul.f32 %v1090, %v1105
    %v1108 = vmul.f32 %v1091, %v1106
    %v1110 = vlaneseq
    %v1111 = vshrl.u32 %v1110, 7
    %v1112 = vsub.s32 0, %v1111
    %v1113 = vrot.slane %v1092, %v1112
    %v1115 = vmul.f32 %v1107, %v1113
    %v1116 = vmul.f32 %v1108, %v1113
    %v1117 = vld [vmem:[%s1] sm:$0xff]
    %v1118 = vld [vmem:[%s1 + $0x8] sm:$0xff]
    %1119 = vset.pattern.permute.xlu0 0
    %1120 = vperm.xlu0 %1119, %v1117
    %v1121 = vpop.permute.xlu0 %1120
    %1122 = vset.pattern.permute.xlu0 0
    %1123 = vperm.xlu0 %1122, %v1118
    %v1124 = vpop.permute.xlu0 %1123
    %vm1125 = vcmp.eq.s32.totalorder %v106, %v1121
    %vm1126 = vcmp.eq.s32.totalorder %v106, %v1124
    %v1127 = vsel %vm1125, 1, 0
    %v1128 = vsel %vm1126, 1, 0
    %v1129 = vcvt.s32.f32 %v1127
    %v1130 = vcvt.s32.f32 %v1128
    %v1131 = vpack.c.bf16 %v1130, %v1129
    %1132 = vmatprep.subr.bf16.mxu0 0
    %1133 = vmatpush1.bf16.msra.mxu0 %v159
    %1134 = vmatprep.subr.bf16.mxu0 0
    %1135 = vmatpush1.bf16.msra.mxu0 %v158
    %1136 = vmatprep.subr.bf16.mxu0 0
    %1137 = vmatpush1.bf16.msra.mxu0 %v157
    %1138 = vmatprep.subr.bf16.mxu0 0
    %1139 = vmatpush1.bf16.msra.mxu0 %v156
    %1140 = vmatprep.subr.bf16.mxu0 0
    %1141 = vmatpush1.bf16.msra.mxu0 %v155
    %1142 = vmatprep.subr.bf16.mxu0 0
    %1143 = vmatpush1.bf16.msra.mxu0 %v154
    %1144 = vmatprep.subr.bf16.mxu0 0
    %1145 = vmatpush1.bf16.msra.mxu0 %v153
    %1146 = vmatprep.subr.bf16.mxu0 0
    %1147 = vmatpush1.bf16.msra.mxu0 %v152
    %1148 = vmatprep.subr.bf16.mxu0 0
    %1149 = vmatpush2.bf16.msra.mxu0 0
    %1150 = vmatprep.subr.bf16.mxu0 0
    %1151 = vmatpush2.bf16.msra.mxu0 0
    %1152 = vmatprep.subr.bf16.mxu0 0
    %1153 = vmatpush2.bf16.msra.mxu0 0
    %1154 = vmatprep.subr.bf16.mxu0 0
    %1155 = vmatpush2.bf16.msra.mxu0 0
    %1156 = vmatprep.subr.bf16.mxu0 0
    %1157 = vmatpush2.bf16.msra.mxu0 0
    %1158 = vmatprep.subr.bf16.mxu0 0
    %1159 = vmatpush2.bf16.msra.mxu0 0
    %1160 = vmatprep.subr.bf16.mxu0 0
    %1161 = vmatpush2.bf16.msra.mxu0 0
    %1162 = vmatprep.subr.bf16.mxu0 0
    %1163 = vmatpush2.bf16.msra.mxu0 0
    %1164 = vmatprep.mubr.bf16.mxu0 0
    %1165 = vmatmul.mubr.bf16.gmra.mxu0 %v1131
    %v1166 = vpop.f32.mrf.mxu0
    %v1167 = vadd.f32 0.0, %v1166
    %v1168 = vpop.f32.mrf.mxu0
    %v1169 = vpop.f32.mrf.mxu0
    %v1170 = vadd.f32 0.0, %v1169
    %v1171 = vpop.f32.mrf.mxu0
    %1172 = vdwg.mxu0
    %v1173 = vld [vmem:[%s13] sm:$0x1]
    %v1174 = vmul.f32 %v1167, %v1167
    %v1175 = vmul.f32 %v1170, %v1170
    %v1176 = vsel %vm212, %v1174, 0.0
    %1177 = vadd.xlane.f32.xlu0 %v1176
    %v1178 = vpop.xlane.xlu0 %1177
    %v1179 = vsel %vm212, %v1175, 0.0
    %1180 = vadd.xlane.f32.xlu0 %v1179
    %v1181 = vpop.xlane.xlu0 %1180
    %v1182 = vmul.f32 %v1178, %v219
    %v1183 = vmul.f32 %v1181, %v219
    %v1184 = vadd.f32 %v1182, 1e-06
    %v1185 = vadd.f32 %v1183, 1e-06
    %v1186 = vrsqrt.pop %v1184
    %v1187 = vrsqrt.pop %v1185
    %v1188 = vmul.f32 %v1167, %v1186
    %v1189 = vmul.f32 %v1170, %v1187
    %v1191 = vlaneseq
    %v1192 = vshrl.u32 %v1191, 7
    %v1193 = vsub.s32 0, %v1192
    %v1194 = vrot.slane %v1173, %v1193
    %v1196 = vmul.f32 %v1188, %v1194
    %v1197 = vmul.f32 %v1189, %v1194
    %v1198 = vpack.c.bf16 %v1197, %v1196
    %v1199 = vld [vmem:[%s14] sm:$0xf]
    %v1200 = vld [vmem:[%s14 + $0x4] sm:$0xf]
    %v1201 = vld [vmem:[%s14 + $0x8] sm:$0xf]
    %v1202 = vld [vmem:[%s14 + $0xc] sm:$0xf]
    %v1207 = vunpack.c.l.b16 %v1199
    %v1208 = vunpack.c.l.b16 %v1200
    %v1209 = vunpack.c.l.b16 %v1201
    %v1210 = vunpack.c.l.b16 %v1202
    %v1211 = vpack.c.b16 %v1208, %v1207
    %v1212 = vpack.c.b16 %v1210, %v1209
    %v1216 = vsel %vm212, %v1198, 0
    %1218 = vmatprep.subr.bf16.mxu0 0
    %1219 = vmatpush1.bf16.msra.mxu0 0
    %1220 = vmatprep.subr.bf16.mxu0 0
    %1221 = vmatpush1.bf16.msra.mxu0 0
    %1222 = vmatprep.subr.bf16.mxu0 0
    %1223 = vmatpush1.bf16.msra.mxu0 0
    %1224 = vmatprep.subr.bf16.mxu0 0
    %1225 = vmatpush1.bf16.msra.mxu0 0
    %1226 = vmatprep.subr.bf16.mxu0 0
    %1227 = vmatpush1.bf16.msra.mxu0 0
    %1228 = vmatprep.subr.bf16.mxu0 0
    %1229 = vmatpush1.bf16.msra.mxu0 0
    %1230 = vmatprep.subr.bf16.mxu0 0
    %1231 = vmatpush1.bf16.msra.mxu0 %v1212
    %1232 = vmatprep.subr.bf16.mxu0 0
    %1233 = vmatpush1.bf16.msra.mxu0 %v1211
    %1234 = vmatprep.subr.bf16.mxu0 0
    %1235 = vmatpush2.bf16.msra.mxu0 0
    %1236 = vmatprep.subr.bf16.mxu0 0
    %1237 = vmatpush2.bf16.msra.mxu0 0
    %1238 = vmatprep.subr.bf16.mxu0 0
    %1239 = vmatpush2.bf16.msra.mxu0 0
    %1240 = vmatprep.subr.bf16.mxu0 0
    %1241 = vmatpush2.bf16.msra.mxu0 0
    %1242 = vmatprep.subr.bf16.mxu0 0
    %1243 = vmatpush2.bf16.msra.mxu0 0
    %1244 = vmatprep.subr.bf16.mxu0 0
    %1245 = vmatpush2.bf16.msra.mxu0 0
    %1246 = vmatprep.subr.bf16.mxu0 0
    %1247 = vmatpush2.bf16.msra.mxu0 0
    %1248 = vmatprep.subr.bf16.mxu0 0
    %1249 = vmatpush2.bf16.msra.mxu0 0
    %1250 = vmatprep.mubr.bf16.mxu0 0
    %1251 = vmatmul.mubr.bf16.gmra.mxu0 %v1216
    %v1252 = vpop.f32.mrf.mxu0
    %v1253 = vadd.f32 0.0, %v1252
    %v1254 = vpop.f32.mrf.mxu0
    %v1255 = vpop.f32.mrf.mxu0
    %v1256 = vadd.f32 0.0, %v1255
    %v1257 = vpop.f32.mrf.mxu0
    %1258 = vdwg.mxu0
    %v1259 = vld [vmem:[%s15] sm:$0xf]
    %v1260 = vld [vmem:[%s15 + $0x4] sm:$0xf]
    %v1261 = vld [vmem:[%s15 + $0x8] sm:$0xf]
    %v1262 = vld [vmem:[%s15 + $0xc] sm:$0xf]
    %v1263 = vld [vmem:[%s3] sm:$0xff]
    %v1264 = vld [vmem:[%s3 + $0x8] sm:$0xff]
    %v1265 = vld [vmem:[%s3 + $0x10] sm:$0xff]
    %v1266 = vld [vmem:[%s3 + $0x18] sm:$0xff]
    %v1267 = vld [vmem:[%s3 + $0x20] sm:$0xff]
    %v1268 = vld [vmem:[%s3 + $0x28] sm:$0xff]
    %v1269 = vld [vmem:[%s3 + $0x30] sm:$0xff]
    %v1270 = vld [vmem:[%s3 + $0x38] sm:$0xff]
    %1273 = vrot.lane.b32.xlu0 %v1253, 96
    %v1274 = vpop.permute.xlu0 %1273
    %1275 = vrot.lane.b32.xlu0 %v1256, 96
    %v1276 = vpop.permute.xlu0 %1275
    %1279 = vxpose.xlu0.b32.start [1/16] %v1274, 128
    %1280 = vxpose.xlu0.b32.cont [2/16] %v1276, 128
    %1281 = vxpose.xlu0.b32.cont [3/16] 0.0, 128
    %1282 = vxpose.xlu0.b32.cont [4/16] 0.0, 128
    %1283 = vxpose.xlu0.b32.cont [5/16] 0.0, 128
    %1284 = vxpose.xlu0.b32.cont [6/16] 0.0, 128
    %1285 = vxpose.xlu0.b32.cont [7/16] 0.0, 128
    %1286 = vxpose.xlu0.b32.cont [8/16] 0.0, 128
    %1287 = vxpose.xlu0.b32.cont [9/16] 0.0, 128
    %1288 = vxpose.xlu0.b32.cont [10/16] 0.0, 128
    %1289 = vxpose.xlu0.b32.cont [11/16] 0.0, 128
    %1290 = vxpose.xlu0.b32.cont [12/16] 0.0, 128
    %1291 = vxpose.xlu0.b32.cont [13/16] 0.0, 128
    %1292 = vxpose.xlu0.b32.cont [14/16] 0.0, 128
    %1293 = vxpose.xlu0.b32.cont [15/16] 0.0, 128
    %1294 = vxpose.xlu0.b32.end [16/16] 0.0, 128
    %v1295 = vpop.trf.xlu0
    %v1296 = vpop.trf.xlu0
    %v1297 = vpop.trf.xlu0
    %v1298 = vpop.trf.xlu0
    %v1299 = vpop.trf.xlu0
    %v1300 = vpop.trf.xlu0
    %v1301 = vpop.trf.xlu0
    %v1302 = vpop.trf.xlu0
    %v1303 = vpop.trf.xlu0
    %v1304 = vpop.trf.xlu0
    %v1305 = vpop.trf.xlu0
    %v1306 = vpop.trf.xlu0
    %v1307 = vpop.trf.xlu0
    %v1308 = vpop.trf.xlu0
    %v1309 = vpop.trf.xlu0
    %v1310 = vpop.trf.xlu0
    %v1311 = vpack.c.bf16 %v1296, %v1295
    %v1312 = vpack.c.bf16 %v1298, %v1297
    %v1313 = vpack.c.bf16 %v1256, %v1253
    %v1315 = vsel %vm352, %v1313, 0
    %v1318 = vsel %vm356, %v1311, 0
    %1320 = vmatprep.subr.bf16.mxu0 0
    %1321 = vmatpush1.bf16.msra.mxu0 0
    %1322 = vmatprep.subr.bf16.mxu0 0
    %1323 = vmatpush1.bf16.msra.mxu0 0
    %1324 = vmatprep.subr.bf16.mxu0 0
    %1325 = vmatpush1.bf16.msra.mxu0 0
    %1326 = vmatprep.subr.bf16.mxu0 0
    %1327 = vmatpush1.bf16.msra.mxu0 0
    %1328 = vmatprep.subr.bf16.mxu0 0
    %1329 = vmatpush1.bf16.msra.mxu0 0
    %1330 = vmatprep.subr.bf16.mxu0 0
    %1331 = vmatpush1.bf16.msra.mxu0 0
    %1332 = vmatprep.subr.bf16.mxu0 0
    %1333 = vmatpush1.bf16.msra.mxu0 0
    %1334 = vmatprep.subr.bf16.mxu0 0
    %1335 = vmatpush1.bf16.msra.mxu0 %v1318
    %1336 = vmatprep.subr.bf16.mxu0 0
    %1337 = vmatpush2.bf16.msra.mxu0 0
    %1338 = vmatprep.subr.bf16.mxu0 0
    %1339 = vmatpush2.bf16.msra.mxu0 0
    %1340 = vmatprep.subr.bf16.mxu0 0
    %1341 = vmatpush2.bf16.msra.mxu0 0
    %1342 = vmatprep.subr.bf16.mxu0 0
    %1343 = vmatpush2.bf16.msra.mxu0 0
    %1344 = vmatprep.subr.bf16.mxu0 0
    %1345 = vmatpush2.bf16.msra.mxu0 0
    %1346 = vmatprep.subr.bf16.mxu0 0
    %1347 = vmatpush2.bf16.msra.mxu0 0
    %1348 = vmatprep.subr.bf16.mxu0 0
    %1349 = vmatpush2.bf16.msra.mxu0 0
    %1350 = vmatprep.subr.bf16.mxu0 0
    %1351 = vmatpush2.bf16.msra.mxu0 0
    %1352 = vmatprep.mubr.bf16.mxu0 0
    %1353 = vmatmul.mubr.bf16.gmra.mxu0 %v1315
    %v1354 = vpop.f32.mrf.mxu0
    %v1355 = vadd.f32 %v1263, %v1354
    %v1356 = vpop.f32.mrf.mxu0
    %v1357 = vpop.f32.mrf.mxu0
    %v1358 = vadd.f32 %v1264, %v1357
    %v1359 = vpop.f32.mrf.mxu0
    %1360 = vdwg.mxu0
    %v1361 = vsel %vm401, %v1355, -inf
    %1362 = vmax.xlane.f32.xlu0 %v1361
    %v1363 = vpop.xlane.xlu0 %1362
    %v1364 = vsel %vm401, %v1358, -inf
    %1365 = vmax.xlane.f32.xlu0 %v1364
    %v1366 = vpop.xlane.xlu0 %1365
    %v1367 = vsub.f32 %v1355, %v1363
    %v1368 = vsub.f32 %v1358, %v1366
    %v1369 = vmul.f32 %v1367, 1.442695
    %v1370 = vpow.pop %v1369
    %v1371 = vmul.f32 %v1368, 1.442695
    %v1372 = vpow.pop %v1371
    %v1373 = vsel %vm401, %v1370, 0.0
    %1374 = vadd.xlane.f32.xlu0 %v1373
    %v1375 = vpop.xlane.xlu0 %1374
    %v1376 = vsel %vm401, %v1372, 0.0
    %1377 = vadd.xlane.f32.xlu0 %v1376
    %v1378 = vpop.xlane.xlu0 %1377
    %v1379 = vpack.c.bf16 %v1372, %v1370
    %1381 = vrot.lane.b32.xlu0 %v1313, 64
    %v1382 = vpop.permute.xlu0 %1381
    %v1385 = vsel %vm401, %v1379, 0
    %1387 = vmatprep.subr.bf16.mxu0 0
    %1388 = vmatpush1.bf16.msra.mxu0 0
    %1389 = vmatprep.subr.bf16.mxu0 0
    %1390 = vmatpush1.bf16.msra.mxu0 0
    %1391 = vmatprep.subr.bf16.mxu0 0
    %1392 = vmatpush1.bf16.msra.mxu0 0
    %1393 = vmatprep.subr.bf16.mxu0 0
    %1394 = vmatpush1.bf16.msra.mxu0 0
    %1395 = vmatprep.subr.bf16.mxu0 0
    %1396 = vmatpush1.bf16.msra.mxu0 0
    %1397 = vmatprep.subr.bf16.mxu0 0
    %1398 = vmatpush1.bf16.msra.mxu0 0
    %1399 = vmatprep.subr.bf16.mxu0 0
    %1400 = vmatpush1.bf16.msra.mxu0 0
    %1401 = vmatprep.subr.bf16.mxu0 0
    %1402 = vmatpush1.bf16.msra.mxu0 %v1382
    %1403 = vmatprep.subr.bf16.mxu0 0
    %1404 = vmatpush2.bf16.msra.mxu0 0
    %1405 = vmatprep.subr.bf16.mxu0 0
    %1406 = vmatpush2.bf16.msra.mxu0 0
    %1407 = vmatprep.subr.bf16.mxu0 0
    %1408 = vmatpush2.bf16.msra.mxu0 0
    %1409 = vmatprep.subr.bf16.mxu0 0
    %1410 = vmatpush2.bf16.msra.mxu0 0
    %1411 = vmatprep.subr.bf16.mxu0 0
    %1412 = vmatpush2.bf16.msra.mxu0 0
    %1413 = vmatprep.subr.bf16.mxu0 0
    %1414 = vmatpush2.bf16.msra.mxu0 0
    %1415 = vmatprep.subr.bf16.mxu0 0
    %1416 = vmatpush2.bf16.msra.mxu0 0
    %1417 = vmatprep.subr.bf16.mxu0 0
    %1418 = vmatpush2.bf16.msra.mxu0 0
    %1419 = vmatprep.mubr.bf16.mxu0 0
    %1420 = vmatmul.mubr.bf16.gmra.mxu0 %v1385
    %v1421 = vpop.f32.mrf.mxu0
    %v1422 = vadd.f32 0.0, %v1421
    %v1423 = vpop.f32.mrf.mxu0
    %v1424 = vpop.f32.mrf.mxu0
    %v1425 = vadd.f32 0.0, %v1424
    %v1426 = vpop.f32.mrf.mxu0
    %1427 = vdwg.mxu0
    %v1428 = vrcp.pop %v1375
    %v1429 = vrcp.pop %v1378
    %v1430 = vmul.f32 %v1422, %v1428
    %v1431 = vmul.f32 %v1425, %v1429
    %1432 = vrot.lane.b32.xlu0 %v1313, 120
    %v1433 = vpop.permute.xlu0 %1432
    %v1435 = vrot.slane %v1311, 4
    %v1437 = vsel %vm352, %v1433, 0
    %v1440 = vsel %vm356, %v1435, 0
    %1442 = vmatprep.subr.bf16.mxu0 0
    %1443 = vmatpush1.bf16.msra.mxu0 0
    %1444 = vmatprep.subr.bf16.mxu0 0
    %1445 = vmatpush1.bf16.msra.mxu0 0
    %1446 = vmatprep.subr.bf16.mxu0 0
    %1447 = vmatpush1.bf16.msra.mxu0 0
    %1448 = vmatprep.subr.bf16.mxu0 0
    %1449 = vmatpush1.bf16.msra.mxu0 0
    %1450 = vmatprep.subr.bf16.mxu0 0
    %1451 = vmatpush1.bf16.msra.mxu0 0
    %1452 = vmatprep.subr.bf16.mxu0 0
    %1453 = vmatpush1.bf16.msra.mxu0 0
    %1454 = vmatprep.subr.bf16.mxu0 0
    %1455 = vmatpush1.bf16.msra.mxu0 0
    %1456 = vmatprep.subr.bf16.mxu0 0
    %1457 = vmatpush1.bf16.msra.mxu0 %v1440
    %1458 = vmatprep.subr.bf16.mxu0 0
    %1459 = vmatpush2.bf16.msra.mxu0 0
    %1460 = vmatprep.subr.bf16.mxu0 0
    %1461 = vmatpush2.bf16.msra.mxu0 0
    %1462 = vmatprep.subr.bf16.mxu0 0
    %1463 = vmatpush2.bf16.msra.mxu0 0
    %1464 = vmatprep.subr.bf16.mxu0 0
    %1465 = vmatpush2.bf16.msra.mxu0 0
    %1466 = vmatprep.subr.bf16.mxu0 0
    %1467 = vmatpush2.bf16.msra.mxu0 0
    %1468 = vmatprep.subr.bf16.mxu0 0
    %1469 = vmatpush2.bf16.msra.mxu0 0
    %1470 = vmatprep.subr.bf16.mxu0 0
    %1471 = vmatpush2.bf16.msra.mxu0 0
    %1472 = vmatprep.subr.bf16.mxu0 0
    %1473 = vmatpush2.bf16.msra.mxu0 0
    %1474 = vmatprep.mubr.bf16.mxu0 0
    %1475 = vmatmul.mubr.bf16.gmra.mxu0 %v1437
    %v1476 = vpop.f32.mrf.mxu0
    %v1477 = vadd.f32 %v1265, %v1476
    %v1478 = vpop.f32.mrf.mxu0
    %v1479 = vpop.f32.mrf.mxu0
    %v1480 = vadd.f32 %v1266, %v1479
    %v1481 = vpop.f32.mrf.mxu0
    %1482 = vdwg.mxu0
    %v1483 = vsel %vm401, %v1477, -inf
    %1484 = vmax.xlane.f32.xlu0 %v1483
    %v1485 = vpop.xlane.xlu0 %1484
    %v1486 = vsel %vm401, %v1480, -inf
    %1487 = vmax.xlane.f32.xlu0 %v1486
    %v1488 = vpop.xlane.xlu0 %1487
    %v1489 = vsub.f32 %v1477, %v1485
    %v1490 = vsub.f32 %v1480, %v1488
    %v1491 = vmul.f32 %v1489, 1.442695
    %v1492 = vpow.pop %v1491
    %v1493 = vmul.f32 %v1490, 1.442695
    %v1494 = vpow.pop %v1493
    %v1495 = vsel %vm401, %v1492, 0.0
    %1496 = vadd.xlane.f32.xlu0 %v1495
    %v1497 = vpop.xlane.xlu0 %1496
    %v1498 = vsel %vm401, %v1494, 0.0
    %1499 = vadd.xlane.f32.xlu0 %v1498
    %v1500 = vpop.xlane.xlu0 %1499
    %v1501 = vpack.c.bf16 %v1494, %v1492
    %1502 = vrot.lane.b32.xlu0 %v1313, 56
    %v1503 = vpop.permute.xlu0 %1502
    %v1506 = vsel %vm401, %v1501, 0
    %1508 = vmatprep.subr.bf16.mxu0 0
    %1509 = vmatpush1.bf16.msra.mxu0 0
    %1510 = vmatprep.subr.bf16.mxu0 0
    %1511 = vmatpush1.bf16.msra.mxu0 0
    %1512 = vmatprep.subr.bf16.mxu0 0
    %1513 = vmatpush1.bf16.msra.mxu0 0
    %1514 = vmatprep.subr.bf16.mxu0 0
    %1515 = vmatpush1.bf16.msra.mxu0 0
    %1516 = vmatprep.subr.bf16.mxu0 0
    %1517 = vmatpush1.bf16.msra.mxu0 0
    %1518 = vmatprep.subr.bf16.mxu0 0
    %1519 = vmatpush1.bf16.msra.mxu0 0
    %1520 = vmatprep.subr.bf16.mxu0 0
    %1521 = vmatpush1.bf16.msra.mxu0 0
    %1522 = vmatprep.subr.bf16.mxu0 0
    %1523 = vmatpush1.bf16.msra.mxu0 %v1503
    %1524 = vmatprep.subr.bf16.mxu0 0
    %1525 = vmatpush2.bf16.msra.mxu0 0
    %1526 = vmatprep.subr.bf16.mxu0 0
    %1527 = vmatpush2.bf16.msra.mxu0 0
    %1528 = vmatprep.subr.bf16.mxu0 0
    %1529 = vmatpush2.bf16.msra.mxu0 0
    %1530 = vmatprep.subr.bf16.mxu0 0
    %1531 = vmatpush2.bf16.msra.mxu0 0
    %1532 = vmatprep.subr.bf16.mxu0 0
    %1533 = vmatpush2.bf16.msra.mxu0 0
    %1534 = vmatprep.subr.bf16.mxu0 0
    %1535 = vmatpush2.bf16.msra.mxu0 0
    %1536 = vmatprep.subr.bf16.mxu0 0
    %1537 = vmatpush2.bf16.msra.mxu0 0
    %1538 = vmatprep.subr.bf16.mxu0 0
    %1539 = vmatpush2.bf16.msra.mxu0 0
    %1540 = vmatprep.mubr.bf16.mxu0 0
    %1541 = vmatmul.mubr.bf16.gmra.mxu0 %v1506
    %v1542 = vpop.f32.mrf.mxu0
    %v1543 = vadd.f32 0.0, %v1542
    %v1544 = vpop.f32.mrf.mxu0
    %v1545 = vpop.f32.mrf.mxu0
    %v1546 = vadd.f32 0.0, %v1545
    %v1547 = vpop.f32.mrf.mxu0
    %1548 = vdwg.mxu0
    %v1549 = vrcp.pop %v1497
    %v1550 = vrcp.pop %v1500
    %v1551 = vmul.f32 %v1543, %v1549
    %v1552 = vmul.f32 %v1546, %v1550
    %1553 = vrot.lane.b32.xlu0 %v1313, 112
    %v1554 = vpop.permute.xlu0 %1553
    %v1556 = vsel %vm352, %v1554, 0
    %v1559 = vsel %vm356, %v1312, 0
    %1561 = vmatprep.subr.bf16.mxu0 0
    %1562 = vmatpush1.bf16.msra.mxu0 0
    %1563 = vmatprep.subr.bf16.mxu0 0
    %1564 = vmatpush1.bf16.msra.mxu0 0
    %1565 = vmatprep.subr.bf16.mxu0 0
    %1566 = vmatpush1.bf16.msra.mxu0 0
    %1567 = vmatprep.subr.bf16.mxu0 0
    %1568 = vmatpush1.bf16.msra.mxu0 0
    %1569 = vmatprep.subr.bf16.mxu0 0
    %1570 = vmatpush1.bf16.msra.mxu0 0
    %1571 = vmatprep.subr.bf16.mxu0 0
    %1572 = vmatpush1.bf16.msra.mxu0 0
    %1573 = vmatprep.subr.bf16.mxu0 0
    %1574 = vmatpush1.bf16.msra.mxu0 0
    %1575 = vmatprep.subr.bf16.mxu0 0
    %1576 = vmatpush1.bf16.msra.mxu0 %v1559
    %1577 = vmatprep.subr.bf16.mxu0 0
    %1578 = vmatpush2.bf16.msra.mxu0 0
    %1579 = vmatprep.subr.bf16.mxu0 0
    %1580 = vmatpush2.bf16.msra.mxu0 0
    %1581 = vmatprep.subr.bf16.mxu0 0
    %1582 = vmatpush2.bf16.msra.mxu0 0
    %1583 = vmatprep.subr.bf16.mxu0 0
    %1584 = vmatpush2.bf16.msra.mxu0 0
    %1585 = vmatprep.subr.bf16.mxu0 0
    %1586 = vmatpush2.bf16.msra.mxu0 0
    %1587 = vmatprep.subr.bf16.mxu0 0
    %1588 = vmatpush2.bf16.msra.mxu0 0
    %1589 = vmatprep.subr.bf16.mxu0 0
    %1590 = vmatpush2.bf16.msra.mxu0 0
    %1591 = vmatprep.subr.bf16.mxu0 0
    %1592 = vmatpush2.bf16.msra.mxu0 0
    %1593 = vmatprep.mubr.bf16.mxu0 0
    %1594 = vmatmul.mubr.bf16.gmra.mxu0 %v1556
    %v1595 = vpop.f32.mrf.mxu0
    %v1596 = vadd.f32 %v1267, %v1595
    %v1597 = vpop.f32.mrf.mxu0
    %v1598 = vpop.f32.mrf.mxu0
    %v1599 = vadd.f32 %v1268, %v1598
    %v1600 = vpop.f32.mrf.mxu0
    %1601 = vdwg.mxu0
    %v1602 = vsel %vm401, %v1596, -inf
    %1603 = vmax.xlane.f32.xlu0 %v1602
    %v1604 = vpop.xlane.xlu0 %1603
    %v1605 = vsel %vm401, %v1599, -inf
    %1606 = vmax.xlane.f32.xlu0 %v1605
    %v1607 = vpop.xlane.xlu0 %1606
    %v1608 = vsub.f32 %v1596, %v1604
    %v1609 = vsub.f32 %v1599, %v1607
    %v1610 = vmul.f32 %v1608, 1.442695
    %v1611 = vpow.pop %v1610
    %v1612 = vmul.f32 %v1609, 1.442695
    %v1613 = vpow.pop %v1612
    %v1614 = vsel %vm401, %v1611, 0.0
    %1615 = vadd.xlane.f32.xlu0 %v1614
    %v1616 = vpop.xlane.xlu0 %1615
    %v1617 = vsel %vm401, %v1613, 0.0
    %1618 = vadd.xlane.f32.xlu0 %v1617
    %v1619 = vpop.xlane.xlu0 %1618
    %v1620 = vpack.c.bf16 %v1613, %v1611
    %1621 = vrot.lane.b32.xlu0 %v1313, 48
    %v1622 = vpop.permute.xlu0 %1621
    %v1625 = vsel %vm401, %v1620, 0
    %1627 = vmatprep.subr.bf16.mxu0 0
    %1628 = vmatpush1.bf16.msra.mxu0 0
    %1629 = vmatprep.subr.bf16.mxu0 0
    %1630 = vmatpush1.bf16.msra.mxu0 0
    %1631 = vmatprep.subr.bf16.mxu0 0
    %1632 = vmatpush1.bf16.msra.mxu0 0
    %1633 = vmatprep.subr.bf16.mxu0 0
    %1634 = vmatpush1.bf16.msra.mxu0 0
    %1635 = vmatprep.subr.bf16.mxu0 0
    %1636 = vmatpush1.bf16.msra.mxu0 0
    %1637 = vmatprep.subr.bf16.mxu0 0
    %1638 = vmatpush1.bf16.msra.mxu0 0
    %1639 = vmatprep.subr.bf16.mxu0 0
    %1640 = vmatpush1.bf16.msra.mxu0 0
    %1641 = vmatprep.subr.bf16.mxu0 0
    %1642 = vmatpush1.bf16.msra.mxu0 %v1622
    %1643 = vmatprep.subr.bf16.mxu0 0
    %1644 = vmatpush2.bf16.msra.mxu0 0
    %1645 = vmatprep.subr.bf16.mxu0 0
    %1646 = vmatpush2.bf16.msra.mxu0 0
    %1647 = vmatprep.subr.bf16.mxu0 0
    %1648 = vmatpush2.bf16.msra.mxu0 0
    %1649 = vmatprep.subr.bf16.mxu0 0
    %1650 = vmatpush2.bf16.msra.mxu0 0
    %1651 = vmatprep.subr.bf16.mxu0 0
    %1652 = vmatpush2.bf16.msra.mxu0 0
    %1653 = vmatprep.subr.bf16.mxu0 0
    %1654 = vmatpush2.bf16.msra.mxu0 0
    %1655 = vmatprep.subr.bf16.mxu0 0
    %1656 = vmatpush2.bf16.msra.mxu0 0
    %1657 = vmatprep.subr.bf16.mxu0 0
    %1658 = vmatpush2.bf16.msra.mxu0 0
    %1659 = vmatprep.mubr.bf16.mxu0 0
    %1660 = vmatmul.mubr.bf16.gmra.mxu0 %v1625
    %v1661 = vpop.f32.mrf.mxu0
    %v1662 = vadd.f32 0.0, %v1661
    %v1663 = vpop.f32.mrf.mxu0
    %v1664 = vpop.f32.mrf.mxu0
    %v1665 = vadd.f32 0.0, %v1664
    %v1666 = vpop.f32.mrf.mxu0
    %1667 = vdwg.mxu0
    %v1668 = vrcp.pop %v1616
    %v1669 = vrcp.pop %v1619
    %v1670 = vmul.f32 %v1662, %v1668
    %v1671 = vmul.f32 %v1665, %v1669
    %1672 = vrot.lane.b32.xlu0 %v1313, 104
    %v1673 = vpop.permute.xlu0 %1672
    %v1675 = vrot.slane %v1312, 4
    %v1677 = vsel %vm352, %v1673, 0
    %v1680 = vsel %vm356, %v1675, 0
    %1682 = vmatprep.subr.bf16.mxu0 0
    %1683 = vmatpush1.bf16.msra.mxu0 0
    %1684 = vmatprep.subr.bf16.mxu0 0
    %1685 = vmatpush1.bf16.msra.mxu0 0
    %1686 = vmatprep.subr.bf16.mxu0 0
    %1687 = vmatpush1.bf16.msra.mxu0 0
    %1688 = vmatprep.subr.bf16.mxu0 0
    %1689 = vmatpush1.bf16.msra.mxu0 0
    %1690 = vmatprep.subr.bf16.mxu0 0
    %1691 = vmatpush1.bf16.msra.mxu0 0
    %1692 = vmatprep.subr.bf16.mxu0 0
    %1693 = vmatpush1.bf16.msra.mxu0 0
    %1694 = vmatprep.subr.bf16.mxu0 0
    %1695 = vmatpush1.bf16.msra.mxu0 0
    %1696 = vmatprep.subr.bf16.mxu0 0
    %1697 = vmatpush1.bf16.msra.mxu0 %v1680
    %1698 = vmatprep.subr.bf16.mxu0 0
    %1699 = vmatpush2.bf16.msra.mxu0 0
    %1700 = vmatprep.subr.bf16.mxu0 0
    %1701 = vmatpush2.bf16.msra.mxu0 0
    %1702 = vmatprep.subr.bf16.mxu0 0
    %1703 = vmatpush2.bf16.msra.mxu0 0
    %1704 = vmatprep.subr.bf16.mxu0 0
    %1705 = vmatpush2.bf16.msra.mxu0 0
    %1706 = vmatprep.subr.bf16.mxu0 0
    %1707 = vmatpush2.bf16.msra.mxu0 0
    %1708 = vmatprep.subr.bf16.mxu0 0
    %1709 = vmatpush2.bf16.msra.mxu0 0
    %1710 = vmatprep.subr.bf16.mxu0 0
    %1711 = vmatpush2.bf16.msra.mxu0 0
    %1712 = vmatprep.subr.bf16.mxu0 0
    %1713 = vmatpush2.bf16.msra.mxu0 0
    %1714 = vmatprep.mubr.bf16.mxu0 0
    %1715 = vmatmul.mubr.bf16.gmra.mxu0 %v1677
    %v1716 = vpop.f32.mrf.mxu0
    %v1717 = vadd.f32 %v1269, %v1716
    %v1718 = vpop.f32.mrf.mxu0
    %v1719 = vpop.f32.mrf.mxu0
    %v1720 = vadd.f32 %v1270, %v1719
    %v1721 = vpop.f32.mrf.mxu0
    %1722 = vdwg.mxu0
    %v1723 = vsel %vm401, %v1717, -inf
    %1724 = vmax.xlane.f32.xlu0 %v1723
    %v1725 = vpop.xlane.xlu0 %1724
    %v1726 = vsel %vm401, %v1720, -inf
    %1727 = vmax.xlane.f32.xlu0 %v1726
    %v1728 = vpop.xlane.xlu0 %1727
    %v1729 = vsub.f32 %v1717, %v1725
    %v1730 = vsub.f32 %v1720, %v1728
    %v1731 = vmul.f32 %v1729, 1.442695
    %v1732 = vpow.pop %v1731
    %v1733 = vmul.f32 %v1730, 1.442695
    %v1734 = vpow.pop %v1733
    %v1735 = vsel %vm401, %v1732, 0.0
    %1736 = vadd.xlane.f32.xlu0 %v1735
    %v1737 = vpop.xlane.xlu0 %1736
    %v1738 = vsel %vm401, %v1734, 0.0
    %1739 = vadd.xlane.f32.xlu0 %v1738
    %v1740 = vpop.xlane.xlu0 %1739
    %v1741 = vpack.c.bf16 %v1734, %v1732
    %1742 = vrot.lane.b32.xlu0 %v1313, 40
    %v1743 = vpop.permute.xlu0 %1742
    %v1746 = vsel %vm401, %v1741, 0
    %1748 = vmatprep.subr.bf16.mxu0 0
    %1749 = vmatpush1.bf16.msra.mxu0 0
    %1750 = vmatprep.subr.bf16.mxu0 0
    %1751 = vmatpush1.bf16.msra.mxu0 0
    %1752 = vmatprep.subr.bf16.mxu0 0
    %1753 = vmatpush1.bf16.msra.mxu0 0
    %1754 = vmatprep.subr.bf16.mxu0 0
    %1755 = vmatpush1.bf16.msra.mxu0 0
    %1756 = vmatprep.subr.bf16.mxu0 0
    %1757 = vmatpush1.bf16.msra.mxu0 0
    %1758 = vmatprep.subr.bf16.mxu0 0
    %1759 = vmatpush1.bf16.msra.mxu0 0
    %1760 = vmatprep.subr.bf16.mxu0 0
    %1761 = vmatpush1.bf16.msra.mxu0 0
    %1762 = vmatprep.subr.bf16.mxu0 0
    %1763 = vmatpush1.bf16.msra.mxu0 %v1743
    %1764 = vmatprep.subr.bf16.mxu0 0
    %1765 = vmatpush2.bf16.msra.mxu0 0
    %1766 = vmatprep.subr.bf16.mxu0 0
    %1767 = vmatpush2.bf16.msra.mxu0 0
    %1768 = vmatprep.subr.bf16.mxu0 0
    %1769 = vmatpush2.bf16.msra.mxu0 0
    %1770 = vmatprep.subr.bf16.mxu0 0
    %1771 = vmatpush2.bf16.msra.mxu0 0
    %1772 = vmatprep.subr.bf16.mxu0 0
    %1773 = vmatpush2.bf16.msra.mxu0 0
    %1774 = vmatprep.subr.bf16.mxu0 0
    %1775 = vmatpush2.bf16.msra.mxu0 0
    %1776 = vmatprep.subr.bf16.mxu0 0
    %1777 = vmatpush2.bf16.msra.mxu0 0
    %1778 = vmatprep.subr.bf16.mxu0 0
    %1779 = vmatpush2.bf16.msra.mxu0 0
    %1780 = vmatprep.mubr.bf16.mxu0 0
    %1781 = vmatmul.mubr.bf16.gmra.mxu0 %v1746
    %v1782 = vpop.f32.mrf.mxu0
    %v1783 = vadd.f32 0.0, %v1782
    %v1784 = vpop.f32.mrf.mxu0
    %v1785 = vpop.f32.mrf.mxu0
    %v1786 = vadd.f32 0.0, %v1785
    %v1787 = vpop.f32.mrf.mxu0
    %1788 = vdwg.mxu0
    %v1789 = vrcp.pop %v1737
    %v1790 = vrcp.pop %v1740
    %v1791 = vmul.f32 %v1783, %v1789
    %v1792 = vmul.f32 %v1786, %v1790
    %1795 = vrot.lane.b32.xlu0 %v1551, 8
    %v1796 = vpop.permute.xlu0 %1795
    %1797 = vrot.lane.b32.xlu0 %v1552, 8
    %v1798 = vpop.permute.xlu0 %1797
    %1803 = vrot.lane.b32.xlu0 %v1670, 16
    %v1804 = vpop.permute.xlu0 %1803
    %1805 = vrot.lane.b32.xlu0 %v1671, 16
    %v1806 = vpop.permute.xlu0 %1805
    %1811 = vrot.lane.b32.xlu0 %v1791, 24
    %v1812 = vpop.permute.xlu0 %1811
    %1813 = vrot.lane.b32.xlu0 %v1792, 24
    %v1814 = vpop.permute.xlu0 %1813
    %v1817 = vsel %vm352, %v1430, %v1796
    %v1818 = vsel %vm352, %v1431, %v1798
    %v1819 = vsel %vm401, %v1817, %v1804
    %v1820 = vsel %vm401, %v1818, %v1806
    %v1821 = vsel %vm862, %v1819, %v1812
    %v1822 = vsel %vm862, %v1820, %v1814
    %v1823 = vpack.c.bf16 %v1822, %v1821
    %v1828 = vunpack.c.l.b16 %v1259
    %v1829 = vunpack.c.l.b16 %v1260
    %v1830 = vunpack.c.l.b16 %v1261
    %v1831 = vunpack.c.l.b16 %v1262
    %v1832 = vpack.c.b16 %v1829, %v1828
    %v1833 = vpack.c.b16 %v1831, %v1830
    %v1837 = vsel %vm212, %v1823, 0
    %1839 = vmatprep.subr.bf16.mxu0 0
    %1840 = vmatpush1.bf16.msra.mxu0 0
    %1841 = vmatprep.subr.bf16.mxu0 0
    %1842 = vmatpush1.bf16.msra.mxu0 0
    %1843 = vmatprep.subr.bf16.mxu0 0
    %1844 = vmatpush1.bf16.msra.mxu0 0
    %1845 = vmatprep.subr.bf16.mxu0 0
    %1846 = vmatpush1.bf16.msra.mxu0 0
    %1847 = vmatprep.subr.bf16.mxu0 0
    %1848 = vmatpush1.bf16.msra.mxu0 0
    %1849 = vmatprep.subr.bf16.mxu0 0
    %1850 = vmatpush1.bf16.msra.mxu0 0
    %1851 = vmatprep.subr.bf16.mxu0 0
    %1852 = vmatpush1.bf16.msra.mxu0 %v1833
    %1853 = vmatprep.subr.bf16.mxu0 0
    %1854 = vmatpush1.bf16.msra.mxu0 %v1832
    %1855 = vmatprep.subr.bf16.mxu0 0
    %1856 = vmatpush2.bf16.msra.mxu0 0
    %1857 = vmatprep.subr.bf16.mxu0 0
    %1858 = vmatpush2.bf16.msra.mxu0 0
    %1859 = vmatprep.subr.bf16.mxu0 0
    %1860 = vmatpush2.bf16.msra.mxu0 0
    %1861 = vmatprep.subr.bf16.mxu0 0
    %1862 = vmatpush2.bf16.msra.mxu0 0
    %1863 = vmatprep.subr.bf16.mxu0 0
    %1864 = vmatpush2.bf16.msra.mxu0 0
    %1865 = vmatprep.subr.bf16.mxu0 0
    %1866 = vmatpush2.bf16.msra.mxu0 0
    %1867 = vmatprep.subr.bf16.mxu0 0
    %1868 = vmatpush2.bf16.msra.mxu0 0
    %1869 = vmatprep.subr.bf16.mxu0 0
    %1870 = vmatpush2.bf16.msra.mxu0 0
    %1871 = vmatprep.mubr.bf16.mxu0 0
    %1872 = vmatmul.mubr.bf16.gmra.mxu0 %v1837
    %v1873 = vpop.f32.mrf.mxu0
    %v1874 = vadd.f32 0.0, %v1873
    %v1875 = vpop.f32.mrf.mxu0
    %v1876 = vpop.f32.mrf.mxu0
    %v1877 = vadd.f32 0.0, %v1876
    %v1878 = vpop.f32.mrf.mxu0
    %1879 = vdwg.mxu0
    %v1880 = vadd.f32 %v1167, %v1874
    %v1881 = vadd.f32 %v1170, %v1877
    %v1882 = vld [vmem:[%s16] sm:$0x1]
    %v1883 = vmul.f32 %v1880, %v1880
    %v1884 = vmul.f32 %v1881, %v1881
    %v1885 = vsel %vm212, %v1883, 0.0
    %1886 = vadd.xlane.f32.xlu0 %v1885
    %v1887 = vpop.xlane.xlu0 %1886
    %v1888 = vsel %vm212, %v1884, 0.0
    %1889 = vadd.xlane.f32.xlu0 %v1888
    %v1890 = vpop.xlane.xlu0 %1889
    %v1891 = vmul.f32 %v1887, %v219
    %v1892 = vmul.f32 %v1890, %v219
    %v1893 = vadd.f32 %v1891, 1e-06
    %v1894 = vadd.f32 %v1892, 1e-06
    %v1895 = vrsqrt.pop %v1893
    %v1896 = vrsqrt.pop %v1894
    %v1897 = vmul.f32 %v1880, %v1895
    %v1898 = vmul.f32 %v1881, %v1896
    %v1900 = vlaneseq
    %v1901 = vshrl.u32 %v1900, 7
    %v1902 = vsub.s32 0, %v1901
    %v1903 = vrot.slane %v1882, %v1902
    %v1905 = vmul.f32 %v1897, %v1903
    %v1906 = vmul.f32 %v1898, %v1903
    %v1907 = vpack.c.bf16 %v1906, %v1905
    %v1908 = vld [vmem:[%s17] sm:$0xf]
    %v1909 = vld [vmem:[%s17 + $0x4] sm:$0xf]
    %v1910 = vld [vmem:[%s17 + $0x8] sm:$0xf]
    %v1911 = vld [vmem:[%s17 + $0xc] sm:$0xf]
    %v1916 = vunpack.c.l.b16 %v1908
    %v1917 = vunpack.c.l.b16 %v1909
    %v1918 = vunpack.c.l.b16 %v1910
    %v1919 = vunpack.c.l.b16 %v1911
    %v1920 = vpack.c.b16 %v1917, %v1916
    %v1921 = vpack.c.b16 %v1919, %v1918
    %v1925 = vsel %vm212, %v1907, 0
    %1927 = vmatprep.subr.bf16.mxu0 0
    %1928 = vmatpush1.bf16.msra.mxu0 0
    %1929 = vmatprep.subr.bf16.mxu0 0
    %1930 = vmatpush1.bf16.msra.mxu0 0
    %1931 = vmatprep.subr.bf16.mxu0 0
    %1932 = vmatpush1.bf16.msra.mxu0 0
    %1933 = vmatprep.subr.bf16.mxu0 0
    %1934 = vmatpush1.bf16.msra.mxu0 0
    %1935 = vmatprep.subr.bf16.mxu0 0
    %1936 = vmatpush1.bf16.msra.mxu0 0
    %1937 = vmatprep.subr.bf16.mxu0 0
    %1938 = vmatpush1.bf16.msra.mxu0 0
    %1939 = vmatprep.subr.bf16.mxu0 0
    %1940 = vmatpush1.bf16.msra.mxu0 %v1921
    %1941 = vmatprep.subr.bf16.mxu0 0
    %1942 = vmatpush1.bf16.msra.mxu0 %v1920
    %1943 = vmatprep.subr.bf16.mxu0 0
    %1944 = vmatpush2.bf16.msra.mxu0 0
    %1945 = vmatprep.subr.bf16.mxu0 0
    %1946 = vmatpush2.bf16.msra.mxu0 0
    %1947 = vmatprep.subr.bf16.mxu0 0
    %1948 = vmatpush2.bf16.msra.mxu0 0
    %1949 = vmatprep.subr.bf16.mxu0 0
    %1950 = vmatpush2.bf16.msra.mxu0 0
    %1951 = vmatprep.subr.bf16.mxu0 0
    %1952 = vmatpush2.bf16.msra.mxu0 0
    %1953 = vmatprep.subr.bf16.mxu0 0
    %1954 = vmatpush2.bf16.msra.mxu0 0
    %1955 = vmatprep.subr.bf16.mxu0 0
    %1956 = vmatpush2.bf16.msra.mxu0 0
    %1957 = vmatprep.subr.bf16.mxu0 0
    %1958 = vmatpush2.bf16.msra.mxu0 0
    %1959 = vmatprep.mubr.bf16.mxu0 0
    %1960 = vmatmul.mubr.bf16.gmra.mxu0 %v1925
    %v1961 = vpop.f32.mrf.mxu0
    %v1962 = vadd.f32 0.0, %v1961
    %v1963 = vpop.f32.mrf.mxu0
    %v1964 = vpop.f32.mrf.mxu0
    %v1965 = vadd.f32 0.0, %v1964
    %v1966 = vpop.f32.mrf.mxu0
    %1967 = vdwg.mxu0
    %v1968 = vpack.c.bf16 %v1116, %v1115
    %v1969 = vld [vmem:[%s18] sm:$0xf]
    %v1970 = vld [vmem:[%s18 + $0x4] sm:$0xf]
    %v1971 = vld [vmem:[%s18 + $0x8] sm:$0xf]
    %v1972 = vld [vmem:[%s18 + $0xc] sm:$0xf]
    %v1977 = vunpack.c.l.b16 %v1969
    %v1978 = vunpack.c.l.b16 %v1970
    %v1979 = vunpack.c.l.b16 %v1971
    %v1980 = vunpack.c.l.b16 %v1972
    %v1981 = vpack.c.b16 %v1978, %v1977
    %v1982 = vpack.c.b16 %v1980, %v1979
    %v1986 = vsel %vm212, %v1968, 0
    %1988 = vmatprep.subr.bf16.mxu0 0
    %1989 = vmatpush1.bf16.msra.mxu0 0
    %1990 = vmatprep.subr.bf16.mxu0 0
    %1991 = vmatpush1.bf16.msra.mxu0 0
    %1992 = vmatprep.subr.bf16.mxu0 0
    %1993 = vmatpush1.bf16.msra.mxu0 0
    %1994 = vmatprep.subr.bf16.mxu0 0
    %1995 = vmatpush1.bf16.msra.mxu0 0
    %1996 = vmatprep.subr.bf16.mxu0 0
    %1997 = vmatpush1.bf16.msra.mxu0 0
    %1998 = vmatprep.subr.bf16.mxu0 0
    %1999 = vmatpush1.bf16.msra.mxu0 0
    %2000 = vmatprep.subr.bf16.mxu0 0
    %2001 = vmatpush1.bf16.msra.mxu0 %v1982
    %2002 = vmatprep.subr.bf16.mxu0 0
    %2003 = vmatpush1.bf16.msra.mxu0 %v1981
    %2004 = vmatprep.subr.bf16.mxu0 0
    %2005 = vmatpush2.bf16.msra.mxu0 0
    %2006 = vmatprep.subr.bf16.mxu0 0
    %2007 = vmatpush2.bf16.msra.mxu0 0
    %2008 = vmatprep.subr.bf16.mxu0 0
    %2009 = vmatpush2.bf16.msra.mxu0 0
    %2010 = vmatprep.subr.bf16.mxu0 0
    %2011 = vmatpush2.bf16.msra.mxu0 0
    %2012 = vmatprep.subr.bf16.mxu0 0
    %2013 = vmatpush2.bf16.msra.mxu0 0
    %2014 = vmatprep.subr.bf16.mxu0 0
    %2015 = vmatpush2.bf16.msra.mxu0 0
    %2016 = vmatprep.subr.bf16.mxu0 0
    %2017 = vmatpush2.bf16.msra.mxu0 0
    %2018 = vmatprep.subr.bf16.mxu0 0
    %2019 = vmatpush2.bf16.msra.mxu0 0
    %2020 = vmatprep.mubr.bf16.mxu0 0
    %2021 = vmatmul.mubr.bf16.gmra.mxu0 %v1986
    %v2022 = vpop.f32.mrf.mxu0
    %v2023 = vadd.f32 0.0, %v2022
    %v2024 = vpop.f32.mrf.mxu0
    %v2025 = vpop.f32.mrf.mxu0
    %v2026 = vadd.f32 0.0, %v2025
    %v2027 = vpop.f32.mrf.mxu0
    %2028 = vdwg.mxu0
    %v2029 = vld [vmem:[%s19] sm:$0xf]
    %v2030 = vld [vmem:[%s19 + $0x4] sm:$0xf]
    %v2031 = vld [vmem:[%s19 + $0x8] sm:$0xf]
    %v2032 = vld [vmem:[%s19 + $0xc] sm:$0xf]
    %v2033 = vld [vmem:[%s4] sm:$0xff]
    %v2034 = vld [vmem:[%s4 + $0x8] sm:$0xff]
    %2035 = vxpose.xlu0.b32.start [1/16] %v2023, 128
    %2036 = vxpose.xlu0.b32.cont [2/16] %v2026, 128
    %2037 = vxpose.xlu0.b32.cont [3/16] 0.0, 128
    %2038 = vxpose.xlu0.b32.cont [4/16] 0.0, 128
    %2039 = vxpose.xlu0.b32.cont [5/16] 0.0, 128
    %2040 = vxpose.xlu0.b32.cont [6/16] 0.0, 128
    %2041 = vxpose.xlu0.b32.cont [7/16] 0.0, 128
    %2042 = vxpose.xlu0.b32.cont [8/16] 0.0, 128
    %2043 = vxpose.xlu0.b32.cont [9/16] 0.0, 128
    %2044 = vxpose.xlu0.b32.cont [10/16] 0.0, 128
    %2045 = vxpose.xlu0.b32.cont [11/16] 0.0, 128
    %2046 = vxpose.xlu0.b32.cont [12/16] 0.0, 128
    %2047 = vxpose.xlu0.b32.cont [13/16] 0.0, 128
    %2048 = vxpose.xlu0.b32.cont [14/16] 0.0, 128
    %2049 = vxpose.xlu0.b32.cont [15/16] 0.0, 128
    %2050 = vxpose.xlu0.b32.end [16/16] 0.0, 128
    %v2051 = vpop.trf.xlu0
    %v2052 = vpop.trf.xlu0
    %v2053 = vpop.trf.xlu0
    %v2054 = vpop.trf.xlu0
    %v2055 = vpop.trf.xlu0
    %v2056 = vpop.trf.xlu0
    %v2057 = vpop.trf.xlu0
    %v2058 = vpop.trf.xlu0
    %v2059 = vpop.trf.xlu0
    %v2060 = vpop.trf.xlu0
    %v2061 = vpop.trf.xlu0
    %v2062 = vpop.trf.xlu0
    %v2063 = vpop.trf.xlu0
    %v2064 = vpop.trf.xlu0
    %v2065 = vpop.trf.xlu0
    %v2066 = vpop.trf.xlu0
    %v2067 = vpack.c.bf16 %v2052, %v2051
    %v2068 = vpack.c.bf16 %v2054, %v2053
    %v2069 = vpack.c.bf16 %v1965, %v1962
    %v2070 = vpack.c.bf16 %v2026, %v2023
    %v2072 = vsel %vm352, %v2069, 0
    %v2075 = vsel %vm356, %v2067, 0
    %2077 = vmatprep.subr.bf16.mxu0 0
    %2078 = vmatpush1.bf16.msra.mxu0 0
    %2079 = vmatprep.subr.bf16.mxu0 0
    %2080 = vmatpush1.bf16.msra.mxu0 0
    %2081 = vmatprep.subr.bf16.mxu0 0
    %2082 = vmatpush1.bf16.msra.mxu0 0
    %2083 = vmatprep.subr.bf16.mxu0 0
    %2084 = vmatpush1.bf16.msra.mxu0 0
    %2085 = vmatprep.subr.bf16.mxu0 0
    %2086 = vmatpush1.bf16.msra.mxu0 0
    %2087 = vmatprep.subr.bf16.mxu0 0
    %2088 = vmatpush1.bf16.msra.mxu0 0
    %2089 = vmatprep.subr.bf16.mxu0 0
    %2090 = vmatpush1.bf16.msra.mxu0 0
    %2091 = vmatprep.subr.bf16.mxu0 0
    %2092 = vmatpush1.bf16.msra.mxu0 %v2075
    %2093 = vmatprep.subr.bf16.mxu0 0
    %2094 = vmatpush2.bf16.msra.mxu0 0
    %2095 = vmatprep.subr.bf16.mxu0 0
    %2096 = vmatpush2.bf16.msra.mxu0 0
    %2097 = vmatprep.subr.bf16.mxu0 0
    %2098 = vmatpush2.bf16.msra.mxu0 0
    %2099 = vmatprep.subr.bf16.mxu0 0
    %2100 = vmatpush2.bf16.msra.mxu0 0
    %2101 = vmatprep.subr.bf16.mxu0 0
    %2102 = vmatpush2.bf16.msra.mxu0 0
    %2103 = vmatprep.subr.bf16.mxu0 0
    %2104 = vmatpush2.bf16.msra.mxu0 0
    %2105 = vmatprep.subr.bf16.mxu0 0
    %2106 = vmatpush2.bf16.msra.mxu0 0
    %2107 = vmatprep.subr.bf16.mxu0 0
    %2108 = vmatpush2.bf16.msra.mxu0 0
    %2109 = vmatprep.mubr.bf16.mxu0 0
    %2110 = vmatmul.mubr.bf16.gmra.mxu0 %v2072
    %v2111 = vpop.f32.mrf.mxu0
    %v2112 = vadd.f32 %v2033, %v2111
    %v2113 = vpop.f32.mrf.mxu0
    %v2114 = vpop.f32.mrf.mxu0
    %v2115 = vadd.f32 %v2034, %v2114
    %v2116 = vpop.f32.mrf.mxu0
    %2117 = vdwg.mxu0
    %v2118 = vsel %vm401, %v2112, -inf
    %2119 = vmax.xlane.f32.xlu0 %v2118
    %v2120 = vpop.xlane.xlu0 %2119
    %v2121 = vsel %vm401, %v2115, -inf
    %2122 = vmax.xlane.f32.xlu0 %v2121
    %v2123 = vpop.xlane.xlu0 %2122
    %v2124 = vsub.f32 %v2112, %v2120
    %v2125 = vsub.f32 %v2115, %v2123
    %v2126 = vmul.f32 %v2124, 1.442695
    %v2127 = vpow.pop %v2126
    %v2128 = vmul.f32 %v2125, 1.442695
    %v2129 = vpow.pop %v2128
    %v2130 = vsel %vm401, %v2127, 0.0
    %2131 = vadd.xlane.f32.xlu0 %v2130
    %v2132 = vpop.xlane.xlu0 %2131
    %v2133 = vsel %vm401, %v2129, 0.0
    %2134 = vadd.xlane.f32.xlu0 %v2133
    %v2135 = vpop.xlane.xlu0 %2134
    %v2136 = vpack.c.bf16 %v2129, %v2127
    %2138 = vrot.lane.b32.xlu0 %v2070, 96
    %v2139 = vpop.permute.xlu0 %2138
    %v2142 = vsel %vm401, %v2136, 0
    %2144 = vmatprep.subr.bf16.mxu0 0
    %2145 = vmatpush1.bf16.msra.mxu0 0
    %2146 = vmatprep.subr.bf16.mxu0 0
    %2147 = vmatpush1.bf16.msra.mxu0 0
    %2148 = vmatprep.subr.bf16.mxu0 0
    %2149 = vmatpush1.bf16.msra.mxu0 0
    %2150 = vmatprep.subr.bf16.mxu0 0
    %2151 = vmatpush1.bf16.msra.mxu0 0
    %2152 = vmatprep.subr.bf16.mxu0 0
    %2153 = vmatpush1.bf16.msra.mxu0 0
    %2154 = vmatprep.subr.bf16.mxu0 0
    %2155 = vmatpush1.bf16.msra.mxu0 0
    %2156 = vmatprep.subr.bf16.mxu0 0
    %2157 = vmatpush1.bf16.msra.mxu0 0
    %2158 = vmatprep.subr.bf16.mxu0 0
    %2159 = vmatpush1.bf16.msra.mxu0 %v2139
    %2160 = vmatprep.subr.bf16.mxu0 0
    %2161 = vmatpush2.bf16.msra.mxu0 0
    %2162 = vmatprep.subr.bf16.mxu0 0
    %2163 = vmatpush2.bf16.msra.mxu0 0
    %2164 = vmatprep.subr.bf16.mxu0 0
    %2165 = vmatpush2.bf16.msra.mxu0 0
    %2166 = vmatprep.subr.bf16.mxu0 0
    %2167 = vmatpush2.bf16.msra.mxu0 0
    %2168 = vmatprep.subr.bf16.mxu0 0
    %2169 = vmatpush2.bf16.msra.mxu0 0
    %2170 = vmatprep.subr.bf16.mxu0 0
    %2171 = vmatpush2.bf16.msra.mxu0 0
    %2172 = vmatprep.subr.bf16.mxu0 0
    %2173 = vmatpush2.bf16.msra.mxu0 0
    %2174 = vmatprep.subr.bf16.mxu0 0
    %2175 = vmatpush2.bf16.msra.mxu0 0
    %2176 = vmatprep.mubr.bf16.mxu0 0
    %2177 = vmatmul.mubr.bf16.gmra.mxu0 %v2142
    %v2178 = vpop.f32.mrf.mxu0
    %v2179 = vadd.f32 0.0, %v2178
    %v2180 = vpop.f32.mrf.mxu0
    %v2181 = vpop.f32.mrf.mxu0
    %v2182 = vadd.f32 0.0, %v2181
    %v2183 = vpop.f32.mrf.mxu0
    %2184 = vdwg.mxu0
    %v2185 = vrcp.pop %v2132
    %v2186 = vrcp.pop %v2135
    %v2187 = vmul.f32 %v2179, %v2185
    %v2188 = vmul.f32 %v2182, %v2186
    %2190 = vrot.lane.b32.xlu0 %v2069, 120
    %v2191 = vpop.permute.xlu0 %2190
    %v2193 = vrot.slane %v2067, 4
    %v2195 = vsel %vm352, %v2191, 0
    %v2198 = vsel %vm356, %v2193, 0
    %2200 = vmatprep.subr.bf16.mxu0 0
    %2201 = vmatpush1.bf16.msra.mxu0 0
    %2202 = vmatprep.subr.bf16.mxu0 0
    %2203 = vmatpush1.bf16.msra.mxu0 0
    %2204 = vmatprep.subr.bf16.mxu0 0
    %2205 = vmatpush1.bf16.msra.mxu0 0
    %2206 = vmatprep.subr.bf16.mxu0 0
    %2207 = vmatpush1.bf16.msra.mxu0 0
    %2208 = vmatprep.subr.bf16.mxu0 0
    %2209 = vmatpush1.bf16.msra.mxu0 0
    %2210 = vmatprep.subr.bf16.mxu0 0
    %2211 = vmatpush1.bf16.msra.mxu0 0
    %2212 = vmatprep.subr.bf16.mxu0 0
    %2213 = vmatpush1.bf16.msra.mxu0 0
    %2214 = vmatprep.subr.bf16.mxu0 0
    %2215 = vmatpush1.bf16.msra.mxu0 %v2198
    %2216 = vmatprep.subr.bf16.mxu0 0
    %2217 = vmatpush2.bf16.msra.mxu0 0
    %2218 = vmatprep.subr.bf16.mxu0 0
    %2219 = vmatpush2.bf16.msra.mxu0 0
    %2220 = vmatprep.subr.bf16.mxu0 0
    %2221 = vmatpush2.bf16.msra.mxu0 0
    %2222 = vmatprep.subr.bf16.mxu0 0
    %2223 = vmatpush2.bf16.msra.mxu0 0
    %2224 = vmatprep.subr.bf16.mxu0 0
    %2225 = vmatpush2.bf16.msra.mxu0 0
    %2226 = vmatprep.subr.bf16.mxu0 0
    %2227 = vmatpush2.bf16.msra.mxu0 0
    %2228 = vmatprep.subr.bf16.mxu0 0
    %2229 = vmatpush2.bf16.msra.mxu0 0
    %2230 = vmatprep.subr.bf16.mxu0 0
    %2231 = vmatpush2.bf16.msra.mxu0 0
    %2232 = vmatprep.mubr.bf16.mxu0 0
    %2233 = vmatmul.mubr.bf16.gmra.mxu0 %v2195
    %v2234 = vpop.f32.mrf.mxu0
    %v2235 = vadd.f32 %v2033, %v2234
    %v2236 = vpop.f32.mrf.mxu0
    %v2237 = vpop.f32.mrf.mxu0
    %v2238 = vadd.f32 %v2034, %v2237
    %v2239 = vpop.f32.mrf.mxu0
    %2240 = vdwg.mxu0
    %v2241 = vsel %vm401, %v2235, -inf
    %2242 = vmax.xlane.f32.xlu0 %v2241
    %v2243 = vpop.xlane.xlu0 %2242
    %v2244 = vsel %vm401, %v2238, -inf
    %2245 = vmax.xlane.f32.xlu0 %v2244
    %v2246 = vpop.xlane.xlu0 %2245
    %v2247 = vsub.f32 %v2235, %v2243
    %v2248 = vsub.f32 %v2238, %v2246
    %v2249 = vmul.f32 %v2247, 1.442695
    %v2250 = vpow.pop %v2249
    %v2251 = vmul.f32 %v2248, 1.442695
    %v2252 = vpow.pop %v2251
    %v2253 = vsel %vm401, %v2250, 0.0
    %2254 = vadd.xlane.f32.xlu0 %v2253
    %v2255 = vpop.xlane.xlu0 %2254
    %v2256 = vsel %vm401, %v2252, 0.0
    %2257 = vadd.xlane.f32.xlu0 %v2256
    %v2258 = vpop.xlane.xlu0 %2257
    %v2259 = vpack.c.bf16 %v2252, %v2250
    %2260 = vrot.lane.b32.xlu0 %v2070, 88
    %v2261 = vpop.permute.xlu0 %2260
    %v2264 = vsel %vm401, %v2259, 0
    %2266 = vmatprep.subr.bf16.mxu0 0
    %2267 = vmatpush1.bf16.msra.mxu0 0
    %2268 = vmatprep.subr.bf16.mxu0 0
    %2269 = vmatpush1.bf16.msra.mxu0 0
    %2270 = vmatprep.subr.bf16.mxu0 0
    %2271 = vmatpush1.bf16.msra.mxu0 0
    %2272 = vmatprep.subr.bf16.mxu0 0
    %2273 = vmatpush1.bf16.msra.mxu0 0
    %2274 = vmatprep.subr.bf16.mxu0 0
    %2275 = vmatpush1.bf16.msra.mxu0 0
    %2276 = vmatprep.subr.bf16.mxu0 0
    %2277 = vmatpush1.bf16.msra.mxu0 0
    %2278 = vmatprep.subr.bf16.mxu0 0
    %2279 = vmatpush1.bf16.msra.mxu0 0
    %2280 = vmatprep.subr.bf16.mxu0 0
    %2281 = vmatpush1.bf16.msra.mxu0 %v2261
    %2282 = vmatprep.subr.bf16.mxu0 0
    %2283 = vmatpush2.bf16.msra.mxu0 0
    %2284 = vmatprep.subr.bf16.mxu0 0
    %2285 = vmatpush2.bf16.msra.mxu0 0
    %2286 = vmatprep.subr.bf16.mxu0 0
    %2287 = vmatpush2.bf16.msra.mxu0 0
    %2288 = vmatprep.subr.bf16.mxu0 0
    %2289 = vmatpush2.bf16.msra.mxu0 0
    %2290 = vmatprep.subr.bf16.mxu0 0
    %2291 = vmatpush2.bf16.msra.mxu0 0
    %2292 = vmatprep.subr.bf16.mxu0 0
    %2293 = vmatpush2.bf16.msra.mxu0 0
    %2294 = vmatprep.subr.bf16.mxu0 0
    %2295 = vmatpush2.bf16.msra.mxu0 0
    %2296 = vmatprep.subr.bf16.mxu0 0
    %2297 = vmatpush2.bf16.msra.mxu0 0
    %2298 = vmatprep.mubr.bf16.mxu0 0
    %2299 = vmatmul.mubr.bf16.gmra.mxu0 %v2264
    %v2300 = vpop.f32.mrf.mxu0
    %v2301 = vadd.f32 0.0, %v2300
    %v2302 = vpop.f32.mrf.mxu0
    %v2303 = vpop.f32.mrf.mxu0
    %v2304 = vadd.f32 0.0, %v2303
    %v2305 = vpop.f32.mrf.mxu0
    %2306 = vdwg.mxu0
    %v2307 = vrcp.pop %v2255
    %v2308 = vrcp.pop %v2258
    %v2309 = vmul.f32 %v2301, %v2307
    %v2310 = vmul.f32 %v2304, %v2308
    %2311 = vrot.lane.b32.xlu0 %v2069, 112
    %v2312 = vpop.permute.xlu0 %2311
    %v2314 = vsel %vm352, %v2312, 0
    %v2317 = vsel %vm356, %v2068, 0
    %2319 = vmatprep.subr.bf16.mxu0 0
    %2320 = vmatpush1.bf16.msra.mxu0 0
    %2321 = vmatprep.subr.bf16.mxu0 0
    %2322 = vmatpush1.bf16.msra.mxu0 0
    %2323 = vmatprep.subr.bf16.mxu0 0
    %2324 = vmatpush1.bf16.msra.mxu0 0
    %2325 = vmatprep.subr.bf16.mxu0 0
    %2326 = vmatpush1.bf16.msra.mxu0 0
    %2327 = vmatprep.subr.bf16.mxu0 0
    %2328 = vmatpush1.bf16.msra.mxu0 0
    %2329 = vmatprep.subr.bf16.mxu0 0
    %2330 = vmatpush1.bf16.msra.mxu0 0
    %2331 = vmatprep.subr.bf16.mxu0 0
    %2332 = vmatpush1.bf16.msra.mxu0 0
    %2333 = vmatprep.subr.bf16.mxu0 0
    %2334 = vmatpush1.bf16.msra.mxu0 %v2317
    %2335 = vmatprep.subr.bf16.mxu0 0
    %2336 = vmatpush2.bf16.msra.mxu0 0
    %2337 = vmatprep.subr.bf16.mxu0 0
    %2338 = vmatpush2.bf16.msra.mxu0 0
    %2339 = vmatprep.subr.bf16.mxu0 0
    %2340 = vmatpush2.bf16.msra.mxu0 0
    %2341 = vmatprep.subr.bf16.mxu0 0
    %2342 = vmatpush2.bf16.msra.mxu0 0
    %2343 = vmatprep.subr.bf16.mxu0 0
    %2344 = vmatpush2.bf16.msra.mxu0 0
    %2345 = vmatprep.subr.bf16.mxu0 0
    %2346 = vmatpush2.bf16.msra.mxu0 0
    %2347 = vmatprep.subr.bf16.mxu0 0
    %2348 = vmatpush2.bf16.msra.mxu0 0
    %2349 = vmatprep.subr.bf16.mxu0 0
    %2350 = vmatpush2.bf16.msra.mxu0 0
    %2351 = vmatprep.mubr.bf16.mxu0 0
    %2352 = vmatmul.mubr.bf16.gmra.mxu0 %v2314
    %v2353 = vpop.f32.mrf.mxu0
    %v2354 = vadd.f32 %v2033, %v2353
    %v2355 = vpop.f32.mrf.mxu0
    %v2356 = vpop.f32.mrf.mxu0
    %v2357 = vadd.f32 %v2034, %v2356
    %v2358 = vpop.f32.mrf.mxu0
    %2359 = vdwg.mxu0
    %v2360 = vsel %vm401, %v2354, -inf
    %2361 = vmax.xlane.f32.xlu0 %v2360
    %v2362 = vpop.xlane.xlu0 %2361
    %v2363 = vsel %vm401, %v2357, -inf
    %2364 = vmax.xlane.f32.xlu0 %v2363
    %v2365 = vpop.xlane.xlu0 %2364
    %v2366 = vsub.f32 %v2354, %v2362
    %v2367 = vsub.f32 %v2357, %v2365
    %v2368 = vmul.f32 %v2366, 1.442695
    %v2369 = vpow.pop %v2368
    %v2370 = vmul.f32 %v2367, 1.442695
    %v2371 = vpow.pop %v2370
    %v2372 = vsel %vm401, %v2369, 0.0
    %2373 = vadd.xlane.f32.xlu0 %v2372
    %v2374 = vpop.xlane.xlu0 %2373
    %v2375 = vsel %vm401, %v2371, 0.0
    %2376 = vadd.xlane.f32.xlu0 %v2375
    %v2377 = vpop.xlane.xlu0 %2376
    %v2378 = vpack.c.bf16 %v2371, %v2369
    %2379 = vrot.lane.b32.xlu0 %v2070, 80
    %v2380 = vpop.permute.xlu0 %2379
    %v2383 = vsel %vm401, %v2378, 0
    %2385 = vmatprep.subr.bf16.mxu0 0
    %2386 = vmatpush1.bf16.msra.mxu0 0
    %2387 = vmatprep.subr.bf16.mxu0 0
    %2388 = vmatpush1.bf16.msra.mxu0 0
    %2389 = vmatprep.subr.bf16.mxu0 0
    %2390 = vmatpush1.bf16.msra.mxu0 0
    %2391 = vmatprep.subr.bf16.mxu0 0
    %2392 = vmatpush1.bf16.msra.mxu0 0
    %2393 = vmatprep.subr.bf16.mxu0 0
    %2394 = vmatpush1.bf16.msra.mxu0 0
    %2395 = vmatprep.subr.bf16.mxu0 0
    %2396 = vmatpush1.bf16.msra.mxu0 0
    %2397 = vmatprep.subr.bf16.mxu0 0
    %2398 = vmatpush1.bf16.msra.mxu0 0
    %2399 = vmatprep.subr.bf16.mxu0 0
    %2400 = vmatpush1.bf16.msra.mxu0 %v2380
    %2401 = vmatprep.subr.bf16.mxu0 0
    %2402 = vmatpush2.bf16.msra.mxu0 0
    %2403 = vmatprep.subr.bf16.mxu0 0
    %2404 = vmatpush2.bf16.msra.mxu0 0
    %2405 = vmatprep.subr.bf16.mxu0 0
    %2406 = vmatpush2.bf16.msra.mxu0 0
    %2407 = vmatprep.subr.bf16.mxu0 0
    %2408 = vmatpush2.bf16.msra.mxu0 0
    %2409 = vmatprep.subr.bf16.mxu0 0
    %2410 = vmatpush2.bf16.msra.mxu0 0
    %2411 = vmatprep.subr.bf16.mxu0 0
    %2412 = vmatpush2.bf16.msra.mxu0 0
    %2413 = vmatprep.subr.bf16.mxu0 0
    %2414 = vmatpush2.bf16.msra.mxu0 0
    %2415 = vmatprep.subr.bf16.mxu0 0
    %2416 = vmatpush2.bf16.msra.mxu0 0
    %2417 = vmatprep.mubr.bf16.mxu0 0
    %2418 = vmatmul.mubr.bf16.gmra.mxu0 %v2383
    %v2419 = vpop.f32.mrf.mxu0
    %v2420 = vadd.f32 0.0, %v2419
    %v2421 = vpop.f32.mrf.mxu0
    %v2422 = vpop.f32.mrf.mxu0
    %v2423 = vadd.f32 0.0, %v2422
    %v2424 = vpop.f32.mrf.mxu0
    %2425 = vdwg.mxu0
    %v2426 = vrcp.pop %v2374
    %v2427 = vrcp.pop %v2377
    %v2428 = vmul.f32 %v2420, %v2426
    %v2429 = vmul.f32 %v2423, %v2427
    %2430 = vrot.lane.b32.xlu0 %v2069, 104
    %v2431 = vpop.permute.xlu0 %2430
    %v2433 = vrot.slane %v2068, 4
    %v2435 = vsel %vm352, %v2431, 0
    %v2438 = vsel %vm356, %v2433, 0
    %2440 = vmatprep.subr.bf16.mxu0 0
    %2441 = vmatpush1.bf16.msra.mxu0 0
    %2442 = vmatprep.subr.bf16.mxu0 0
    %2443 = vmatpush1.bf16.msra.mxu0 0
    %2444 = vmatprep.subr.bf16.mxu0 0
    %2445 = vmatpush1.bf16.msra.mxu0 0
    %2446 = vmatprep.subr.bf16.mxu0 0
    %2447 = vmatpush1.bf16.msra.mxu0 0
    %2448 = vmatprep.subr.bf16.mxu0 0
    %2449 = vmatpush1.bf16.msra.mxu0 0
    %2450 = vmatprep.subr.bf16.mxu0 0
    %2451 = vmatpush1.bf16.msra.mxu0 0
    %2452 = vmatprep.subr.bf16.mxu0 0
    %2453 = vmatpush1.bf16.msra.mxu0 0
    %2454 = vmatprep.subr.bf16.mxu0 0
    %2455 = vmatpush1.bf16.msra.mxu0 %v2438
    %2456 = vmatprep.subr.bf16.mxu0 0
    %2457 = vmatpush2.bf16.msra.mxu0 0
    %2458 = vmatprep.subr.bf16.mxu0 0
    %2459 = vmatpush2.bf16.msra.mxu0 0
    %2460 = vmatprep.subr.bf16.mxu0 0
    %2461 = vmatpush2.bf16.msra.mxu0 0
    %2462 = vmatprep.subr.bf16.mxu0 0
    %2463 = vmatpush2.bf16.msra.mxu0 0
    %2464 = vmatprep.subr.bf16.mxu0 0
    %2465 = vmatpush2.bf16.msra.mxu0 0
    %2466 = vmatprep.subr.bf16.mxu0 0
    %2467 = vmatpush2.bf16.msra.mxu0 0
    %2468 = vmatprep.subr.bf16.mxu0 0
    %2469 = vmatpush2.bf16.msra.mxu0 0
    %2470 = vmatprep.subr.bf16.mxu0 0
    %2471 = vmatpush2.bf16.msra.mxu0 0
    %2472 = vmatprep.mubr.bf16.mxu0 0
    %2473 = vmatmul.mubr.bf16.gmra.mxu0 %v2435
    %v2474 = vpop.f32.mrf.mxu0
    %v2475 = vadd.f32 %v2033, %v2474
    %v2476 = vpop.f32.mrf.mxu0
    %v2477 = vpop.f32.mrf.mxu0
    %v2478 = vadd.f32 %v2034, %v2477
    %v2479 = vpop.f32.mrf.mxu0
    %2480 = vdwg.mxu0
    %v2481 = vsel %vm401, %v2475, -inf
    %2482 = vmax.xlane.f32.xlu0 %v2481
    %v2483 = vpop.xlane.xlu0 %2482
    %v2484 = vsel %vm401, %v2478, -inf
    %2485 = vmax.xlane.f32.xlu0 %v2484
    %v2486 = vpop.xlane.xlu0 %2485
    %v2487 = vsub.f32 %v2475, %v2483
    %v2488 = vsub.f32 %v2478, %v2486
    %v2489 = vmul.f32 %v2487, 1.442695
    %v2490 = vpow.pop %v2489
    %v2491 = vmul.f32 %v2488, 1.442695
    %v2492 = vpow.pop %v2491
    %v2493 = vsel %vm401, %v2490, 0.0
    %2494 = vadd.xlane.f32.xlu0 %v2493
    %v2495 = vpop.xlane.xlu0 %2494
    %v2496 = vsel %vm401, %v2492, 0.0
    %2497 = vadd.xlane.f32.xlu0 %v2496
    %v2498 = vpop.xlane.xlu0 %2497
    %v2499 = vpack.c.bf16 %v2492, %v2490
    %2500 = vrot.lane.b32.xlu0 %v2070, 72
    %v2501 = vpop.permute.xlu0 %2500
    %v2504 = vsel %vm401, %v2499, 0
    %2506 = vmatprep.subr.bf16.mxu0 0
    %2507 = vmatpush1.bf16.msra.mxu0 0
    %2508 = vmatprep.subr.bf16.mxu0 0
    %2509 = vmatpush1.bf16.msra.mxu0 0
    %2510 = vmatprep.subr.bf16.mxu0 0
    %2511 = vmatpush1.bf16.msra.mxu0 0
    %2512 = vmatprep.subr.bf16.mxu0 0
    %2513 = vmatpush1.bf16.msra.mxu0 0
    %2514 = vmatprep.subr.bf16.mxu0 0
    %2515 = vmatpush1.bf16.msra.mxu0 0
    %2516 = vmatprep.subr.bf16.mxu0 0
    %2517 = vmatpush1.bf16.msra.mxu0 0
    %2518 = vmatprep.subr.bf16.mxu0 0
    %2519 = vmatpush1.bf16.msra.mxu0 0
    %2520 = vmatprep.subr.bf16.mxu0 0
    %2521 = vmatpush1.bf16.msra.mxu0 %v2501
    %2522 = vmatprep.subr.bf16.mxu0 0
    %2523 = vmatpush2.bf16.msra.mxu0 0
    %2524 = vmatprep.subr.bf16.mxu0 0
    %2525 = vmatpush2.bf16.msra.mxu0 0
    %2526 = vmatprep.subr.bf16.mxu0 0
    %2527 = vmatpush2.bf16.msra.mxu0 0
    %2528 = vmatprep.subr.bf16.mxu0 0
    %2529 = vmatpush2.bf16.msra.mxu0 0
    %2530 = vmatprep.subr.bf16.mxu0 0
    %2531 = vmatpush2.bf16.msra.mxu0 0
    %2532 = vmatprep.subr.bf16.mxu0 0
    %2533 = vmatpush2.bf16.msra.mxu0 0
    %2534 = vmatprep.subr.bf16.mxu0 0
    %2535 = vmatpush2.bf16.msra.mxu0 0
    %2536 = vmatprep.subr.bf16.mxu0 0
    %2537 = vmatpush2.bf16.msra.mxu0 0
    %2538 = vmatprep.mubr.bf16.mxu0 0
    %2539 = vmatmul.mubr.bf16.gmra.mxu0 %v2504
    %v2540 = vpop.f32.mrf.mxu0
    %v2541 = vadd.f32 0.0, %v2540
    %v2542 = vpop.f32.mrf.mxu0
    %v2543 = vpop.f32.mrf.mxu0
    %v2544 = vadd.f32 0.0, %v2543
    %v2545 = vpop.f32.mrf.mxu0
    %2546 = vdwg.mxu0
    %v2547 = vrcp.pop %v2495
    %v2548 = vrcp.pop %v2498
    %v2549 = vmul.f32 %v2541, %v2547
    %v2550 = vmul.f32 %v2544, %v2548
    %2553 = vrot.lane.b32.xlu0 %v2309, 8
    %v2554 = vpop.permute.xlu0 %2553
    %2555 = vrot.lane.b32.xlu0 %v2310, 8
    %v2556 = vpop.permute.xlu0 %2555
    %2561 = vrot.lane.b32.xlu0 %v2428, 16
    %v2562 = vpop.permute.xlu0 %2561
    %2563 = vrot.lane.b32.xlu0 %v2429, 16
    %v2564 = vpop.permute.xlu0 %2563
    %2569 = vrot.lane.b32.xlu0 %v2549, 24
    %v2570 = vpop.permute.xlu0 %2569
    %2571 = vrot.lane.b32.xlu0 %v2550, 24
    %v2572 = vpop.permute.xlu0 %2571
    %v2575 = vsel %vm352, %v2187, %v2554
    %v2576 = vsel %vm352, %v2188, %v2556
    %v2577 = vsel %vm401, %v2575, %v2562
    %v2578 = vsel %vm401, %v2576, %v2564
    %v2579 = vsel %vm862, %v2577, %v2570
    %v2580 = vsel %vm862, %v2578, %v2572
    %v2581 = vpack.c.bf16 %v2580, %v2579
    %v2586 = vunpack.c.l.b16 %v2029
    %v2587 = vunpack.c.l.b16 %v2030
    %v2588 = vunpack.c.l.b16 %v2031
    %v2589 = vunpack.c.l.b16 %v2032
    %v2590 = vpack.c.b16 %v2587, %v2586
    %v2591 = vpack.c.b16 %v2589, %v2588
    %v2595 = vsel %vm212, %v2581, 0
    %2597 = vmatprep.subr.bf16.mxu0 0
    %2598 = vmatpush1.bf16.msra.mxu0 0
    %2599 = vmatprep.subr.bf16.mxu0 0
    %2600 = vmatpush1.bf16.msra.mxu0 0
    %2601 = vmatprep.subr.bf16.mxu0 0
    %2602 = vmatpush1.bf16.msra.mxu0 0
    %2603 = vmatprep.subr.bf16.mxu0 0
    %2604 = vmatpush1.bf16.msra.mxu0 0
    %2605 = vmatprep.subr.bf16.mxu0 0
    %2606 = vmatpush1.bf16.msra.mxu0 0
    %2607 = vmatprep.subr.bf16.mxu0 0
    %2608 = vmatpush1.bf16.msra.mxu0 0
    %2609 = vmatprep.subr.bf16.mxu0 0
    %2610 = vmatpush1.bf16.msra.mxu0 %v2591
    %2611 = vmatprep.subr.bf16.mxu0 0
    %2612 = vmatpush1.bf16.msra.mxu0 %v2590
    %2613 = vmatprep.subr.bf16.mxu0 0
    %2614 = vmatpush2.bf16.msra.mxu0 0
    %2615 = vmatprep.subr.bf16.mxu0 0
    %2616 = vmatpush2.bf16.msra.mxu0 0
    %2617 = vmatprep.subr.bf16.mxu0 0
    %2618 = vmatpush2.bf16.msra.mxu0 0
    %2619 = vmatprep.subr.bf16.mxu0 0
    %2620 = vmatpush2.bf16.msra.mxu0 0
    %2621 = vmatprep.subr.bf16.mxu0 0
    %2622 = vmatpush2.bf16.msra.mxu0 0
    %2623 = vmatprep.subr.bf16.mxu0 0
    %2624 = vmatpush2.bf16.msra.mxu0 0
    %2625 = vmatprep.subr.bf16.mxu0 0
    %2626 = vmatpush2.bf16.msra.mxu0 0
    %2627 = vmatprep.subr.bf16.mxu0 0
    %2628 = vmatpush2.bf16.msra.mxu0 0
    %2629 = vmatprep.mubr.bf16.mxu0 0
    %2630 = vmatmul.mubr.bf16.gmra.mxu0 %v2595
    %v2631 = vpop.f32.mrf.mxu0
    %v2632 = vadd.f32 0.0, %v2631
    %v2633 = vpop.f32.mrf.mxu0
    %v2634 = vpop.f32.mrf.mxu0
    %v2635 = vadd.f32 0.0, %v2634
    %v2636 = vpop.f32.mrf.mxu0
    %2637 = vdwg.mxu0
    %v2638 = vadd.f32 %v1880, %v2632
    %v2639 = vadd.f32 %v1881, %v2635
    %v2640 = vld [vmem:[%s20] sm:$0x1]
    %v2641 = vmul.f32 %v2638, %v2638
    %v2642 = vmul.f32 %v2639, %v2639
    %v2643 = vsel %vm212, %v2641, 0.0
    %2644 = vadd.xlane.f32.xlu0 %v2643
    %v2645 = vpop.xlane.xlu0 %2644
    %v2646 = vsel %vm212, %v2642, 0.0
    %2647 = vadd.xlane.f32.xlu0 %v2646
    %v2648 = vpop.xlane.xlu0 %2647
    %v2649 = vmul.f32 %v2645, %v219
    %v2650 = vmul.f32 %v2648, %v219
    %v2651 = vadd.f32 %v2649, 1e-06
    %v2652 = vadd.f32 %v2650, 1e-06
    %v2653 = vrsqrt.pop %v2651
    %v2654 = vrsqrt.pop %v2652
    %v2655 = vmul.f32 %v2638, %v2653
    %v2656 = vmul.f32 %v2639, %v2654
    %v2658 = vlaneseq
    %v2659 = vshrl.u32 %v2658, 7
    %v2660 = vsub.s32 0, %v2659
    %v2661 = vrot.slane %v2640, %v2660
    %v2663 = vmul.f32 %v2655, %v2661
    %v2664 = vmul.f32 %v2656, %v2661
    %v2665 = vpack.c.bf16 %v2664, %v2663
    %v2666 = vld [vmem:[%s21] sm:$0xf]
    %v2667 = vld [vmem:[%s21 + $0x4] sm:$0xf]
    %v2668 = vld [vmem:[%s21 + $0x8] sm:$0xf]
    %v2669 = vld [vmem:[%s21 + $0xc] sm:$0xf]
    %v2674 = vunpack.c.l.b16 %v2666
    %v2675 = vunpack.c.l.b16 %v2667
    %v2676 = vunpack.c.l.b16 %v2668
    %v2677 = vunpack.c.l.b16 %v2669
    %v2678 = vpack.c.b16 %v2675, %v2674
    %v2679 = vpack.c.b16 %v2677, %v2676
    %v2683 = vsel %vm212, %v2665, 0
    %2685 = vmatprep.subr.bf16.mxu0 0
    %2686 = vmatpush1.bf16.msra.mxu0 0
    %2687 = vmatprep.subr.bf16.mxu0 0
    %2688 = vmatpush1.bf16.msra.mxu0 0
    %2689 = vmatprep.subr.bf16.mxu0 0
    %2690 = vmatpush1.bf16.msra.mxu0 0
    %2691 = vmatprep.subr.bf16.mxu0 0
    %2692 = vmatpush1.bf16.msra.mxu0 0
    %2693 = vmatprep.subr.bf16.mxu0 0
    %2694 = vmatpush1.bf16.msra.mxu0 0
    %2695 = vmatprep.subr.bf16.mxu0 0
    %2696 = vmatpush1.bf16.msra.mxu0 0
    %2697 = vmatprep.subr.bf16.mxu0 0
    %2698 = vmatpush1.bf16.msra.mxu0 %v2679
    %2699 = vmatprep.subr.bf16.mxu0 0
    %2700 = vmatpush1.bf16.msra.mxu0 %v2678
    %2701 = vmatprep.subr.bf16.mxu0 0
    %2702 = vmatpush2.bf16.msra.mxu0 0
    %2703 = vmatprep.subr.bf16.mxu0 0
    %2704 = vmatpush2.bf16.msra.mxu0 0
    %2705 = vmatprep.subr.bf16.mxu0 0
    %2706 = vmatpush2.bf16.msra.mxu0 0
    %2707 = vmatprep.subr.bf16.mxu0 0
    %2708 = vmatpush2.bf16.msra.mxu0 0
    %2709 = vmatprep.subr.bf16.mxu0 0
    %2710 = vmatpush2.bf16.msra.mxu0 0
    %2711 = vmatprep.subr.bf16.mxu0 0
    %2712 = vmatpush2.bf16.msra.mxu0 0
    %2713 = vmatprep.subr.bf16.mxu0 0
    %2714 = vmatpush2.bf16.msra.mxu0 0
    %2715 = vmatprep.subr.bf16.mxu0 0
    %2716 = vmatpush2.bf16.msra.mxu0 0
    %2717 = vmatprep.mubr.bf16.mxu0 0
    %2718 = vmatmul.mubr.bf16.gmra.mxu0 %v2683
    %v2719 = vpop.f32.mrf.mxu0
    %v2720 = vadd.f32 0.0, %v2719
    %v2721 = vpop.f32.mrf.mxu0
    %v2722 = vpop.f32.mrf.mxu0
    %v2723 = vadd.f32 0.0, %v2722
    %v2724 = vpop.f32.mrf.mxu0
    %2725 = vdwg.mxu0
    %v2726 = vmax.f32 %v2720, 0.0
    %v2727 = vmax.f32 %v2723, 0.0
    %v2728 = vpack.c.bf16 %v2727, %v2726
    %v2729 = vld [vmem:[%s22] sm:$0xf]
    %v2730 = vld [vmem:[%s22 + $0x4] sm:$0xf]
    %v2731 = vld [vmem:[%s22 + $0x8] sm:$0xf]
    %v2732 = vld [vmem:[%s22 + $0xc] sm:$0xf]
    %v2733 = vld [vmem:[%s22 + $0x10] sm:$0xf]
    %v2734 = vld [vmem:[%s22 + $0x14] sm:$0xf]
    %v2735 = vld [vmem:[%s22 + $0x18] sm:$0xf]
    %v2736 = vld [vmem:[%s22 + $0x1c] sm:$0xf]
    %v2745 = vunpack.c.l.b16 %v2729
    %v2746 = vunpack.c.l.b16 %v2730
    %v2747 = vunpack.c.l.b16 %v2731
    %v2748 = vunpack.c.l.b16 %v2732
    %v2749 = vunpack.c.l.b16 %v2733
    %v2750 = vunpack.c.l.b16 %v2734
    %v2751 = vunpack.c.l.b16 %v2735
    %v2752 = vunpack.c.l.b16 %v2736
    %v2753 = vpack.c.b16 %v2746, %v2745
    %v2754 = vpack.c.b16 %v2748, %v2747
    %v2755 = vpack.c.b16 %v2750, %v2749
    %v2756 = vpack.c.b16 %v2752, %v2751
    %v2762 = vsel %vm1045, %v2728, 0
    %2764 = vmatprep.subr.bf16.mxu0 0
    %2765 = vmatpush1.bf16.msra.mxu0 0
    %2766 = vmatprep.subr.bf16.mxu0 0
    %2767 = vmatpush1.bf16.msra.mxu0 0
    %2768 = vmatprep.subr.bf16.mxu0 0
    %2769 = vmatpush1.bf16.msra.mxu0 0
    %2770 = vmatprep.subr.bf16.mxu0 0
    %2771 = vmatpush1.bf16.msra.mxu0 0
    %2772 = vmatprep.subr.bf16.mxu0 0
    %2773 = vmatpush1.bf16.msra.mxu0 %v2756
    %2774 = vmatprep.subr.bf16.mxu0 0
    %2775 = vmatpush1.bf16.msra.mxu0 %v2755
    %2776 = vmatprep.subr.bf16.mxu0 0
    %2777 = vmatpush1.bf16.msra.mxu0 %v2754
    %2778 = vmatprep.subr.bf16.mxu0 0
    %2779 = vmatpush1.bf16.msra.mxu0 %v2753
    %2780 = vmatprep.subr.bf16.mxu0 0
    %2781 = vmatpush2.bf16.msra.mxu0 0
    %2782 = vmatprep.subr.bf16.mxu0 0
    %2783 = vmatpush2.bf16.msra.mxu0 0
    %2784 = vmatprep.subr.bf16.mxu0 0
    %2785 = vmatpush2.bf16.msra.mxu0 0
    %2786 = vmatprep.subr.bf16.mxu0 0
    %2787 = vmatpush2.bf16.msra.mxu0 0
    %2788 = vmatprep.subr.bf16.mxu0 0
    %2789 = vmatpush2.bf16.msra.mxu0 0
    %2790 = vmatprep.subr.bf16.mxu0 0
    %2791 = vmatpush2.bf16.msra.mxu0 0
    %2792 = vmatprep.subr.bf16.mxu0 0
    %2793 = vmatpush2.bf16.msra.mxu0 0
    %2794 = vmatprep.subr.bf16.mxu0 0
    %2795 = vmatpush2.bf16.msra.mxu0 0
    %2796 = vmatprep.mubr.bf16.mxu0 0
    %2797 = vmatmul.mubr.bf16.gmra.mxu0 %v2762
    %v2798 = vpop.f32.mrf.mxu0
    %v2799 = vadd.f32 0.0, %v2798
    %v2800 = vpop.f32.mrf.mxu0
    %v2801 = vpop.f32.mrf.mxu0
    %v2802 = vadd.f32 0.0, %v2801
    %v2803 = vpop.f32.mrf.mxu0
    %2804 = vdwg.mxu0
    %v2805 = vadd.f32 %v2638, %v2799
    %v2806 = vadd.f32 %v2639, %v2802
    %v2807 = vld [vmem:[%s23] sm:$0x1]
    %v2808 = vmul.f32 %v2805, %v2805
    %v2809 = vmul.f32 %v2806, %v2806
    %v2810 = vsel %vm212, %v2808, 0.0
    %2811 = vadd.xlane.f32.xlu0 %v2810
    %v2812 = vpop.xlane.xlu0 %2811
    %v2813 = vsel %vm212, %v2809, 0.0
    %2814 = vadd.xlane.f32.xlu0 %v2813
    %v2815 = vpop.xlane.xlu0 %2814
    %v2816 = vmul.f32 %v2812, %v219
    %v2817 = vmul.f32 %v2815, %v219
    %v2818 = vadd.f32 %v2816, 1e-06
    %v2819 = vadd.f32 %v2817, 1e-06
    %v2820 = vrsqrt.pop %v2818
    %v2821 = vrsqrt.pop %v2819
    %v2822 = vmul.f32 %v2805, %v2820
    %v2823 = vmul.f32 %v2806, %v2821
    %v2825 = vlaneseq
    %v2826 = vshrl.u32 %v2825, 7
    %v2827 = vsub.s32 0, %v2826
    %v2828 = vrot.slane %v2807, %v2827
    %v2830 = vmul.f32 %v2822, %v2828
    %v2831 = vmul.f32 %v2823, %v2828
    %v2832 = vpack.c.bf16 %v2831, %v2830
    %v2833 = vld [vmem:[%s24] sm:$0xf]
    %v2834 = vld [vmem:[%s24 + $0x4] sm:$0xf]
    %v2835 = vld [vmem:[%s24 + $0x8] sm:$0xf]
    %v2836 = vld [vmem:[%s24 + $0xc] sm:$0xf]
    %v2837 = vld [vmem:[%s25] sm:$0x1]
    %v2839 = vlaneseq
    %v2840 = vshrl.u32 %v2839, 7
    %v2841 = vsub.s32 0, %v2840
    %v2842 = vrot.slane %v2837, %v2841
    %v2848 = vunpack.c.l.b16 %v2833
    %v2849 = vunpack.c.l.b16 %v2834
    %v2850 = vunpack.c.l.b16 %v2835
    %v2851 = vunpack.c.l.b16 %v2836
    %v2852 = vpack.c.b16 %v2849, %v2848
    %v2853 = vpack.c.b16 %v2851, %v2850
    %v2857 = vsel %vm212, %v2832, 0
    %2859 = vmatprep.subr.bf16.mxu0 0
    %2860 = vmatpush1.bf16.msra.mxu0 0
    %2861 = vmatprep.subr.bf16.mxu0 0
    %2862 = vmatpush1.bf16.msra.mxu0 0
    %2863 = vmatprep.subr.bf16.mxu0 0
    %2864 = vmatpush1.bf16.msra.mxu0 0
    %2865 = vmatprep.subr.bf16.mxu0 0
    %2866 = vmatpush1.bf16.msra.mxu0 0
    %2867 = vmatprep.subr.bf16.mxu0 0
    %2868 = vmatpush1.bf16.msra.mxu0 0
    %2869 = vmatprep.subr.bf16.mxu0 0
    %2870 = vmatpush1.bf16.msra.mxu0 0
    %2871 = vmatprep.subr.bf16.mxu0 0
    %2872 = vmatpush1.bf16.msra.mxu0 %v2853
    %2873 = vmatprep.subr.bf16.mxu0 0
    %2874 = vmatpush1.bf16.msra.mxu0 %v2852
    %2875 = vmatprep.subr.bf16.mxu0 0
    %2876 = vmatpush2.bf16.msra.mxu0 0
    %2877 = vmatprep.subr.bf16.mxu0 0
    %2878 = vmatpush2.bf16.msra.mxu0 0
    %2879 = vmatprep.subr.bf16.mxu0 0
    %2880 = vmatpush2.bf16.msra.mxu0 0
    %2881 = vmatprep.subr.bf16.mxu0 0
    %2882 = vmatpush2.bf16.msra.mxu0 0
    %2883 = vmatprep.subr.bf16.mxu0 0
    %2884 = vmatpush2.bf16.msra.mxu0 0
    %2885 = vmatprep.subr.bf16.mxu0 0
    %2886 = vmatpush2.bf16.msra.mxu0 0
    %2887 = vmatprep.subr.bf16.mxu0 0
    %2888 = vmatpush2.bf16.msra.mxu0 0
    %2889 = vmatprep.subr.bf16.mxu0 0
    %2890 = vmatpush2.bf16.msra.mxu0 0
    %2891 = vmatprep.mubr.bf16.mxu0 0
    %2892 = vmatmul.mubr.bf16.gmra.mxu0 %v2857
    %v2893 = vpop.f32.mrf.mxu0
    %v2894 = vadd.f32 %v2842, %v2893
    %v2895 = vpop.f32.mrf.mxu0
    %v2896 = vpop.f32.mrf.mxu0
    %v2897 = vadd.f32 %v2842, %v2896
    %v2898 = vpop.f32.mrf.mxu0
    %2899 = vdwg.mxu0
    %2900 = vst [vmem:[%s26] sm:$0xff] %v2894
    %2901 = vst [vmem:[%s26 + $0x8] sm:$0xff] %v2897
    %2902 = vmax.xlane.f32.xlu0 %v2894
    %v2903 = vpop.xlane.xlu0 %2902
    %2904 = vmax.xlane.f32.xlu0 %v2897
    %v2905 = vpop.xlane.xlu0 %2904
    %v2906 = vsub.f32 %v2894, %v2903
    %v2907 = vsub.f32 %v2897, %v2905
    %v2908 = vmul.f32 %v2906, 1.442695
    %v2909 = vpow.pop %v2908
    %v2910 = vmul.f32 %v2907, 1.442695
    %v2911 = vpow.pop %v2910
    %2912 = vadd.xlane.f32.xlu0 %v2909
    %v2913 = vpop.xlane.xlu0 %2912
    %2914 = vadd.xlane.f32.xlu0 %v2911
    %v2915 = vpop.xlane.xlu0 %2914
    %v2916 = vlog2.pop %v2913
    %v2917 = vmul.f32 %v2916, 0.6931472
    %v2918 = vlog2.pop %v2915
    %v2919 = vmul.f32 %v2918, 0.6931472
    %v2920 = vadd.f32 %v2917, %v2903
    %v2921 = vadd.f32 %v2919, %v2905
    %v2922 = vmul.f32 %v2894, %v1129
    %v2923 = vmul.f32 %v2897, %v1130
    %2924 = vadd.xlane.f32.xlu0 %v2922
    %v2925 = vpop.xlane.xlu0 %2924
    %2926 = vadd.xlane.f32.xlu0 %v2923
    %v2927 = vpop.xlane.xlu0 %2926
    %vm2928 = vcmp.ne.s32.totalorder %v1117, 4294967196
    %vm2929 = vcmp.ne.s32.totalorder %v1118, 4294967196
    %v2930 = vsel %vm2928, 1, 0
    %v2931 = vsel %vm2929, 1, 0
    %v2932 = vcvt.s32.f32 %v2930
    %v2933 = vcvt.s32.f32 %v2931
    %v2934 = vsub.f32 %v2920, %v2925
    %v2935 = vsub.f32 %v2921, %v2927
    %v2936 = vmul.f32 %v2934, %v2932
    %v2937 = vmul.f32 %v2935, %v2933
    %vm2938 = vcmask 7168
    %v2939 = vsel %vm2938, %v2936, 0.0
    %v2940 = vsel %vm2938, %v2937, 0.0
    %v2941 = vadd.f32 %v2939, %v2940
    %2942 = vadd.xlane.f32.xlu0 %v2941
    %v2943 = vpop.xlane.xlu0 %2942
    %v2944 = vrot.slane %v2943, 4
    %v2945 = vadd.f32 %v2943, %v2944
    %v2946 = vrot.slane %v2945, 2
    %v2947 = vadd.f32 %v2945, %v2946
    %v2948 = vrot.slane %v2947, 1
    %v2949 = vadd.f32 %v2947, %v2948
    %s2950 = vtos %v2949
    %v2951 = vstv %s2950
    %v2952 = vsel %vm2938, %v2932, 0.0
    %v2953 = vsel %vm2938, %v2933, 0.0
    %v2954 = vadd.f32 %v2952, %v2953
    %2955 = vadd.xlane.f32.xlu0 %v2954
    %v2956 = vpop.xlane.xlu0 %2955
    %v2957 = vrot.slane %v2956, 4
    %v2958 = vadd.f32 %v2956, %v2957
    %v2959 = vrot.slane %v2958, 2
    %v2960 = vadd.f32 %v2958, %v2959
    %v2961 = vrot.slane %v2960, 1
    %v2962 = vadd.f32 %v2960, %v2961
    %s2963 = vtos %v2962
    %v2964 = vstv %s2963
    %v2965 = vrcp.pop %v2964
    %v2966 = vmul.f32 %v2951, %v2965
    %vm2967 = vcmask 0
    %2968 = vst.msk [vmem:[#allocation2] sm:$0x1] %vm2967, %v2966
    // Predicated region
    $region106: #{t5_story_forward.1} parent=1 // pred_check
      _
    $region107: #{t5_story_forward.1} parent=1 // pred_check_branch
      %2970 = sbr.rel (0) target = $region109
    $region108: #{t5_story_forward.1} parent=1 // pred_region
      _
    $region109: #{t5_story_forward.1} parent=1 // pred_fallthru
      _
    // Predicated region
    $region110: #{t5_story_forward.1} parent=1 // pred_check
      _
    $region111: #{t5_story_forward.1} parent=1 // pred_check_branch
      %2972 = sbr.rel (0) target = $region113
    $region112: #{t5_story_forward.1} parent=1 // pred_region
      %s2974 = ssub.s32 16, 16
      %2975 = vsyncadd [#allocation3], %s2974
      %s2977 = sshll.u32 [#allocation2], 4
      %s2978 = int_to_ptr.vmem [resolvable:$true] %s2977
      %2980 = dma.vmem_to_hbm [thread:$0]  %s2978, 16, %s27, [#allocation3]
    $region113: #{t5_story_forward.1} parent=1 // pred_fallthru
      _
    // Predicated region
    $region114: #{t5_story_forward.1} parent=1 // pred_check
      _
    $region115: #{t5_story_forward.1} parent=1 // pred_check_branch
      %2982 = sbr.rel (0) target = $region117
    $region116: #{t5_story_forward.1} parent=1 // pred_region
      _
    $region117: #{t5_story_forward.1} parent=1 // pred_fallthru
      _
    // Predicated region
    $region118: #{t5_story_forward.1} parent=1 // pred_check
      _
    $region119: #{t5_story_forward.1} parent=1 // pred_check_branch
      %2984 = sbr.rel (0) target = $region121
    $region120: #{t5_story_forward.1} parent=1 // pred_region
      %2985 = dma.done [#allocation3], 16
    $region121: #{t5_story_forward.1} parent=1 // pred_fallthru
      _
    %2986 = vsyncpa [#allocation3], 1

</llo_original>
